<compile_context>
chip_gen: v6e
topology: v6e:2x2x1
jax: 0.10.0
libtpu: 0.0.40
codegen_flags: <defaults>
</compile_context>

<pallas_src>
import jax
import jax.numpy as jnp
from jax.experimental import pallas as pl
from jax.experimental.pallas import tpu as pltpu


# ---------------------------------------------------------------------------
# Fused 2-layer LSTM + fc forward kernel
# ---------------------------------------------------------------------------
def _lstm_fused_kernel(x_ref, w_ih0_ref, w_hh0_ref, b0_ref,
                       w1_ref, b1_ref, fc_w_ref, fc_b_ref,
                       o_ref, xp_ref):
    """x_ref: (S*B_pad, F) bf16, time-major rows [t*B_pad : (t+1)*B_pad).
    Weights pre-transposed to (in_features, 4H) bf16; biases f32.
    o_ref: (B_pad, NCP) lane-dense padded logits (f32)."""
    SB, _ = x_ref.shape
    H = w_hh0_ref.shape[0]
    B = o_ref.shape[0]          # padded batch (sublane granule)
    S = SB // B

    # ---- layer-0 input projection for ALL timesteps in one bf16 matmul ----
    xp_ref[...] = jnp.dot(x_ref[...], w_ih0_ref[...],
                          preferred_element_type=jnp.float32) + b0_ref[...]

    def gates_to_hc(gates, c):
        # PyTorch gate order: input, forget, cell(g), output.
        i_g = jax.nn.sigmoid(gates[:, 0 * H:1 * H])
        f_g = jax.nn.sigmoid(gates[:, 1 * H:2 * H])
        g_g = jnp.tanh(gates[:, 2 * H:3 * H])
        o_g = jax.nn.sigmoid(gates[:, 3 * H:4 * H])
        c_new = f_g * c + i_g * g_g
        h_new = o_g * jnp.tanh(c_new)
        return h_new, c_new

    def step(t, carry):
        h0, c0, h1, c1 = carry
        row = pl.multiple_of(t * B, B)          # sublane-aligned window start
        # ---- layer 0, time t ------------------------------------------------
        gates0 = xp_ref[pl.ds(row, B), :] + jnp.dot(
            h0.astype(jnp.bfloat16), w_hh0_ref[...],
            preferred_element_type=jnp.float32)
        h0n, c0n = gates_to_hc(gates0, c0)
        # TODO(synk): nn.LSTM inter-layer dropout(p=0.2) is identity here
        # (eval-mode forward).
        # ---- layer 1, time t (single stacked K=2H matmul) --------------------
        hin = jnp.concatenate([h0n, h1], axis=1).astype(jnp.bfloat16)
        gates1 = jnp.dot(hin, w1_ref[...],
                         preferred_element_type=jnp.float32) + b1_ref[...]
        h1n, c1n = gates_to_hc(gates1, c1)
        return h0n, c0n, h1n, c1n

    zeros = jnp.zeros((B, H), jnp.float32)
    unroll = True if S <= 16 else 8             # full unroll only for short S
    _, _, h1_last, _ = jax.lax.fori_loop(
        0, S, step, (zeros, zeros, zeros, zeros), unroll=unroll)

    # ---- final fc on the last timestep of the top layer ----------------------
    logits = jnp.dot(h1_last.astype(jnp.bfloat16), fc_w_ref[...],
                     preferred_element_type=jnp.float32) + fc_b_ref[...]
    o_ref[...] = logits.astype(o_ref.dtype)


def lstm_forward(params, x):
    """x: (B, S, input_size) -> logits (B, num_classes). Fused Pallas forward."""
    B, S, F = x.shape
    H = params["w_hh0"].shape[0]
    NC = params["fc_w"].shape[1]
    NCP = max(128, NC)                      # lane-dense padded logits slab
    B_pad = ((B + 7) // 8) * 8              # f32 sublane granule

    # Time-major, batch-padded, flattened (no in-kernel reshapes), bf16 input.
    xt = jnp.transpose(x, (1, 0, 2))                        # (S, B, F)
    xt = jnp.pad(xt, ((0, 0), (0, B_pad - B), (0, 0)))      # (S, B_pad, F)
    x2d = xt.reshape(S * B_pad, F).astype(jnp.bfloat16)

    b0 = (params["b_ih0"] + params["b_hh0"]).reshape(1, 4 * H)
    b1 = (params["b_ih1"] + params["b_hh1"]).reshape(1, 4 * H)
    w_ih0 = params["w_ih0"].astype(jnp.bfloat16)
    w_hh0 = params["w_hh0"].astype(jnp.bfloat16)
    # Stacked layer-1 weights: gates1 = [h0_t, h1_{t-1}] @ [W_ih1; W_hh1].
    w1 = jnp.concatenate([params["w_ih1"], params["w_hh1"]],
                         axis=0).astype(jnp.bfloat16)        # (2H, 4H)
    fc_w_pad = (jnp.zeros((H, NCP), jnp.float32)
                .at[:, :NC].set(params["fc_w"]).astype(jnp.bfloat16))
    fc_b_pad = jnp.zeros((1, NCP), jnp.float32).at[:, :NC].set(params["fc_b"])

    def spec(shape):
        n = len(shape)
        return pl.BlockSpec(shape, lambda i, _n=n: (0,) * _n)

    # TODO(synk): with larger batch, add a leading "parallel" grid axis over
    # batch tiles to use both TensorCores on v7x; one tile at B=2.
    out_pad = pl.pallas_call(
        _lstm_fused_kernel,
        out_shape=jax.ShapeDtypeStruct((B_pad, NCP), jnp.float32),
        grid=(1,),
        in_specs=[
            spec((S * B_pad, F)),
            spec((F, 4 * H)), spec((H, 4 * H)), spec((1, 4 * H)),
            spec((2 * H, 4 * H)), spec((1, 4 * H)),
            spec((H, NCP)), spec((1, NCP)),
        ],
        out_specs=spec((B_pad, NCP)),
        scratch_shapes=[
            pltpu.VMEM((S * B_pad, 4 * H), jnp.float32),  # layer-0 gate preacts
        ],
        compiler_params=pltpu.CompilerParams(
            dimension_semantics=("arbitrary",)),
    )(x2d, w_ih0, w_hh0, b0, w1, b1, fc_w_pad, fc_b_pad)
    return out_pad[:B, :NC]


# ---------------------------------------------------------------------------
# Pure-JAX f32 reference (for correctness check)
# ---------------------------------------------------------------------------
def lstm_forward_ref(params, x):
    def cell(w_ih, w_hh, b, xs):
        Bh = xs.shape[1]
        H = w_hh.shape[0]

        def step(carry, x_t):
            h, c = carry
            g = x_t @ w_ih + h @ w_hh + b
            i_g = jax.nn.sigmoid(g[:, :H])
            f_g = jax.nn.sigmoid(g[:, H:2 * H])
            g_g = jnp.tanh(g[:, 2 * H:3 * H])
            o_g = jax.nn.sigmoid(g[:, 3 * H:])
            c = f_g * c + i_g * g_g
            h = o_g * jnp.tanh(c)
            return (h, c), h

        init = (jnp.zeros((Bh, H), jnp.float32), jnp.zeros((Bh, H), jnp.float32))
        _, hs = jax.lax.scan(step, init, xs)
        return hs

    xt = jnp.transpose(x, (1, 0, 2))
    h0 = cell(params["w_ih0"], params["w_hh0"],
              params["b_ih0"] + params["b_hh0"], xt)
    h1 = cell(params["w_ih1"], params["w_hh1"],
              params["b_ih1"] + params["b_hh1"], h0)
    return h1[-1] @ params["fc_w"] + params["fc_b"]


# ---------------------------------------------------------------------------
# Parameter init (PyTorch-style uniform(-1/sqrt(H), 1/sqrt(H)))
# Weights stored pre-transposed to (in_features, 4H); gate order i, f, g, o.
# ---------------------------------------------------------------------------
def init_params(key, input_size, hidden_size, num_classes):
    k = 1.0 / (hidden_size ** 0.5)
    keys = jax.random.split(key, 10)

    def u(kk, shape):
        return jax.random.uniform(kk, shape, jnp.float32, -k, k)

    p = {}
    p["w_ih0"] = u(keys[0], (input_size, 4 * hidden_size))
    p["w_hh0"] = u(keys[1], (hidden_size, 4 * hidden_size))
    p["b_ih0"] = u(keys[2], (4 * hidden_size,))
    p["b_hh0"] = u(keys[3], (4 * hidden_size,))
    p["w_ih1"] = u(keys[4], (hidden_size, 4 * hidden_size))
    p["w_hh1"] = u(keys[5], (hidden_size, 4 * hidden_size))
    p["b_ih1"] = u(keys[6], (4 * hidden_size,))
    p["b_hh1"] = u(keys[7], (4 * hidden_size,))
    p["fc_w"] = u(keys[8], (hidden_size, num_classes))
    p["fc_b"] = u(keys[9], (num_classes,))
    return p


# ---------------------------------------------------------------------------
# Demo
# ---------------------------------------------------------------------------
if __name__ == "__main__":
    B, S, input_size = 2, 8, 16
    hidden_size, num_classes = 128, 2

    key = jax.random.PRNGKey(0)
    kx, kp = jax.random.split(key)
    x = jax.random.normal(kx, (B, S, input_size), jnp.float32)
    params = init_params(kp, input_size, hidden_size, num_classes)

    logits = jax.jit(lstm_forward)(params, x)
    jax.block_until_ready(logits)
    assert logits.shape == (B, num_classes)
    assert bool(jnp.all(jnp.isfinite(logits)))

    ref = lstm_forward_ref(params, x)
    assert bool(jnp.allclose(logits, ref, atol=2e-2, rtol=2e-2)), (
        "pallas LSTM mismatch vs reference")

    print("KERNEL_OK")
</pallas_src>

<mosaic_0001>
module attributes {stable_mosaic.version = 11 : i64} {
  func.func @_lstm_fused_kernel(%arg0: i32, %arg1: memref<64x16xbf16, #tpu.memory_space<vmem>>, %arg2: memref<16x512xbf16, #tpu.memory_space<vmem>>, %arg3: memref<128x512xbf16, #tpu.memory_space<vmem>>, %arg4: memref<1x512xf32, #tpu.memory_space<vmem>>, %arg5: memref<256x512xbf16, #tpu.memory_space<vmem>>, %arg6: memref<1x512xf32, #tpu.memory_space<vmem>>, %arg7: memref<128x128xbf16, #tpu.memory_space<vmem>>, %arg8: memref<1x128xf32, #tpu.memory_space<vmem>>, %arg9: memref<8x128xf32, #tpu.memory_space<vmem>>, %arg10: memref<64x512xf32, #tpu.memory_space<vmem>>) attributes {dimension_semantics = [#tpu.dimension_semantics<arbitrary>], iteration_bounds = array<i64: 1>, scalar_prefetch = 0 : i64, scratch_operands = 1 : i64, tpu.core_type = #tpu.core_type<tc>, window_params = [{pipeline_mode = #tpu.pipeline_mode<synchronous>, transform_indices = @transform_0, window_bounds = array<i64: 64, 16>}, {pipeline_mode = #tpu.pipeline_mode<synchronous>, transform_indices = @transform_1, window_bounds = array<i64: 16, 512>}, {pipeline_mode = #tpu.pipeline_mode<synchronous>, transform_indices = @transform_2, window_bounds = array<i64: 128, 512>}, {pipeline_mode = #tpu.pipeline_mode<synchronous>, transform_indices = @transform_3, window_bounds = array<i64: 1, 512>}, {pipeline_mode = #tpu.pipeline_mode<synchronous>, transform_indices = @transform_4, window_bounds = array<i64: 256, 512>}, {pipeline_mode = #tpu.pipeline_mode<synchronous>, transform_indices = @transform_5, window_bounds = array<i64: 1, 512>}, {pipeline_mode = #tpu.pipeline_mode<synchronous>, transform_indices = @transform_6, window_bounds = array<i64: 128, 128>}, {pipeline_mode = #tpu.pipeline_mode<synchronous>, transform_indices = @transform_7, window_bounds = array<i64: 1, 128>}, {pipeline_mode = #tpu.pipeline_mode<synchronous>, transform_indices = @transform_8, window_bounds = array<i64: 8, 128>}]} {
    %c0 = arith.constant 0 : index
    %c0_0 = arith.constant 0 : index
    %0 = vector.load %arg1[%c0, %c0_0] : memref<64x16xbf16, #tpu.memory_space<vmem>>, vector<64x16xbf16>
    %c0_1 = arith.constant 0 : index
    %c0_2 = arith.constant 0 : index
    %1 = vector.load %arg2[%c0_1, %c0_2] : memref<16x512xbf16, #tpu.memory_space<vmem>>, vector<16x512xbf16>
    %cst = arith.constant dense<0.000000e+00> : vector<64x512xf32>
    %2 = tpu.matmul %0, %1, %cst {dimension_numbers = #tpu.dot_dimension_numbers<[1], [0], [0], [1], [0, 0, 1, 1], [], []>} : vector<64x16xbf16>, vector<16x512xbf16>, vector<64x512xf32> -> vector<64x512xf32>
    %c0_3 = arith.constant 0 : index
    %c0_4 = arith.constant 0 : index
    %3 = vector.load %arg4[%c0_3, %c0_4] : memref<1x512xf32, #tpu.memory_space<vmem>>, vector<1x512xf32>
    %4 = vector.broadcast %3 : vector<1x512xf32> to vector<64x512xf32>
    %5 = arith.addf %2, %4 : vector<64x512xf32>
    %c0_5 = arith.constant 0 : index
    %c0_6 = arith.constant 0 : index
    %6 = vector.load %arg10[%c0_5, %c0_6] : memref<64x512xf32, #tpu.memory_space<vmem>>, vector<64x512xf32>
    tpu.vector_store %arg10[%c0_5, %c0_6], %5 {strides = array<i32>} : memref<64x512xf32, #tpu.memory_space<vmem>>, vector<64x512xf32>,
    %cst_7 = arith.constant 0.000000e+00 : f32
    %7 = vector.broadcast %cst_7 : f32 to vector<8x128xf32>
    %c0_i32 = arith.constant 0 : i32
    %c8_i32 = arith.constant 8 : i32
    %8 = arith.muli %c0_i32, %c8_i32 : i32
    %9 = tpu.assume_multiple %8, 8 : i32
    %10 = arith.index_cast %9 : i32 to index
    %c0_8 = arith.constant 0 : index
    %11 = vector.load %arg10[%10, %c0_8] : memref<64x512xf32, #tpu.memory_space<vmem>>, vector<8x512xf32>
    %12 = arith.truncf %7 : vector<8x128xf32> to vector<8x128xbf16>
    %c0_9 = arith.constant 0 : index
    %c0_10 = arith.constant 0 : index
    %13 = vector.load %arg3[%c0_9, %c0_10] : memref<128x512xbf16, #tpu.memory_space<vmem>>, vector<128x512xbf16>
    %cst_11 = arith.constant dense<0.000000e+00> : vector<8x512xf32>
    %14 = tpu.matmul %12, %13, %cst_11 {dimension_numbers = #tpu.dot_dimension_numbers<[1], [0], [0], [1], [0, 0, 1, 1], [], []>} : vector<8x128xbf16>, vector<128x512xbf16>, vector<8x512xf32> -> vector<8x512xf32>
    %15 = arith.addf %11, %14 : vector<8x512xf32>
    %16 = vector.extract_strided_slice %15 {offsets = [0, 0], sizes = [8, 128], strides = [1, 1]} : vector<8x512xf32> to vector<8x128xf32>
    %17 = arith.negf %16 : vector<8x128xf32>
    %18 = math.exp %17 : vector<8x128xf32>
    %cst_12 = arith.constant 1.000000e+00 : f32
    %19 = vector.broadcast %cst_12 : f32 to vector<8x128xf32>
    %20 = arith.addf %19, %18 : vector<8x128xf32>
    %21 = arith.divf %19, %20 : vector<8x128xf32>
    %22 = vector.extract_strided_slice %15 {offsets = [0, 128], sizes = [8, 128], strides = [1, 1]} : vector<8x512xf32> to vector<8x128xf32>
    %23 = arith.negf %22 : vector<8x128xf32>
    %24 = math.exp %23 : vector<8x128xf32>
    %cst_13 = arith.constant 1.000000e+00 : f32
    %25 = vector.broadcast %cst_13 : f32 to vector<8x128xf32>
    %26 = arith.addf %25, %24 : vector<8x128xf32>
    %27 = arith.divf %25, %26 : vector<8x128xf32>
    %28 = vector.extract_strided_slice %15 {offsets = [0, 256], sizes = [8, 128], strides = [1, 1]} : vector<8x512xf32> to vector<8x128xf32>
    %29 = math.tanh %28 : vector<8x128xf32>
    %30 = vector.extract_strided_slice %15 {offsets = [0, 384], sizes = [8, 128], strides = [1, 1]} : vector<8x512xf32> to vector<8x128xf32>
    %31 = arith.negf %30 : vector<8x128xf32>
    %32 = math.exp %31 : vector<8x128xf32>
    %cst_14 = arith.constant 1.000000e+00 : f32
    %33 = vector.broadcast %cst_14 : f32 to vector<8x128xf32>
    %34 = arith.addf %33, %32 : vector<8x128xf32>
    %35 = arith.divf %33, %34 : vector<8x128xf32>
    %36 = arith.mulf %27, %7 : vector<8x128xf32>
    %37 = arith.mulf %21, %29 : vector<8x128xf32>
    %38 = arith.addf %36, %37 : vector<8x128xf32>
    %39 = math.tanh %38 : vector<8x128xf32>
    %40 = arith.mulf %35, %39 : vector<8x128xf32>
    %41 = tpu.concatenate %40, %7 in 1 : vector<8x128xf32>, vector<8x128xf32> -> vector<8x256xf32>
    %42 = arith.truncf %41 : vector<8x256xf32> to vector<8x256xbf16>
    %c0_15 = arith.constant 0 : index
    %c0_16 = arith.constant 0 : index
    %43 = vector.load %arg5[%c0_15, %c0_16] : memref<256x512xbf16, #tpu.memory_space<vmem>>, vector<256x512xbf16>
    %cst_17 = arith.constant dense<0.000000e+00> : vector<8x512xf32>
    %44 = tpu.matmul %42, %43, %cst_17 {dimension_numbers = #tpu.dot_dimension_numbers<[1], [0], [0], [1], [0, 0, 1, 1], [], []>} : vector<8x256xbf16>, vector<256x512xbf16>, vector<8x512xf32> -> vector<8x512xf32>
    %c0_18 = arith.constant 0 : index
    %c0_19 = arith.constant 0 : index
    %45 = vector.load %arg6[%c0_18, %c0_19] : memref<1x512xf32, #tpu.memory_space<vmem>>, vector<1x512xf32>
    %46 = vector.broadcast %45 : vector<1x512xf32> to vector<8x512xf32>
    %47 = arith.addf %44, %46 : vector<8x512xf32>
    %48 = vector.extract_strided_slice %47 {offsets = [0, 0], sizes = [8, 128], strides = [1, 1]} : vector<8x512xf32> to vector<8x128xf32>
    %49 = arith.negf %48 : vector<8x128xf32>
    %50 = math.exp %49 : vector<8x128xf32>
    %cst_20 = arith.constant 1.000000e+00 : f32
    %51 = vector.broadcast %cst_20 : f32 to vector<8x128xf32>
    %52 = arith.addf %51, %50 : vector<8x128xf32>
    %53 = arith.divf %51, %52 : vector<8x128xf32>
    %54 = vector.extract_strided_slice %47 {offsets = [0, 128], sizes = [8, 128], strides = [1, 1]} : vector<8x512xf32> to vector<8x128xf32>
    %55 = arith.negf %54 : vector<8x128xf32>
    %56 = math.exp %55 : vector<8x128xf32>
    %cst_21 = arith.constant 1.000000e+00 : f32
    %57 = vector.broadcast %cst_21 : f32 to vector<8x128xf32>
    %58 = arith.addf %57, %56 : vector<8x128xf32>
    %59 = arith.divf %57, %58 : vector<8x128xf32>
    %60 = vector.extract_strided_slice %47 {offsets = [0, 256], sizes = [8, 128], strides = [1, 1]} : vector<8x512xf32> to vector<8x128xf32>
    %61 = math.tanh %60 : vector<8x128xf32>
    %62 = vector.extract_strided_slice %47 {offsets = [0, 384], sizes = [8, 128], strides = [1, 1]} : vector<8x512xf32> to vector<8x128xf32>
    %63 = arith.negf %62 : vector<8x128xf32>
    %64 = math.exp %63 : vector<8x128xf32>
    %cst_22 = arith.constant 1.000000e+00 : f32
    %65 = vector.broadcast %cst_22 : f32 to vector<8x128xf32>
    %66 = arith.addf %65, %64 : vector<8x128xf32>
    %67 = arith.divf %65, %66 : vector<8x128xf32>
    %68 = arith.mulf %59, %7 : vector<8x128xf32>
    %69 = arith.mulf %53, %61 : vector<8x128xf32>
    %70 = arith.addf %68, %69 : vector<8x128xf32>
    %71 = math.tanh %70 : vector<8x128xf32>
    %72 = arith.mulf %67, %71 : vector<8x128xf32>
    %c1_i32 = arith.constant 1 : i32
    %c8_i32_23 = arith.constant 8 : i32
    %73 = arith.muli %c1_i32, %c8_i32_23 : i32
    %74 = tpu.assume_multiple %73, 8 : i32
    %75 = arith.index_cast %74 : i32 to index
    %c0_24 = arith.constant 0 : index
    %76 = vector.load %arg10[%75, %c0_24] : memref<64x512xf32, #tpu.memory_space<vmem>>, vector<8x512xf32>
    %77 = arith.truncf %40 : vector<8x128xf32> to vector<8x128xbf16>
    %c0_25 = arith.constant 0 : index
    %c0_26 = arith.constant 0 : index
    %78 = vector.load %arg3[%c0_25, %c0_26] : memref<128x512xbf16, #tpu.memory_space<vmem>>, vector<128x512xbf16>
    %cst_27 = arith.constant dense<0.000000e+00> : vector<8x512xf32>
    %79 = tpu.matmul %77, %78, %cst_27 {dimension_numbers = #tpu.dot_dimension_numbers<[1], [0], [0], [1], [0, 0, 1, 1], [], []>} : vector<8x128xbf16>, vector<128x512xbf16>, vector<8x512xf32> -> vector<8x512xf32>
    %80 = arith.addf %76, %79 : vector<8x512xf32>
    %81 = vector.extract_strided_slice %80 {offsets = [0, 0], sizes = [8, 128], strides = [1, 1]} : vector<8x512xf32> to vector<8x128xf32>
    %82 = arith.negf %81 : vector<8x128xf32>
    %83 = math.exp %82 : vector<8x128xf32>
    %cst_28 = arith.constant 1.000000e+00 : f32
    %84 = vector.broadcast %cst_28 : f32 to vector<8x128xf32>
    %85 = arith.addf %84, %83 : vector<8x128xf32>
    %86 = arith.divf %84, %85 : vector<8x128xf32>
    %87 = vector.extract_strided_slice %80 {offsets = [0, 128], sizes = [8, 128], strides = [1, 1]} : vector<8x512xf32> to vector<8x128xf32>
    %88 = arith.negf %87 : vector<8x128xf32>
    %89 = math.exp %88 : vector<8x128xf32>
    %cst_29 = arith.constant 1.000000e+00 : f32
    %90 = vector.broadcast %cst_29 : f32 to vector<8x128xf32>
    %91 = arith.addf %90, %89 : vector<8x128xf32>
    %92 = arith.divf %90, %91 : vector<8x128xf32>
    %93 = vector.extract_strided_slice %80 {offsets = [0, 256], sizes = [8, 128], strides = [1, 1]} : vector<8x512xf32> to vector<8x128xf32>
    %94 = math.tanh %93 : vector<8x128xf32>
    %95 = vector.extract_strided_slice %80 {offsets = [0, 384], sizes = [8, 128], strides = [1, 1]} : vector<8x512xf32> to vector<8x128xf32>
    %96 = arith.negf %95 : vector<8x128xf32>
    %97 = math.exp %96 : vector<8x128xf32>
    %cst_30 = arith.constant 1.000000e+00 : f32
    %98 = vector.broadcast %cst_30 : f32 to vector<8x128xf32>
    %99 = arith.addf %98, %97 : vector<8x128xf32>
    %100 = arith.divf %98, %99 : vector<8x128xf32>
    %101 = arith.mulf %92, %38 : vector<8x128xf32>
    %102 = arith.mulf %86, %94 : vector<8x128xf32>
    %103 = arith.addf %101, %102 : vector<8x128xf32>
    %104 = math.tanh %103 : vector<8x128xf32>
    %105 = arith.mulf %100, %104 : vector<8x128xf32>
    %106 = tpu.concatenate %105, %72 in 1 : vector<8x128xf32>, vector<8x128xf32> -> vector<8x256xf32>
    %107 = arith.truncf %106 : vector<8x256xf32> to vector<8x256xbf16>
    %c0_31 = arith.constant 0 : index
    %c0_32 = arith.constant 0 : index
    %108 = vector.load %arg5[%c0_31, %c0_32] : memref<256x512xbf16, #tpu.memory_space<vmem>>, vector<256x512xbf16>
    %cst_33 = arith.constant dense<0.000000e+00> : vector<8x512xf32>
    %109 = tpu.matmul %107, %108, %cst_33 {dimension_numbers = #tpu.dot_dimension_numbers<[1], [0], [0], [1], [0, 0, 1, 1], [], []>} : vector<8x256xbf16>, vector<256x512xbf16>, vector<8x512xf32> -> vector<8x512xf32>
    %c0_34 = arith.constant 0 : index
    %c0_35 = arith.constant 0 : index
    %110 = vector.load %arg6[%c0_34, %c0_35] : memref<1x512xf32, #tpu.memory_space<vmem>>, vector<1x512xf32>
    %111 = vector.broadcast %110 : vector<1x512xf32> to vector<8x512xf32>
    %112 = arith.addf %109, %111 : vector<8x512xf32>
    %113 = vector.extract_strided_slice %112 {offsets = [0, 0], sizes = [8, 128], strides = [1, 1]} : vector<8x512xf32> to vector<8x128xf32>
    %114 = arith.negf %113 : vector<8x128xf32>
    %115 = math.exp %114 : vector<8x128xf32>
    %cst_36 = arith.constant 1.000000e+00 : f32
    %116 = vector.broadcast %cst_36 : f32 to vector<8x128xf32>
    %117 = arith.addf %116, %115 : vector<8x128xf32>
    %118 = arith.divf %116, %117 : vector<8x128xf32>
    %119 = vector.extract_strided_slice %112 {offsets = [0, 128], sizes = [8, 128], strides = [1, 1]} : vector<8x512xf32> to vector<8x128xf32>
    %120 = arith.negf %119 : vector<8x128xf32>
    %121 = math.exp %120 : vector<8x128xf32>
    %cst_37 = arith.constant 1.000000e+00 : f32
    %122 = vector.broadcast %cst_37 : f32 to vector<8x128xf32>
    %123 = arith.addf %122, %121 : vector<8x128xf32>
    %124 = arith.divf %122, %123 : vector<8x128xf32>
    %125 = vector.extract_strided_slice %112 {offsets = [0, 256], sizes = [8, 128], strides = [1, 1]} : vector<8x512xf32> to vector<8x128xf32>
    %126 = math.tanh %125 : vector<8x128xf32>
    %127 = vector.extract_strided_slice %112 {offsets = [0, 384], sizes = [8, 128], strides = [1, 1]} : vector<8x512xf32> to vector<8x128xf32>
    %128 = arith.negf %127 : vector<8x128xf32>
    %129 = math.exp %128 : vector<8x128xf32>
    %cst_38 = arith.constant 1.000000e+00 : f32
    %130 = vector.broadcast %cst_38 : f32 to vector<8x128xf32>
    %131 = arith.addf %130, %129 : vector<8x128xf32>
    %132 = arith.divf %130, %131 : vector<8x128xf32>
    %133 = arith.mulf %124, %70 : vector<8x128xf32>
    %134 = arith.mulf %118, %126 : vector<8x128xf32>
    %135 = arith.addf %133, %134 : vector<8x128xf32>
    %136 = math.tanh %135 : vector<8x128xf32>
    %137 = arith.mulf %132, %136 : vector<8x128xf32>
    %c2_i32 = arith.constant 2 : i32
    %c8_i32_39 = arith.constant 8 : i32
    %138 = arith.muli %c2_i32, %c8_i32_39 : i32
    %139 = tpu.assume_multiple %138, 8 : i32
    %140 = arith.index_cast %139 : i32 to index
    %c0_40 = arith.constant 0 : index
    %141 = vector.load %arg10[%140, %c0_40] : memref<64x512xf32, #tpu.memory_space<vmem>>, vector<8x512xf32>
    %142 = arith.truncf %105 : vector<8x128xf32> to vector<8x128xbf16>
    %c0_41 = arith.constant 0 : index
    %c0_42 = arith.constant 0 : index
    %143 = vector.load %arg3[%c0_41, %c0_42] : memref<128x512xbf16, #tpu.memory_space<vmem>>, vector<128x512xbf16>
    %cst_43 = arith.constant dense<0.000000e+00> : vector<8x512xf32>
    %144 = tpu.matmul %142, %143, %cst_43 {dimension_numbers = #tpu.dot_dimension_numbers<[1], [0], [0], [1], [0, 0, 1, 1], [], []>} : vector<8x128xbf16>, vector<128x512xbf16>, vector<8x512xf32> -> vector<8x512xf32>
    %145 = arith.addf %141, %144 : vector<8x512xf32>
    %146 = vector.extract_strided_slice %145 {offsets = [0, 0], sizes = [8, 128], strides = [1, 1]} : vector<8x512xf32> to vector<8x128xf32>
    %147 = arith.negf %146 : vector<8x128xf32>
    %148 = math.exp %147 : vector<8x128xf32>
    %cst_44 = arith.constant 1.000000e+00 : f32
    %149 = vector.broadcast %cst_44 : f32 to vector<8x128xf32>
    %150 = arith.addf %149, %148 : vector<8x128xf32>
    %151 = arith.divf %149, %150 : vector<8x128xf32>
    %152 = vector.extract_strided_slice %145 {offsets = [0, 128], sizes = [8, 128], strides = [1, 1]} : vector<8x512xf32> to vector<8x128xf32>
    %153 = arith.negf %152 : vector<8x128xf32>
    %154 = math.exp %153 : vector<8x128xf32>
    %cst_45 = arith.constant 1.000000e+00 : f32
    %155 = vector.broadcast %cst_45 : f32 to vector<8x128xf32>
    %156 = arith.addf %155, %154 : vector<8x128xf32>
    %157 = arith.divf %155, %156 : vector<8x128xf32>
    %158 = vector.extract_strided_slice %145 {offsets = [0, 256], sizes = [8, 128], strides = [1, 1]} : vector<8x512xf32> to vector<8x128xf32>
    %159 = math.tanh %158 : vector<8x128xf32>
    %160 = vector.extract_strided_slice %145 {offsets = [0, 384], sizes = [8, 128], strides = [1, 1]} : vector<8x512xf32> to vector<8x128xf32>
    %161 = arith.negf %160 : vector<8x128xf32>
    %162 = math.exp %161 : vector<8x128xf32>
    %cst_46 = arith.constant 1.000000e+00 : f32
    %163 = vector.broadcast %cst_46 : f32 to vector<8x128xf32>
    %164 = arith.addf %163, %162 : vector<8x128xf32>
    %165 = arith.divf %163, %164 : vector<8x128xf32>
    %166 = arith.mulf %157, %103 : vector<8x128xf32>
    %167 = arith.mulf %151, %159 : vector<8x128xf32>
    %168 = arith.addf %166, %167 : vector<8x128xf32>
    %169 = math.tanh %168 : vector<8x128xf32>
    %170 = arith.mulf %165, %169 : vector<8x128xf32>
    %171 = tpu.concatenate %170, %137 in 1 : vector<8x128xf32>, vector<8x128xf32> -> vector<8x256xf32>
    %172 = arith.truncf %171 : vector<8x256xf32> to vector<8x256xbf16>
    %c0_47 = arith.constant 0 : index
    %c0_48 = arith.constant 0 : index
    %173 = vector.load %arg5[%c0_47, %c0_48] : memref<256x512xbf16, #tpu.memory_space<vmem>>, vector<256x512xbf16>
    %cst_49 = arith.constant dense<0.000000e+00> : vector<8x512xf32>
    %174 = tpu.matmul %172, %173, %cst_49 {dimension_numbers = #tpu.dot_dimension_numbers<[1], [0], [0], [1], [0, 0, 1, 1], [], []>} : vector<8x256xbf16>, vector<256x512xbf16>, vector<8x512xf32> -> vector<8x512xf32>
    %c0_50 = arith.constant 0 : index
    %c0_51 = arith.constant 0 : index
    %175 = vector.load %arg6[%c0_50, %c0_51] : memref<1x512xf32, #tpu.memory_space<vmem>>, vector<1x512xf32>
    %176 = vector.broadcast %175 : vector<1x512xf32> to vector<8x512xf32>
    %177 = arith.addf %174, %176 : vector<8x512xf32>
    %178 = vector.extract_strided_slice %177 {offsets = [0, 0], sizes = [8, 128], strides = [1, 1]} : vector<8x512xf32> to vector<8x128xf32>
    %179 = arith.negf %178 : vector<8x128xf32>
    %180 = math.exp %179 : vector<8x128xf32>
    %cst_52 = arith.constant 1.000000e+00 : f32
    %181 = vector.broadcast %cst_52 : f32 to vector<8x128xf32>
    %182 = arith.addf %181, %180 : vector<8x128xf32>
    %183 = arith.divf %181, %182 : vector<8x128xf32>
    %184 = vector.extract_strided_slice %177 {offsets = [0, 128], sizes = [8, 128], strides = [1, 1]} : vector<8x512xf32> to vector<8x128xf32>
    %185 = arith.negf %184 : vector<8x128xf32>
    %186 = math.exp %185 : vector<8x128xf32>
    %cst_53 = arith.constant 1.000000e+00 : f32
    %187 = vector.broadcast %cst_53 : f32 to vector<8x128xf32>
    %188 = arith.addf %187, %186 : vector<8x128xf32>
    %189 = arith.divf %187, %188 : vector<8x128xf32>
    %190 = vector.extract_strided_slice %177 {offsets = [0, 256], sizes = [8, 128], strides = [1, 1]} : vector<8x512xf32> to vector<8x128xf32>
    %191 = math.tanh %190 : vector<8x128xf32>
    %192 = vector.extract_strided_slice %177 {offsets = [0, 384], sizes = [8, 128], strides = [1, 1]} : vector<8x512xf32> to vector<8x128xf32>
    %193 = arith.negf %192 : vector<8x128xf32>
    %194 = math.exp %193 : vector<8x128xf32>
    %cst_54 = arith.constant 1.000000e+00 : f32
    %195 = vector.broadcast %cst_54 : f32 to vector<8x128xf32>
    %196 = arith.addf %195, %194 : vector<8x128xf32>
    %197 = arith.divf %195, %196 : vector<8x128xf32>
    %198 = arith.mulf %189, %135 : vector<8x128xf32>
    %199 = arith.mulf %183, %191 : vector<8x128xf32>
    %200 = arith.addf %198, %199 : vector<8x128xf32>
    %201 = math.tanh %200 : vector<8x128xf32>
    %202 = arith.mulf %197, %201 : vector<8x128xf32>
    %c3_i32 = arith.constant 3 : i32
    %c8_i32_55 = arith.constant 8 : i32
    %203 = arith.muli %c3_i32, %c8_i32_55 : i32
    %204 = tpu.assume_multiple %203, 8 : i32
    %205 = arith.index_cast %204 : i32 to index
    %c0_56 = arith.constant 0 : index
    %206 = vector.load %arg10[%205, %c0_56] : memref<64x512xf32, #tpu.memory_space<vmem>>, vector<8x512xf32>
    %207 = arith.truncf %170 : vector<8x128xf32> to vector<8x128xbf16>
    %c0_57 = arith.constant 0 : index
    %c0_58 = arith.constant 0 : index
    %208 = vector.load %arg3[%c0_57, %c0_58] : memref<128x512xbf16, #tpu.memory_space<vmem>>, vector<128x512xbf16>
    %cst_59 = arith.constant dense<0.000000e+00> : vector<8x512xf32>
    %209 = tpu.matmul %207, %208, %cst_59 {dimension_numbers = #tpu.dot_dimension_numbers<[1], [0], [0], [1], [0, 0, 1, 1], [], []>} : vector<8x128xbf16>, vector<128x512xbf16>, vector<8x512xf32> -> vector<8x512xf32>
    %210 = arith.addf %206, %209 : vector<8x512xf32>
    %211 = vector.extract_strided_slice %210 {offsets = [0, 0], sizes = [8, 128], strides = [1, 1]} : vector<8x512xf32> to vector<8x128xf32>
    %212 = arith.negf %211 : vector<8x128xf32>
    %213 = math.exp %212 : vector<8x128xf32>
    %cst_60 = arith.constant 1.000000e+00 : f32
    %214 = vector.broadcast %cst_60 : f32 to vector<8x128xf32>
    %215 = arith.addf %214, %213 : vector<8x128xf32>
    %216 = arith.divf %214, %215 : vector<8x128xf32>
    %217 = vector.extract_strided_slice %210 {offsets = [0, 128], sizes = [8, 128], strides = [1, 1]} : vector<8x512xf32> to vector<8x128xf32>
    %218 = arith.negf %217 : vector<8x128xf32>
    %219 = math.exp %218 : vector<8x128xf32>
    %cst_61 = arith.constant 1.000000e+00 : f32
    %220 = vector.broadcast %cst_61 : f32 to vector<8x128xf32>
    %221 = arith.addf %220, %219 : vector<8x128xf32>
    %222 = arith.divf %220, %221 : vector<8x128xf32>
    %223 = vector.extract_strided_slice %210 {offsets = [0, 256], sizes = [8, 128], strides = [1, 1]} : vector<8x512xf32> to vector<8x128xf32>
    %224 = math.tanh %223 : vector<8x128xf32>
    %225 = vector.extract_strided_slice %210 {offsets = [0, 384], sizes = [8, 128], strides = [1, 1]} : vector<8x512xf32> to vector<8x128xf32>
    %226 = arith.negf %225 : vector<8x128xf32>
    %227 = math.exp %226 : vector<8x128xf32>
    %cst_62 = arith.constant 1.000000e+00 : f32
    %228 = vector.broadcast %cst_62 : f32 to vector<8x128xf32>
    %229 = arith.addf %228, %227 : vector<8x128xf32>
    %230 = arith.divf %228, %229 : vector<8x128xf32>
    %231 = arith.mulf %222, %168 : vector<8x128xf32>
    %232 = arith.mulf %216, %224 : vector<8x128xf32>
    %233 = arith.addf %231, %232 : vector<8x128xf32>
    %234 = math.tanh %233 : vector<8x128xf32>
    %235 = arith.mulf %230, %234 : vector<8x128xf32>
    %236 = tpu.concatenate %235, %202 in 1 : vector<8x128xf32>, vector<8x128xf32> -> vector<8x256xf32>
    %237 = arith.truncf %236 : vector<8x256xf32> to vector<8x256xbf16>
    %c0_63 = arith.constant 0 : index
    %c0_64 = arith.constant 0 : index
    %238 = vector.load %arg5[%c0_63, %c0_64] : memref<256x512xbf16, #tpu.memory_space<vmem>>, vector<256x512xbf16>
    %cst_65 = arith.constant dense<0.000000e+00> : vector<8x512xf32>
    %239 = tpu.matmul %237, %238, %cst_65 {dimension_numbers = #tpu.dot_dimension_numbers<[1], [0], [0], [1], [0, 0, 1, 1], [], []>} : vector<8x256xbf16>, vector<256x512xbf16>, vector<8x512xf32> -> vector<8x512xf32>
    %c0_66 = arith.constant 0 : index
    %c0_67 = arith.constant 0 : index
    %240 = vector.load %arg6[%c0_66, %c0_67] : memref<1x512xf32, #tpu.memory_space<vmem>>, vector<1x512xf32>
    %241 = vector.broadcast %240 : vector<1x512xf32> to vector<8x512xf32>
    %242 = arith.addf %239, %241 : vector<8x512xf32>
    %243 = vector.extract_strided_slice %242 {offsets = [0, 0], sizes = [8, 128], strides = [1, 1]} : vector<8x512xf32> to vector<8x128xf32>
    %244 = arith.negf %243 : vector<8x128xf32>
    %245 = math.exp %244 : vector<8x128xf32>
    %cst_68 = arith.constant 1.000000e+00 : f32
    %246 = vector.broadcast %cst_68 : f32 to vector<8x128xf32>
    %247 = arith.addf %246, %245 : vector<8x128xf32>
    %248 = arith.divf %246, %247 : vector<8x128xf32>
    %249 = vector.extract_strided_slice %242 {offsets = [0, 128], sizes = [8, 128], strides = [1, 1]} : vector<8x512xf32> to vector<8x128xf32>
    %250 = arith.negf %249 : vector<8x128xf32>
    %251 = math.exp %250 : vector<8x128xf32>
    %cst_69 = arith.constant 1.000000e+00 : f32
    %252 = vector.broadcast %cst_69 : f32 to vector<8x128xf32>
    %253 = arith.addf %252, %251 : vector<8x128xf32>
    %254 = arith.divf %252, %253 : vector<8x128xf32>
    %255 = vector.extract_strided_slice %242 {offsets = [0, 256], sizes = [8, 128], strides = [1, 1]} : vector<8x512xf32> to vector<8x128xf32>
    %256 = math.tanh %255 : vector<8x128xf32>
    %257 = vector.extract_strided_slice %242 {offsets = [0, 384], sizes = [8, 128], strides = [1, 1]} : vector<8x512xf32> to vector<8x128xf32>
    %258 = arith.negf %257 : vector<8x128xf32>
    %259 = math.exp %258 : vector<8x128xf32>
    %cst_70 = arith.constant 1.000000e+00 : f32
    %260 = vector.broadcast %cst_70 : f32 to vector<8x128xf32>
    %261 = arith.addf %260, %259 : vector<8x128xf32>
    %262 = arith.divf %260, %261 : vector<8x128xf32>
    %263 = arith.mulf %254, %200 : vector<8x128xf32>
    %264 = arith.mulf %248, %256 : vector<8x128xf32>
    %265 = arith.addf %263, %264 : vector<8x128xf32>
    %266 = math.tanh %265 : vector<8x128xf32>
    %267 = arith.mulf %262, %266 : vector<8x128xf32>
    %c4_i32 = arith.constant 4 : i32
    %c8_i32_71 = arith.constant 8 : i32
    %268 = arith.muli %c4_i32, %c8_i32_71 : i32
    %269 = tpu.assume_multiple %268, 8 : i32
    %270 = arith.index_cast %269 : i32 to index
    %c0_72 = arith.constant 0 : index
    %271 = vector.load %arg10[%270, %c0_72] : memref<64x512xf32, #tpu.memory_space<vmem>>, vector<8x512xf32>
    %272 = arith.truncf %235 : vector<8x128xf32> to vector<8x128xbf16>
    %c0_73 = arith.constant 0 : index
    %c0_74 = arith.constant 0 : index
    %273 = vector.load %arg3[%c0_73, %c0_74] : memref<128x512xbf16, #tpu.memory_space<vmem>>, vector<128x512xbf16>
    %cst_75 = arith.constant dense<0.000000e+00> : vector<8x512xf32>
    %274 = tpu.matmul %272, %273, %cst_75 {dimension_numbers = #tpu.dot_dimension_numbers<[1], [0], [0], [1], [0, 0, 1, 1], [], []>} : vector<8x128xbf16>, vector<128x512xbf16>, vector<8x512xf32> -> vector<8x512xf32>
    %275 = arith.addf %271, %274 : vector<8x512xf32>
    %276 = vector.extract_strided_slice %275 {offsets = [0, 0], sizes = [8, 128], strides = [1, 1]} : vector<8x512xf32> to vector<8x128xf32>
    %277 = arith.negf %276 : vector<8x128xf32>
    %278 = math.exp %277 : vector<8x128xf32>
    %cst_76 = arith.constant 1.000000e+00 : f32
    %279 = vector.broadcast %cst_76 : f32 to vector<8x128xf32>
    %280 = arith.addf %279, %278 : vector<8x128xf32>
    %281 = arith.divf %279, %280 : vector<8x128xf32>
    %282 = vector.extract_strided_slice %275 {offsets = [0, 128], sizes = [8, 128], strides = [1, 1]} : vector<8x512xf32> to vector<8x128xf32>
    %283 = arith.negf %282 : vector<8x128xf32>
    %284 = math.exp %283 : vector<8x128xf32>
    %cst_77 = arith.constant 1.000000e+00 : f32
    %285 = vector.broadcast %cst_77 : f32 to vector<8x128xf32>
    %286 = arith.addf %285, %284 : vector<8x128xf32>
    %287 = arith.divf %285, %286 : vector<8x128xf32>
    %288 = vector.extract_strided_slice %275 {offsets = [0, 256], sizes = [8, 128], strides = [1, 1]} : vector<8x512xf32> to vector<8x128xf32>
    %289 = math.tanh %288 : vector<8x128xf32>
    %290 = vector.extract_strided_slice %275 {offsets = [0, 384], sizes = [8, 128], strides = [1, 1]} : vector<8x512xf32> to vector<8x128xf32>
    %291 = arith.negf %290 : vector<8x128xf32>
    %292 = math.exp %291 : vector<8x128xf32>
    %cst_78 = arith.constant 1.000000e+00 : f32
    %293 = vector.broadcast %cst_78 : f32 to vector<8x128xf32>
    %294 = arith.addf %293, %292 : vector<8x128xf32>
    %295 = arith.divf %293, %294 : vector<8x128xf32>
    %296 = arith.mulf %287, %233 : vector<8x128xf32>
    %297 = arith.mulf %281, %289 : vector<8x128xf32>
    %298 = arith.addf %296, %297 : vector<8x128xf32>
    %299 = math.tanh %298 : vector<8x128xf32>
    %300 = arith.mulf %295, %299 : vector<8x128xf32>
    %301 = tpu.concatenate %300, %267 in 1 : vector<8x128xf32>, vector<8x128xf32> -> vector<8x256xf32>
    %302 = arith.truncf %301 : vector<8x256xf32> to vector<8x256xbf16>
    %c0_79 = arith.constant 0 : index
    %c0_80 = arith.constant 0 : index
    %303 = vector.load %arg5[%c0_79, %c0_80] : memref<256x512xbf16, #tpu.memory_space<vmem>>, vector<256x512xbf16>
    %cst_81 = arith.constant dense<0.000000e+00> : vector<8x512xf32>
    %304 = tpu.matmul %302, %303, %cst_81 {dimension_numbers = #tpu.dot_dimension_numbers<[1], [0], [0], [1], [0, 0, 1, 1], [], []>} : vector<8x256xbf16>, vector<256x512xbf16>, vector<8x512xf32> -> vector<8x512xf32>
    %c0_82 = arith.constant 0 : index
    %c0_83 = arith.constant 0 : index
    %305 = vector.load %arg6[%c0_82, %c0_83] : memref<1x512xf32, #tpu.memory_space<vmem>>, vector<1x512xf32>
    %306 = vector.broadcast %305 : vector<1x512xf32> to vector<8x512xf32>
    %307 = arith.addf %304, %306 : vector<8x512xf32>
    %308 = vector.extract_strided_slice %307 {offsets = [0, 0], sizes = [8, 128], strides = [1, 1]} : vector<8x512xf32> to vector<8x128xf32>
    %309 = arith.negf %308 : vector<8x128xf32>
    %310 = math.exp %309 : vector<8x128xf32>
    %cst_84 = arith.constant 1.000000e+00 : f32
    %311 = vector.broadcast %cst_84 : f32 to vector<8x128xf32>
    %312 = arith.addf %311, %310 : vector<8x128xf32>
    %313 = arith.divf %311, %312 : vector<8x128xf32>
    %314 = vector.extract_strided_slice %307 {offsets = [0, 128], sizes = [8, 128], strides = [1, 1]} : vector<8x512xf32> to vector<8x128xf32>
    %315 = arith.negf %314 : vector<8x128xf32>
    %316 = math.exp %315 : vector<8x128xf32>
    %cst_85 = arith.constant 1.000000e+00 : f32
    %317 = vector.broadcast %cst_85 : f32 to vector<8x128xf32>
    %318 = arith.addf %317, %316 : vector<8x128xf32>
    %319 = arith.divf %317, %318 : vector<8x128xf32>
    %320 = vector.extract_strided_slice %307 {offsets = [0, 256], sizes = [8, 128], strides = [1, 1]} : vector<8x512xf32> to vector<8x128xf32>
    %321 = math.tanh %320 : vector<8x128xf32>
    %322 = vector.extract_strided_slice %307 {offsets = [0, 384], sizes = [8, 128], strides = [1, 1]} : vector<8x512xf32> to vector<8x128xf32>
    %323 = arith.negf %322 : vector<8x128xf32>
    %324 = math.exp %323 : vector<8x128xf32>
    %cst_86 = arith.constant 1.000000e+00 : f32
    %325 = vector.broadcast %cst_86 : f32 to vector<8x128xf32>
    %326 = arith.addf %325, %324 : vector<8x128xf32>
    %327 = arith.divf %325, %326 : vector<8x128xf32>
    %328 = arith.mulf %319, %265 : vector<8x128xf32>
    %329 = arith.mulf %313, %321 : vector<8x128xf32>
    %330 = arith.addf %328, %329 : vector<8x128xf32>
    %331 = math.tanh %330 : vector<8x128xf32>
    %332 = arith.mulf %327, %331 : vector<8x128xf32>
    %c5_i32 = arith.constant 5 : i32
    %c8_i32_87 = arith.constant 8 : i32
    %333 = arith.muli %c5_i32, %c8_i32_87 : i32
    %334 = tpu.assume_multiple %333, 8 : i32
    %335 = arith.index_cast %334 : i32 to index
    %c0_88 = arith.constant 0 : index
    %336 = vector.load %arg10[%335, %c0_88] : memref<64x512xf32, #tpu.memory_space<vmem>>, vector<8x512xf32>
    %337 = arith.truncf %300 : vector<8x128xf32> to vector<8x128xbf16>
    %c0_89 = arith.constant 0 : index
    %c0_90 = arith.constant 0 : index
    %338 = vector.load %arg3[%c0_89, %c0_90] : memref<128x512xbf16, #tpu.memory_space<vmem>>, vector<128x512xbf16>
    %cst_91 = arith.constant dense<0.000000e+00> : vector<8x512xf32>
    %339 = tpu.matmul %337, %338, %cst_91 {dimension_numbers = #tpu.dot_dimension_numbers<[1], [0], [0], [1], [0, 0, 1, 1], [], []>} : vector<8x128xbf16>, vector<128x512xbf16>, vector<8x512xf32> -> vector<8x512xf32>
    %340 = arith.addf %336, %339 : vector<8x512xf32>
    %341 = vector.extract_strided_slice %340 {offsets = [0, 0], sizes = [8, 128], strides = [1, 1]} : vector<8x512xf32> to vector<8x128xf32>
    %342 = arith.negf %341 : vector<8x128xf32>
    %343 = math.exp %342 : vector<8x128xf32>
    %cst_92 = arith.constant 1.000000e+00 : f32
    %344 = vector.broadcast %cst_92 : f32 to vector<8x128xf32>
    %345 = arith.addf %344, %343 : vector<8x128xf32>
    %346 = arith.divf %344, %345 : vector<8x128xf32>
    %347 = vector.extract_strided_slice %340 {offsets = [0, 128], sizes = [8, 128], strides = [1, 1]} : vector<8x512xf32> to vector<8x128xf32>
    %348 = arith.negf %347 : vector<8x128xf32>
    %349 = math.exp %348 : vector<8x128xf32>
    %cst_93 = arith.constant 1.000000e+00 : f32
    %350 = vector.broadcast %cst_93 : f32 to vector<8x128xf32>
    %351 = arith.addf %350, %349 : vector<8x128xf32>
    %352 = arith.divf %350, %351 : vector<8x128xf32>
    %353 = vector.extract_strided_slice %340 {offsets = [0, 256], sizes = [8, 128], strides = [1, 1]} : vector<8x512xf32> to vector<8x128xf32>
    %354 = math.tanh %353 : vector<8x128xf32>
    %355 = vector.extract_strided_slice %340 {offsets = [0, 384], sizes = [8, 128], strides = [1, 1]} : vector<8x512xf32> to vector<8x128xf32>
    %356 = arith.negf %355 : vector<8x128xf32>
    %357 = math.exp %356 : vector<8x128xf32>
    %cst_94 = arith.constant 1.000000e+00 : f32
    %358 = vector.broadcast %cst_94 : f32 to vector<8x128xf32>
    %359 = arith.addf %358, %357 : vector<8x128xf32>
    %360 = arith.divf %358, %359 : vector<8x128xf32>
    %361 = arith.mulf %352, %298 : vector<8x128xf32>
    %362 = arith.mulf %346, %354 : vector<8x128xf32>
    %363 = arith.addf %361, %362 : vector<8x128xf32>
    %364 = math.tanh %363 : vector<8x128xf32>
    %365 = arith.mulf %360, %364 : vector<8x128xf32>
    %366 = tpu.concatenate %365, %332 in 1 : vector<8x128xf32>, vector<8x128xf32> -> vector<8x256xf32>
    %367 = arith.truncf %366 : vector<8x256xf32> to vector<8x256xbf16>
    %c0_95 = arith.constant 0 : index
    %c0_96 = arith.constant 0 : index
    %368 = vector.load %arg5[%c0_95, %c0_96] : memref<256x512xbf16, #tpu.memory_space<vmem>>, vector<256x512xbf16>
    %cst_97 = arith.constant dense<0.000000e+00> : vector<8x512xf32>
    %369 = tpu.matmul %367, %368, %cst_97 {dimension_numbers = #tpu.dot_dimension_numbers<[1], [0], [0], [1], [0, 0, 1, 1], [], []>} : vector<8x256xbf16>, vector<256x512xbf16>, vector<8x512xf32> -> vector<8x512xf32>
    %c0_98 = arith.constant 0 : index
    %c0_99 = arith.constant 0 : index
    %370 = vector.load %arg6[%c0_98, %c0_99] : memref<1x512xf32, #tpu.memory_space<vmem>>, vector<1x512xf32>
    %371 = vector.broadcast %370 : vector<1x512xf32> to vector<8x512xf32>
    %372 = arith.addf %369, %371 : vector<8x512xf32>
    %373 = vector.extract_strided_slice %372 {offsets = [0, 0], sizes = [8, 128], strides = [1, 1]} : vector<8x512xf32> to vector<8x128xf32>
    %374 = arith.negf %373 : vector<8x128xf32>
    %375 = math.exp %374 : vector<8x128xf32>
    %cst_100 = arith.constant 1.000000e+00 : f32
    %376 = vector.broadcast %cst_100 : f32 to vector<8x128xf32>
    %377 = arith.addf %376, %375 : vector<8x128xf32>
    %378 = arith.divf %376, %377 : vector<8x128xf32>
    %379 = vector.extract_strided_slice %372 {offsets = [0, 128], sizes = [8, 128], strides = [1, 1]} : vector<8x512xf32> to vector<8x128xf32>
    %380 = arith.negf %379 : vector<8x128xf32>
    %381 = math.exp %380 : vector<8x128xf32>
    %cst_101 = arith.constant 1.000000e+00 : f32
    %382 = vector.broadcast %cst_101 : f32 to vector<8x128xf32>
    %383 = arith.addf %382, %381 : vector<8x128xf32>
    %384 = arith.divf %382, %383 : vector<8x128xf32>
    %385 = vector.extract_strided_slice %372 {offsets = [0, 256], sizes = [8, 128], strides = [1, 1]} : vector<8x512xf32> to vector<8x128xf32>
    %386 = math.tanh %385 : vector<8x128xf32>
    %387 = vector.extract_strided_slice %372 {offsets = [0, 384], sizes = [8, 128], strides = [1, 1]} : vector<8x512xf32> to vector<8x128xf32>
    %388 = arith.negf %387 : vector<8x128xf32>
    %389 = math.exp %388 : vector<8x128xf32>
    %cst_102 = arith.constant 1.000000e+00 : f32
    %390 = vector.broadcast %cst_102 : f32 to vector<8x128xf32>
    %391 = arith.addf %390, %389 : vector<8x128xf32>
    %392 = arith.divf %390, %391 : vector<8x128xf32>
    %393 = arith.mulf %384, %330 : vector<8x128xf32>
    %394 = arith.mulf %378, %386 : vector<8x128xf32>
    %395 = arith.addf %393, %394 : vector<8x128xf32>
    %396 = math.tanh %395 : vector<8x128xf32>
    %397 = arith.mulf %392, %396 : vector<8x128xf32>
    %c6_i32 = arith.constant 6 : i32
    %c8_i32_103 = arith.constant 8 : i32
    %398 = arith.muli %c6_i32, %c8_i32_103 : i32
    %399 = tpu.assume_multiple %398, 8 : i32
    %400 = arith.index_cast %399 : i32 to index
    %c0_104 = arith.constant 0 : index
    %401 = vector.load %arg10[%400, %c0_104] : memref<64x512xf32, #tpu.memory_space<vmem>>, vector<8x512xf32>
    %402 = arith.truncf %365 : vector<8x128xf32> to vector<8x128xbf16>
    %c0_105 = arith.constant 0 : index
    %c0_106 = arith.constant 0 : index
    %403 = vector.load %arg3[%c0_105, %c0_106] : memref<128x512xbf16, #tpu.memory_space<vmem>>, vector<128x512xbf16>
    %cst_107 = arith.constant dense<0.000000e+00> : vector<8x512xf32>
    %404 = tpu.matmul %402, %403, %cst_107 {dimension_numbers = #tpu.dot_dimension_numbers<[1], [0], [0], [1], [0, 0, 1, 1], [], []>} : vector<8x128xbf16>, vector<128x512xbf16>, vector<8x512xf32> -> vector<8x512xf32>
    %405 = arith.addf %401, %404 : vector<8x512xf32>
    %406 = vector.extract_strided_slice %405 {offsets = [0, 0], sizes = [8, 128], strides = [1, 1]} : vector<8x512xf32> to vector<8x128xf32>
    %407 = arith.negf %406 : vector<8x128xf32>
    %408 = math.exp %407 : vector<8x128xf32>
    %cst_108 = arith.constant 1.000000e+00 : f32
    %409 = vector.broadcast %cst_108 : f32 to vector<8x128xf32>
    %410 = arith.addf %409, %408 : vector<8x128xf32>
    %411 = arith.divf %409, %410 : vector<8x128xf32>
    %412 = vector.extract_strided_slice %405 {offsets = [0, 128], sizes = [8, 128], strides = [1, 1]} : vector<8x512xf32> to vector<8x128xf32>
    %413 = arith.negf %412 : vector<8x128xf32>
    %414 = math.exp %413 : vector<8x128xf32>
    %cst_109 = arith.constant 1.000000e+00 : f32
    %415 = vector.broadcast %cst_109 : f32 to vector<8x128xf32>
    %416 = arith.addf %415, %414 : vector<8x128xf32>
    %417 = arith.divf %415, %416 : vector<8x128xf32>
    %418 = vector.extract_strided_slice %405 {offsets = [0, 256], sizes = [8, 128], strides = [1, 1]} : vector<8x512xf32> to vector<8x128xf32>
    %419 = math.tanh %418 : vector<8x128xf32>
    %420 = vector.extract_strided_slice %405 {offsets = [0, 384], sizes = [8, 128], strides = [1, 1]} : vector<8x512xf32> to vector<8x128xf32>
    %421 = arith.negf %420 : vector<8x128xf32>
    %422 = math.exp %421 : vector<8x128xf32>
    %cst_110 = arith.constant 1.000000e+00 : f32
    %423 = vector.broadcast %cst_110 : f32 to vector<8x128xf32>
    %424 = arith.addf %423, %422 : vector<8x128xf32>
    %425 = arith.divf %423, %424 : vector<8x128xf32>
    %426 = arith.mulf %417, %363 : vector<8x128xf32>
    %427 = arith.mulf %411, %419 : vector<8x128xf32>
    %428 = arith.addf %426, %427 : vector<8x128xf32>
    %429 = math.tanh %428 : vector<8x128xf32>
    %430 = arith.mulf %425, %429 : vector<8x128xf32>
    %431 = tpu.concatenate %430, %397 in 1 : vector<8x128xf32>, vector<8x128xf32> -> vector<8x256xf32>
    %432 = arith.truncf %431 : vector<8x256xf32> to vector<8x256xbf16>
    %c0_111 = arith.constant 0 : index
    %c0_112 = arith.constant 0 : index
    %433 = vector.load %arg5[%c0_111, %c0_112] : memref<256x512xbf16, #tpu.memory_space<vmem>>, vector<256x512xbf16>
    %cst_113 = arith.constant dense<0.000000e+00> : vector<8x512xf32>
    %434 = tpu.matmul %432, %433, %cst_113 {dimension_numbers = #tpu.dot_dimension_numbers<[1], [0], [0], [1], [0, 0, 1, 1], [], []>} : vector<8x256xbf16>, vector<256x512xbf16>, vector<8x512xf32> -> vector<8x512xf32>
    %c0_114 = arith.constant 0 : index
    %c0_115 = arith.constant 0 : index
    %435 = vector.load %arg6[%c0_114, %c0_115] : memref<1x512xf32, #tpu.memory_space<vmem>>, vector<1x512xf32>
    %436 = vector.broadcast %435 : vector<1x512xf32> to vector<8x512xf32>
    %437 = arith.addf %434, %436 : vector<8x512xf32>
    %438 = vector.extract_strided_slice %437 {offsets = [0, 0], sizes = [8, 128], strides = [1, 1]} : vector<8x512xf32> to vector<8x128xf32>
    %439 = arith.negf %438 : vector<8x128xf32>
    %440 = math.exp %439 : vector<8x128xf32>
    %cst_116 = arith.constant 1.000000e+00 : f32
    %441 = vector.broadcast %cst_116 : f32 to vector<8x128xf32>
    %442 = arith.addf %441, %440 : vector<8x128xf32>
    %443 = arith.divf %441, %442 : vector<8x128xf32>
    %444 = vector.extract_strided_slice %437 {offsets = [0, 128], sizes = [8, 128], strides = [1, 1]} : vector<8x512xf32> to vector<8x128xf32>
    %445 = arith.negf %444 : vector<8x128xf32>
    %446 = math.exp %445 : vector<8x128xf32>
    %cst_117 = arith.constant 1.000000e+00 : f32
    %447 = vector.broadcast %cst_117 : f32 to vector<8x128xf32>
    %448 = arith.addf %447, %446 : vector<8x128xf32>
    %449 = arith.divf %447, %448 : vector<8x128xf32>
    %450 = vector.extract_strided_slice %437 {offsets = [0, 256], sizes = [8, 128], strides = [1, 1]} : vector<8x512xf32> to vector<8x128xf32>
    %451 = math.tanh %450 : vector<8x128xf32>
    %452 = vector.extract_strided_slice %437 {offsets = [0, 384], sizes = [8, 128], strides = [1, 1]} : vector<8x512xf32> to vector<8x128xf32>
    %453 = arith.negf %452 : vector<8x128xf32>
    %454 = math.exp %453 : vector<8x128xf32>
    %cst_118 = arith.constant 1.000000e+00 : f32
    %455 = vector.broadcast %cst_118 : f32 to vector<8x128xf32>
    %456 = arith.addf %455, %454 : vector<8x128xf32>
    %457 = arith.divf %455, %456 : vector<8x128xf32>
    %458 = arith.mulf %449, %395 : vector<8x128xf32>
    %459 = arith.mulf %443, %451 : vector<8x128xf32>
    %460 = arith.addf %458, %459 : vector<8x128xf32>
    %461 = math.tanh %460 : vector<8x128xf32>
    %462 = arith.mulf %457, %461 : vector<8x128xf32>
    %c7_i32 = arith.constant 7 : i32
    %c8_i32_119 = arith.constant 8 : i32
    %463 = arith.muli %c7_i32, %c8_i32_119 : i32
    %464 = tpu.assume_multiple %463, 8 : i32
    %465 = arith.index_cast %464 : i32 to index
    %c0_120 = arith.constant 0 : index
    %466 = vector.load %arg10[%465, %c0_120] : memref<64x512xf32, #tpu.memory_space<vmem>>, vector<8x512xf32>
    %467 = arith.truncf %430 : vector<8x128xf32> to vector<8x128xbf16>
    %c0_121 = arith.constant 0 : index
    %c0_122 = arith.constant 0 : index
    %468 = vector.load %arg3[%c0_121, %c0_122] : memref<128x512xbf16, #tpu.memory_space<vmem>>, vector<128x512xbf16>
    %cst_123 = arith.constant dense<0.000000e+00> : vector<8x512xf32>
    %469 = tpu.matmul %467, %468, %cst_123 {dimension_numbers = #tpu.dot_dimension_numbers<[1], [0], [0], [1], [0, 0, 1, 1], [], []>} : vector<8x128xbf16>, vector<128x512xbf16>, vector<8x512xf32> -> vector<8x512xf32>
    %470 = arith.addf %466, %469 : vector<8x512xf32>
    %471 = vector.extract_strided_slice %470 {offsets = [0, 0], sizes = [8, 128], strides = [1, 1]} : vector<8x512xf32> to vector<8x128xf32>
    %472 = arith.negf %471 : vector<8x128xf32>
    %473 = math.exp %472 : vector<8x128xf32>
    %cst_124 = arith.constant 1.000000e+00 : f32
    %474 = vector.broadcast %cst_124 : f32 to vector<8x128xf32>
    %475 = arith.addf %474, %473 : vector<8x128xf32>
    %476 = arith.divf %474, %475 : vector<8x128xf32>
    %477 = vector.extract_strided_slice %470 {offsets = [0, 128], sizes = [8, 128], strides = [1, 1]} : vector<8x512xf32> to vector<8x128xf32>
    %478 = arith.negf %477 : vector<8x128xf32>
    %479 = math.exp %478 : vector<8x128xf32>
    %cst_125 = arith.constant 1.000000e+00 : f32
    %480 = vector.broadcast %cst_125 : f32 to vector<8x128xf32>
    %481 = arith.addf %480, %479 : vector<8x128xf32>
    %482 = arith.divf %480, %481 : vector<8x128xf32>
    %483 = vector.extract_strided_slice %470 {offsets = [0, 256], sizes = [8, 128], strides = [1, 1]} : vector<8x512xf32> to vector<8x128xf32>
    %484 = math.tanh %483 : vector<8x128xf32>
    %485 = vector.extract_strided_slice %470 {offsets = [0, 384], sizes = [8, 128], strides = [1, 1]} : vector<8x512xf32> to vector<8x128xf32>
    %486 = arith.negf %485 : vector<8x128xf32>
    %487 = math.exp %486 : vector<8x128xf32>
    %cst_126 = arith.constant 1.000000e+00 : f32
    %488 = vector.broadcast %cst_126 : f32 to vector<8x128xf32>
    %489 = arith.addf %488, %487 : vector<8x128xf32>
    %490 = arith.divf %488, %489 : vector<8x128xf32>
    %491 = arith.mulf %482, %428 : vector<8x128xf32>
    %492 = arith.mulf %476, %484 : vector<8x128xf32>
    %493 = arith.addf %491, %492 : vector<8x128xf32>
    %494 = math.tanh %493 : vector<8x128xf32>
    %495 = arith.mulf %490, %494 : vector<8x128xf32>
    %496 = tpu.concatenate %495, %462 in 1 : vector<8x128xf32>, vector<8x128xf32> -> vector<8x256xf32>
    %497 = arith.truncf %496 : vector<8x256xf32> to vector<8x256xbf16>
    %c0_127 = arith.constant 0 : index
    %c0_128 = arith.constant 0 : index
    %498 = vector.load %arg5[%c0_127, %c0_128] : memref<256x512xbf16, #tpu.memory_space<vmem>>, vector<256x512xbf16>
    %cst_129 = arith.constant dense<0.000000e+00> : vector<8x512xf32>
    %499 = tpu.matmul %497, %498, %cst_129 {dimension_numbers = #tpu.dot_dimension_numbers<[1], [0], [0], [1], [0, 0, 1, 1], [], []>} : vector<8x256xbf16>, vector<256x512xbf16>, vector<8x512xf32> -> vector<8x512xf32>
    %c0_130 = arith.constant 0 : index
    %c0_131 = arith.constant 0 : index
    %500 = vector.load %arg6[%c0_130, %c0_131] : memref<1x512xf32, #tpu.memory_space<vmem>>, vector<1x512xf32>
    %501 = vector.broadcast %500 : vector<1x512xf32> to vector<8x512xf32>
    %502 = arith.addf %499, %501 : vector<8x512xf32>
    %503 = vector.extract_strided_slice %502 {offsets = [0, 0], sizes = [8, 128], strides = [1, 1]} : vector<8x512xf32> to vector<8x128xf32>
    %504 = arith.negf %503 : vector<8x128xf32>
    %505 = math.exp %504 : vector<8x128xf32>
    %cst_132 = arith.constant 1.000000e+00 : f32
    %506 = vector.broadcast %cst_132 : f32 to vector<8x128xf32>
    %507 = arith.addf %506, %505 : vector<8x128xf32>
    %508 = arith.divf %506, %507 : vector<8x128xf32>
    %509 = vector.extract_strided_slice %502 {offsets = [0, 128], sizes = [8, 128], strides = [1, 1]} : vector<8x512xf32> to vector<8x128xf32>
    %510 = arith.negf %509 : vector<8x128xf32>
    %511 = math.exp %510 : vector<8x128xf32>
    %cst_133 = arith.constant 1.000000e+00 : f32
    %512 = vector.broadcast %cst_133 : f32 to vector<8x128xf32>
    %513 = arith.addf %512, %511 : vector<8x128xf32>
    %514 = arith.divf %512, %513 : vector<8x128xf32>
    %515 = vector.extract_strided_slice %502 {offsets = [0, 256], sizes = [8, 128], strides = [1, 1]} : vector<8x512xf32> to vector<8x128xf32>
    %516 = math.tanh %515 : vector<8x128xf32>
    %517 = vector.extract_strided_slice %502 {offsets = [0, 384], sizes = [8, 128], strides = [1, 1]} : vector<8x512xf32> to vector<8x128xf32>
    %518 = arith.negf %517 : vector<8x128xf32>
    %519 = math.exp %518 : vector<8x128xf32>
    %cst_134 = arith.constant 1.000000e+00 : f32
    %520 = vector.broadcast %cst_134 : f32 to vector<8x128xf32>
    %521 = arith.addf %520, %519 : vector<8x128xf32>
    %522 = arith.divf %520, %521 : vector<8x128xf32>
    %523 = arith.mulf %514, %460 : vector<8x128xf32>
    %524 = arith.mulf %508, %516 : vector<8x128xf32>
    %525 = arith.addf %523, %524 : vector<8x128xf32>
    %526 = math.tanh %525 : vector<8x128xf32>
    %527 = arith.mulf %522, %526 : vector<8x128xf32>
    %c8_i32_135 = arith.constant 8 : i32
    %528 = arith.truncf %527 : vector<8x128xf32> to vector<8x128xbf16>
    %c0_136 = arith.constant 0 : index
    %c0_137 = arith.constant 0 : index
    %529 = vector.load %arg7[%c0_136, %c0_137] : memref<128x128xbf16, #tpu.memory_space<vmem>>, vector<128x128xbf16>
    %cst_138 = arith.constant dense<0.000000e+00> : vector<8x128xf32>
    %530 = tpu.matmul %528, %529, %cst_138 {dimension_numbers = #tpu.dot_dimension_numbers<[1], [0], [0], [1], [0, 0, 1, 1], [], []>} : vector<8x128xbf16>, vector<128x128xbf16>, vector<8x128xf32> -> vector<8x128xf32>
    %c0_139 = arith.constant 0 : index
    %c0_140 = arith.constant 0 : index
    %531 = vector.load %arg8[%c0_139, %c0_140] : memref<1x128xf32, #tpu.memory_space<vmem>>, vector<1x128xf32>
    %532 = vector.broadcast %531 : vector<1x128xf32> to vector<8x128xf32>
    %533 = arith.addf %530, %532 : vector<8x128xf32>
    %c0_141 = arith.constant 0 : index
    %c0_142 = arith.constant 0 : index
    %534 = vector.load %arg9[%c0_141, %c0_142] : memref<8x128xf32, #tpu.memory_space<vmem>>, vector<8x128xf32>
    tpu.vector_store %arg9[%c0_141, %c0_142], %533 {strides = array<i32>} : memref<8x128xf32, #tpu.memory_space<vmem>>, vector<8x128xf32>,
    return
  }
  func.func @transform_0(%arg0: i32) -> (i32, i32) {
    %c0_i32 = arith.constant 0 : i32
    %c0_i32_0 = arith.constant 0 : i32
    %c0_i32_1 = arith.constant 0 : i32
    return %c0_i32, %c0_i32_0 : i32, i32
  }
  func.func @transform_1(%arg0: i32) -> (i32, i32) {
    %c0_i32 = arith.constant 0 : i32
    %c0_i32_0 = arith.constant 0 : i32
    %c0_i32_1 = arith.constant 0 : i32
    return %c0_i32, %c0_i32_0 : i32, i32
  }
  func.func @transform_2(%arg0: i32) -> (i32, i32) {
    %c0_i32 = arith.constant 0 : i32
    %c0_i32_0 = arith.constant 0 : i32
    %c0_i32_1 = arith.constant 0 : i32
    return %c0_i32, %c0_i32_0 : i32, i32
  }
  func.func @transform_3(%arg0: i32) -> (i32, i32) {
    %c0_i32 = arith.constant 0 : i32
    %c0_i32_0 = arith.constant 0 : i32
    %c0_i32_1 = arith.constant 0 : i32
    return %c0_i32, %c0_i32_0 : i32, i32
  }
  func.func @transform_4(%arg0: i32) -> (i32, i32) {
    %c0_i32 = arith.constant 0 : i32
    %c0_i32_0 = arith.constant 0 : i32
    %c0_i32_1 = arith.constant 0 : i32
    return %c0_i32, %c0_i32_0 : i32, i32
  }
  func.func @transform_5(%arg0: i32) -> (i32, i32) {
    %c0_i32 = arith.constant 0 : i32
    %c0_i32_0 = arith.constant 0 : i32
    %c0_i32_1 = arith.constant 0 : i32
    return %c0_i32, %c0_i32_0 : i32, i32
  }
  func.func @transform_6(%arg0: i32) -> (i32, i32) {
    %c0_i32 = arith.constant 0 : i32
    %c0_i32_0 = arith.constant 0 : i32
    %c0_i32_1 = arith.constant 0 : i32
    return %c0_i32, %c0_i32_0 : i32, i32
  }
  func.func @transform_7(%arg0: i32) -> (i32, i32) {
    %c0_i32 = arith.constant 0 : i32
    %c0_i32_0 = arith.constant 0 : i32
    %c0_i32_1 = arith.constant 0 : i32
    return %c0_i32, %c0_i32_0 : i32, i32
  }
  func.func @transform_8(%arg0: i32) -> (i32, i32) {
    %c0_i32 = arith.constant 0 : i32
    %c0_i32_0 = arith.constant 0 : i32
    %c0_i32_1 = arith.constant 0 : i32
    return %c0_i32, %c0_i32_0 : i32, i32
  }
}

</mosaic_0001>

<llo_original>
// kernel: lstm_forward.1
$region0: #{lstm_forward.1}
  #allocation0 [shape = 'u32[]', space=smem, size = 0x4, offset = 0x4, fixed_abs, tag = 'smem constant byte address 0x4 - core index']
  #allocation1 [shape = 'u32[144,128]{1,0:T(1,128)}', space=vmem, size = 0x12000, scoped, tag = 'internal scratch']
  #allocation2 [shape = 'f32[64,512]{1,0:T(8,128)}', space=vmem, size = 0x20000, scoped, tag = 'scratch operand']
  %s0 = inlined_call_operand.vmem [shape: bf16[64,16], index: 0, kind: input, shape index: {}]
  %s1 = inlined_call_operand.vmem [shape: bf16[16,512], index: 1, kind: input, shape index: {}]
  %s2 = inlined_call_operand.vmem [shape: bf16[128,512], index: 2, kind: input, shape index: {}]
  %s3 = inlined_call_operand.vmem [shape: f32[1,512], index: 3, kind: input, shape index: {}]
  %s4 = inlined_call_operand.vmem [shape: bf16[256,512], index: 4, kind: input, shape index: {}]
  %s5 = inlined_call_operand.vmem [shape: f32[1,512], index: 5, kind: input, shape index: {}]
  %s6 = inlined_call_operand.vmem [shape: bf16[128,128], index: 6, kind: input, shape index: {}]
  %s7 = inlined_call_operand.vmem [shape: f32[1,128], index: 7, kind: input, shape index: {}]
  %s8 = inlined_call_operand.vmem [shape: f32[8,128], index: 8, kind: output, shape index: {}]
  %s9 = sld [smem:[#allocation0]]
  $region42: #{lstm_forward.1} parent=0
    _
  %s11 = ssub.s32 1, %s9
  %s12 = scalar_select 0, %s11, %s9
  // Predicated region
  $region2: #{lstm_forward.1} parent=0 // pred_check
    _
  $region3: #{lstm_forward.1} parent=0 // pred_check_branch
    %14 = sbr.rel (0) target = $region5
  $region4: #{lstm_forward.1} parent=0 // pred_region
    _
  $region5: #{lstm_forward.1} parent=0 // pred_fallthru
    _
  // Predicated region
  $region6: #{lstm_forward.1} parent=0 // pred_check
    _
  $region7: #{lstm_forward.1} parent=0 // pred_check_branch
    %16 = sbr.rel (0) target = $region9
  $region8: #{lstm_forward.1} parent=0 // pred_region
    _
  $region9: #{lstm_forward.1} parent=0 // pred_fallthru
    _
  // Predicated region
  $region10: #{lstm_forward.1} parent=0 // pred_check
    _
  $region11: #{lstm_forward.1} parent=0 // pred_check_branch
    %18 = sbr.rel (0) target = $region13
  $region12: #{lstm_forward.1} parent=0 // pred_region
    _
  $region13: #{lstm_forward.1} parent=0 // pred_fallthru
    _
  // Predicated region
  $region14: #{lstm_forward.1} parent=0 // pred_check
    _
  $region15: #{lstm_forward.1} parent=0 // pred_check_branch
    %20 = sbr.rel (0) target = $region17
  $region16: #{lstm_forward.1} parent=0 // pred_region
    _
  $region17: #{lstm_forward.1} parent=0 // pred_fallthru
    _
  // Predicated region
  $region18: #{lstm_forward.1} parent=0 // pred_check
    _
  $region19: #{lstm_forward.1} parent=0 // pred_check_branch
    %22 = sbr.rel (0) target = $region21
  $region20: #{lstm_forward.1} parent=0 // pred_region
    _
  $region21: #{lstm_forward.1} parent=0 // pred_fallthru
    _
  // Predicated region
  $region22: #{lstm_forward.1} parent=0 // pred_check
    _
  $region23: #{lstm_forward.1} parent=0 // pred_check_branch
    %24 = sbr.rel (0) target = $region25
  $region24: #{lstm_forward.1} parent=0 // pred_region
    _
  $region25: #{lstm_forward.1} parent=0 // pred_fallthru
    _
  // Predicated region
  $region26: #{lstm_forward.1} parent=0 // pred_check
    _
  $region27: #{lstm_forward.1} parent=0 // pred_check_branch
    %26 = sbr.rel (0) target = $region29
  $region28: #{lstm_forward.1} parent=0 // pred_region
    _
  $region29: #{lstm_forward.1} parent=0 // pred_fallthru
    _
  // Predicated region
  $region30: #{lstm_forward.1} parent=0 // pred_check
    _
  $region31: #{lstm_forward.1} parent=0 // pred_check_branch
    %28 = sbr.rel (0) target = $region33
  $region32: #{lstm_forward.1} parent=0 // pred_region
    _
  $region33: #{lstm_forward.1} parent=0 // pred_fallthru
    _
  %v30 = vld [vmem:[%s0] sm:$0xf]
  %v31 = vld [vmem:[%s0 + $0x4] sm:$0xf]
  %v32 = vld [vmem:[%s0 + $0x8] sm:$0xf]
  %v33 = vld [vmem:[%s0 + $0xc] sm:$0xf]
  %v34 = vld [vmem:[%s0 + $0x10] sm:$0xf]
  %v35 = vld [vmem:[%s0 + $0x14] sm:$0xf]
  %v36 = vld [vmem:[%s0 + $0x18] sm:$0xf]
  %v37 = vld [vmem:[%s0 + $0x1c] sm:$0xf]
  %v38 = vld [vmem:[%s1] sm:$0xff]
  %v39 = vld [vmem:[%s1 + $0x8] sm:$0xff]
  %v40 = vld [vmem:[%s1 + $0x10] sm:$0xff]
  %v41 = vld [vmem:[%s1 + $0x18] sm:$0xff]
  %v42 = vld [vmem:[%s3] sm:$0xf]
  %v44 = vlaneseq
  %v45 = vshrl.u32 %v44, 7
  %v46 = vsub.s32 0, %v45
  %v47 = vrot.slane %v42, %v46
  %v48 = vlaneseq
  %v49 = vshrl.u32 %v48, 7
  %v50 = vsub.s32 1, %v49
  %v51 = vrot.slane %v42, %v50
  %v52 = vlaneseq
  %v53 = vshrl.u32 %v52, 7
  %v54 = vsub.s32 2, %v53
  %v55 = vrot.slane %v42, %v54
  %v56 = vlaneseq
  %v57 = vshrl.u32 %v56, 7
  %v58 = vsub.s32 3, %v57
  %v59 = vrot.slane %v42, %v58
  %v72 = vunpack.c.l.b16 %v30
  %v73 = vunpack.c.l.b16 %v31
  %v74 = vunpack.c.l.b16 %v32
  %v75 = vunpack.c.l.b16 %v33
  %v76 = vunpack.c.l.b16 %v34
  %v77 = vunpack.c.l.b16 %v35
  %v78 = vunpack.c.l.b16 %v36
  %v79 = vunpack.c.l.b16 %v37
  %v80 = vpack.c.b16 %v73, %v72
  %v81 = vpack.c.b16 %v75, %v74
  %v82 = vpack.c.b16 %v77, %v76
  %v83 = vpack.c.b16 %v79, %v78
  %v88 = vunpack.c.l.b16 %v38
  %v89 = vunpack.c.h.b16 %v38
  %v90 = vunpack.c.l.b16 %v39
  %v91 = vunpack.c.h.b16 %v39
  %v92 = vunpack.c.l.b16 %v40
  %v93 = vunpack.c.h.b16 %v40
  %v94 = vunpack.c.l.b16 %v41
  %v95 = vunpack.c.h.b16 %v41
  %v96 = vpack.c.b16 %v92, %v88
  %v97 = vpack.c.b16 %v93, %v89
  %v98 = vpack.c.b16 %v94, %v90
  %v99 = vpack.c.b16 %v95, %v91
  %vm104 = vcmask 130048
  %v106 = vsel %vm104, %v80, 0
  %v109 = vsel %vm104, %v81, 0
  %v112 = vsel %vm104, %v82, 0
  %v115 = vsel %vm104, %v83, 0
  %117 = vmatprep.subr.bf16.mxu0 0
  %118 = vmatpush1.bf16.msra.mxu0 0
  %119 = vmatprep.subr.bf16.mxu0 0
  %120 = vmatpush1.bf16.msra.mxu0 0
  %121 = vmatprep.subr.bf16.mxu0 0
  %122 = vmatpush1.bf16.msra.mxu0 0
  %123 = vmatprep.subr.bf16.mxu0 0
  %124 = vmatpush1.bf16.msra.mxu0 0
  %125 = vmatprep.subr.bf16.mxu0 0
  %126 = vmatpush1.bf16.msra.mxu0 0
  %127 = vmatprep.subr.bf16.mxu0 0
  %128 = vmatpush1.bf16.msra.mxu0 0
  %129 = vmatprep.subr.bf16.mxu0 0
  %130 = vmatpush1.bf16.msra.mxu0 0
  %131 = vmatprep.subr.bf16.mxu0 %v97
  %132 = vmatpush1.bf16.msra.mxu0 %v96
  %133 = vmatprep.subr.bf16.mxu0 0
  %134 = vmatpush2.bf16.msra.mxu0 0
  %135 = vmatprep.subr.bf16.mxu0 0
  %136 = vmatpush2.bf16.msra.mxu0 0
  %137 = vmatprep.subr.bf16.mxu0 0
  %138 = vmatpush2.bf16.msra.mxu0 0
  %139 = vmatprep.subr.bf16.mxu0 0
  %140 = vmatpush2.bf16.msra.mxu0 0
  %141 = vmatprep.subr.bf16.mxu0 0
  %142 = vmatpush2.bf16.msra.mxu0 0
  %143 = vmatprep.subr.bf16.mxu0 0
  %144 = vmatpush2.bf16.msra.mxu0 0
  %145 = vmatprep.subr.bf16.mxu0 0
  %146 = vmatpush2.bf16.msra.mxu0 0
  %147 = vmatprep.subr.bf16.mxu0 0
  %148 = vmatpush2.bf16.msra.mxu0 0
  %149 = vmatprep.mubr.bf16.mxu0 0
  %150 = vmatmul.mubr.bf16.gmra.mxu0 %v106
  %v151 = vpop.f32.mrf.mxu0
  %v152 = vadd.f32 %v47, %v151
  %v153 = vpop.f32.mrf.mxu0
  %v154 = vadd.f32 %v51, %v153
  %v155 = vpop.f32.mrf.mxu0
  %v156 = vadd.f32 %v47, %v155
  %v157 = vpop.f32.mrf.mxu0
  %v158 = vadd.f32 %v51, %v157
  %159 = vmatprep.mubr.bf16.mxu0 0
  %160 = vmatmul.mubr.bf16.gmra.mxu0 %v109
  %v161 = vpop.f32.mrf.mxu0
  %v162 = vadd.f32 %v47, %v161
  %v163 = vpop.f32.mrf.mxu0
  %v164 = vadd.f32 %v51, %v163
  %v165 = vpop.f32.mrf.mxu0
  %v166 = vadd.f32 %v47, %v165
  %v167 = vpop.f32.mrf.mxu0
  %v168 = vadd.f32 %v51, %v167
  %169 = vmatprep.mubr.bf16.mxu0 0
  %170 = vmatmul.mubr.bf16.gmra.mxu0 %v112
  %v171 = vpop.f32.mrf.mxu0
  %v172 = vadd.f32 %v47, %v171
  %v173 = vpop.f32.mrf.mxu0
  %v174 = vadd.f32 %v51, %v173
  %v175 = vpop.f32.mrf.mxu0
  %v176 = vadd.f32 %v47, %v175
  %v177 = vpop.f32.mrf.mxu0
  %v178 = vadd.f32 %v51, %v177
  %179 = vmatprep.mubr.bf16.mxu0 0
  %180 = vmatmul.mubr.bf16.gmra.mxu0 %v115
  %v181 = vpop.f32.mrf.mxu0
  %v182 = vadd.f32 %v47, %v181
  %v183 = vpop.f32.mrf.mxu0
  %v184 = vadd.f32 %v51, %v183
  %v185 = vpop.f32.mrf.mxu0
  %v186 = vadd.f32 %v47, %v185
  %v187 = vpop.f32.mrf.mxu0
  %v188 = vadd.f32 %v51, %v187
  %189 = vdwg.mxu0
  %190 = vmatprep.subr.bf16.mxu0 0
  %191 = vmatpush1.bf16.msra.mxu0 0
  %192 = vmatprep.subr.bf16.mxu0 0
  %193 = vmatpush1.bf16.msra.mxu0 0
  %194 = vmatprep.subr.bf16.mxu0 0
  %195 = vmatpush1.bf16.msra.mxu0 0
  %196 = vmatprep.subr.bf16.mxu0 0
  %197 = vmatpush1.bf16.msra.mxu0 0
  %198 = vmatprep.subr.bf16.mxu0 0
  %199 = vmatpush1.bf16.msra.mxu0 0
  %200 = vmatprep.subr.bf16.mxu0 0
  %201 = vmatpush1.bf16.msra.mxu0 0
  %202 = vmatprep.subr.bf16.mxu0 0
  %203 = vmatpush1.bf16.msra.mxu0 0
  %204 = vmatprep.subr.bf16.mxu0 %v99
  %205 = vmatpush1.bf16.msra.mxu0 %v98
  %206 = vmatprep.subr.bf16.mxu0 0
  %207 = vmatpush2.bf16.msra.mxu0 0
  %208 = vmatprep.subr.bf16.mxu0 0
  %209 = vmatpush2.bf16.msra.mxu0 0
  %210 = vmatprep.subr.bf16.mxu0 0
  %211 = vmatpush2.bf16.msra.mxu0 0
  %212 = vmatprep.subr.bf16.mxu0 0
  %213 = vmatpush2.bf16.msra.mxu0 0
  %214 = vmatprep.subr.bf16.mxu0 0
  %215 = vmatpush2.bf16.msra.mxu0 0
  %216 = vmatprep.subr.bf16.mxu0 0
  %217 = vmatpush2.bf16.msra.mxu0 0
  %218 = vmatprep.subr.bf16.mxu0 0
  %219 = vmatpush2.bf16.msra.mxu0 0
  %220 = vmatprep.subr.bf16.mxu0 0
  %221 = vmatpush2.bf16.msra.mxu0 0
  %222 = vmatprep.mubr.bf16.mxu0 0
  %223 = vmatmul.mubr.bf16.gmra.mxu0 %v106
  %v224 = vpop.f32.mrf.mxu0
  %v225 = vadd.f32 %v55, %v224
  %v226 = vpop.f32.mrf.mxu0
  %v227 = vadd.f32 %v59, %v226
  %v228 = vpop.f32.mrf.mxu0
  %v229 = vadd.f32 %v55, %v228
  %v230 = vpop.f32.mrf.mxu0
  %v231 = vadd.f32 %v59, %v230
  %232 = vmatprep.mubr.bf16.mxu0 0
  %233 = vmatmul.mubr.bf16.gmra.mxu0 %v109
  %v234 = vpop.f32.mrf.mxu0
  %v235 = vadd.f32 %v55, %v234
  %v236 = vpop.f32.mrf.mxu0
  %v237 = vadd.f32 %v59, %v236
  %v238 = vpop.f32.mrf.mxu0
  %v239 = vadd.f32 %v55, %v238
  %v240 = vpop.f32.mrf.mxu0
  %v241 = vadd.f32 %v59, %v240
  %242 = vmatprep.mubr.bf16.mxu0 0
  %243 = vmatmul.mubr.bf16.gmra.mxu0 %v112
  %v244 = vpop.f32.mrf.mxu0
  %v245 = vadd.f32 %v55, %v244
  %v246 = vpop.f32.mrf.mxu0
  %v247 = vadd.f32 %v59, %v246
  %v248 = vpop.f32.mrf.mxu0
  %v249 = vadd.f32 %v55, %v248
  %v250 = vpop.f32.mrf.mxu0
  %v251 = vadd.f32 %v59, %v250
  %252 = vmatprep.mubr.bf16.mxu0 0
  %253 = vmatmul.mubr.bf16.gmra.mxu0 %v115
  %v254 = vpop.f32.mrf.mxu0
  %v255 = vadd.f32 %v55, %v254
  %v256 = vpop.f32.mrf.mxu0
  %v257 = vadd.f32 %v59, %v256
  %v258 = vpop.f32.mrf.mxu0
  %v259 = vadd.f32 %v55, %v258
  %v260 = vpop.f32.mrf.mxu0
  %v261 = vadd.f32 %v59, %v260
  %262 = vdwg.mxu0
  %263 = vst [vmem:[#allocation2] sm:$0xff] %v152
  %264 = vst [vmem:[#allocation2 + $0x8] sm:$0xff] %v154
  %265 = vst [vmem:[#allocation2 + $0x10] sm:$0xff] %v225
  %266 = vst [vmem:[#allocation2 + $0x18] sm:$0xff] %v227
  %267 = vst [vmem:[#allocation2 + $0x20] sm:$0xff] %v156
  %268 = vst [vmem:[#allocation2 + $0x28] sm:$0xff] %v158
  %269 = vst [vmem:[#allocation2 + $0x30] sm:$0xff] %v229
  %270 = vst [vmem:[#allocation2 + $0x38] sm:$0xff] %v231
  %271 = vst [vmem:[#allocation2 + $0x40] sm:$0xff] %v162
  %272 = vst [vmem:[#allocation2 + $0x48] sm:$0xff] %v164
  %273 = vst [vmem:[#allocation2 + $0x50] sm:$0xff] %v235
  %274 = vst [vmem:[#allocation2 + $0x58] sm:$0xff] %v237
  %275 = vst [vmem:[#allocation2 + $0x60] sm:$0xff] %v166
  %276 = vst [vmem:[#allocation2 + $0x68] sm:$0xff] %v168
  %277 = vst [vmem:[#allocation2 + $0x70] sm:$0xff] %v239
  %278 = vst [vmem:[#allocation2 + $0x78] sm:$0xff] %v241
  %279 = vst [vmem:[#allocation2 + $0x80] sm:$0xff] %v172
  %280 = vst [vmem:[#allocation2 + $0x88] sm:$0xff] %v174
  %281 = vst [vmem:[#allocation2 + $0x90] sm:$0xff] %v245
  %282 = vst [vmem:[#allocation2 + $0x98] sm:$0xff] %v247
  %283 = vst [vmem:[#allocation2 + $0xa0] sm:$0xff] %v176
  %284 = vst [vmem:[#allocation2 + $0xa8] sm:$0xff] %v178
  %285 = vst [vmem:[#allocation2 + $0xb0] sm:$0xff] %v249
  %286 = vst [vmem:[#allocation2 + $0xb8] sm:$0xff] %v251
  %287 = vst [vmem:[#allocation2 + $0xc0] sm:$0xff] %v182
  %288 = vst [vmem:[#allocation2 + $0xc8] sm:$0xff] %v184
  %289 = vst [vmem:[#allocation2 + $0xd0] sm:$0xff] %v255
  %290 = vst [vmem:[#allocation2 + $0xd8] sm:$0xff] %v257
  %291 = vst [vmem:[#allocation2 + $0xe0] sm:$0xff] %v186
  %292 = vst [vmem:[#allocation2 + $0xe8] sm:$0xff] %v188
  %293 = vst [vmem:[#allocation2 + $0xf0] sm:$0xff] %v259
  %294 = vst [vmem:[#allocation2 + $0xf8] sm:$0xff] %v261
  %s295 = smul.u32 0, 4
  %s296 = smul.addr %s295, 8
  %s297 = scalar_lea.vmem [#allocation2], %s296
  %v298 = vld [vmem:[%s297] sm:$0xff]
  %v299 = vld [vmem:[%s297 + $0x8] sm:$0xff]
  %v300 = vld [vmem:[%s297 + $0x10] sm:$0xff]
  %v301 = vld [vmem:[%s297 + $0x18] sm:$0xff]
  %v302 = vld [vmem:[%s2] sm:$0xff]
  %v303 = vld [vmem:[%s2 + $0x8] sm:$0xff]
  %v304 = vld [vmem:[%s2 + $0x10] sm:$0xff]
  %v305 = vld [vmem:[%s2 + $0x18] sm:$0xff]
  %v306 = vld [vmem:[%s2 + $0x20] sm:$0xff]
  %v307 = vld [vmem:[%s2 + $0x28] sm:$0xff]
  %v308 = vld [vmem:[%s2 + $0x30] sm:$0xff]
  %v309 = vld [vmem:[%s2 + $0x38] sm:$0xff]
  %v310 = vld [vmem:[%s2 + $0x40] sm:$0xff]
  %v311 = vld [vmem:[%s2 + $0x48] sm:$0xff]
  %v312 = vld [vmem:[%s2 + $0x50] sm:$0xff]
  %v313 = vld [vmem:[%s2 + $0x58] sm:$0xff]
  %v314 = vld [vmem:[%s2 + $0x60] sm:$0xff]
  %v315 = vld [vmem:[%s2 + $0x68] sm:$0xff]
  %v316 = vld [vmem:[%s2 + $0x70] sm:$0xff]
  %v317 = vld [vmem:[%s2 + $0x78] sm:$0xff]
  %v318 = vld [vmem:[%s2 + $0x80] sm:$0xff]
  %v319 = vld [vmem:[%s2 + $0x88] sm:$0xff]
  %v320 = vld [vmem:[%s2 + $0x90] sm:$0xff]
  %v321 = vld [vmem:[%s2 + $0x98] sm:$0xff]
  %v322 = vld [vmem:[%s2 + $0xa0] sm:$0xff]
  %v323 = vld [vmem:[%s2 + $0xa8] sm:$0xff]
  %v324 = vld [vmem:[%s2 + $0xb0] sm:$0xff]
  %v325 = vld [vmem:[%s2 + $0xb8] sm:$0xff]
  %v326 = vld [vmem:[%s2 + $0xc0] sm:$0xff]
  %v327 = vld [vmem:[%s2 + $0xc8] sm:$0xff]
  %v328 = vld [vmem:[%s2 + $0xd0] sm:$0xff]
  %v329 = vld [vmem:[%s2 + $0xd8] sm:$0xff]
  %v330 = vld [vmem:[%s2 + $0xe0] sm:$0xff]
  %v331 = vld [vmem:[%s2 + $0xe8] sm:$0xff]
  %v332 = vld [vmem:[%s2 + $0xf0] sm:$0xff]
  %v333 = vld [vmem:[%s2 + $0xf8] sm:$0xff]
  %v366 = vunpack.c.l.b16 %v302
  %v367 = vunpack.c.h.b16 %v302
  %v368 = vunpack.c.l.b16 %v303
  %v369 = vunpack.c.h.b16 %v303
  %v370 = vunpack.c.l.b16 %v304
  %v371 = vunpack.c.h.b16 %v304
  %v372 = vunpack.c.l.b16 %v305
  %v373 = vunpack.c.h.b16 %v305
  %v374 = vunpack.c.l.b16 %v306
  %v375 = vunpack.c.h.b16 %v306
  %v376 = vunpack.c.l.b16 %v307
  %v377 = vunpack.c.h.b16 %v307
  %v378 = vunpack.c.l.b16 %v308
  %v379 = vunpack.c.h.b16 %v308
  %v380 = vunpack.c.l.b16 %v309
  %v381 = vunpack.c.h.b16 %v309
  %v382 = vunpack.c.l.b16 %v310
  %v383 = vunpack.c.h.b16 %v310
  %v384 = vunpack.c.l.b16 %v311
  %v385 = vunpack.c.h.b16 %v311
  %v386 = vunpack.c.l.b16 %v312
  %v387 = vunpack.c.h.b16 %v312
  %v388 = vunpack.c.l.b16 %v313
  %v389 = vunpack.c.h.b16 %v313
  %v390 = vunpack.c.l.b16 %v314
  %v391 = vunpack.c.h.b16 %v314
  %v392 = vunpack.c.l.b16 %v315
  %v393 = vunpack.c.h.b16 %v315
  %v394 = vunpack.c.l.b16 %v316
  %v395 = vunpack.c.h.b16 %v316
  %v396 = vunpack.c.l.b16 %v317
  %v397 = vunpack.c.h.b16 %v317
  %v398 = vunpack.c.l.b16 %v318
  %v399 = vunpack.c.h.b16 %v318
  %v400 = vunpack.c.l.b16 %v319
  %v401 = vunpack.c.h.b16 %v319
  %v402 = vunpack.c.l.b16 %v320
  %v403 = vunpack.c.h.b16 %v320
  %v404 = vunpack.c.l.b16 %v321
  %v405 = vunpack.c.h.b16 %v321
  %v406 = vunpack.c.l.b16 %v322
  %v407 = vunpack.c.h.b16 %v322
  %v408 = vunpack.c.l.b16 %v323
  %v409 = vunpack.c.h.b16 %v323
  %v410 = vunpack.c.l.b16 %v324
  %v411 = vunpack.c.h.b16 %v324
  %v412 = vunpack.c.l.b16 %v325
  %v413 = vunpack.c.h.b16 %v325
  %v414 = vunpack.c.l.b16 %v326
  %v415 = vunpack.c.h.b16 %v326
  %v416 = vunpack.c.l.b16 %v327
  %v417 = vunpack.c.h.b16 %v327
  %v418 = vunpack.c.l.b16 %v328
  %v419 = vunpack.c.h.b16 %v328
  %v420 = vunpack.c.l.b16 %v329
  %v421 = vunpack.c.h.b16 %v329
  %v422 = vunpack.c.l.b16 %v330
  %v423 = vunpack.c.h.b16 %v330
  %v424 = vunpack.c.l.b16 %v331
  %v425 = vunpack.c.h.b16 %v331
  %v426 = vunpack.c.l.b16 %v332
  %v427 = vunpack.c.h.b16 %v332
  %v428 = vunpack.c.l.b16 %v333
  %v429 = vunpack.c.h.b16 %v333
  %v430 = vpack.c.b16 %v370, %v366
  %v431 = vpack.c.b16 %v371, %v367
  %v432 = vpack.c.b16 %v372, %v368
  %v433 = vpack.c.b16 %v373, %v369
  %v434 = vpack.c.b16 %v378, %v374
  %v435 = vpack.c.b16 %v379, %v375
  %v436 = vpack.c.b16 %v380, %v376
  %v437 = vpack.c.b16 %v381, %v377
  %v438 = vpack.c.b16 %v386, %v382
  %v439 = vpack.c.b16 %v387, %v383
  %v440 = vpack.c.b16 %v388, %v384
  %v441 = vpack.c.b16 %v389, %v385
  %v442 = vpack.c.b16 %v394, %v390
  %v443 = vpack.c.b16 %v395, %v391
  %v444 = vpack.c.b16 %v396, %v392
  %v445 = vpack.c.b16 %v397, %v393
  %v446 = vpack.c.b16 %v402, %v398
  %v447 = vpack.c.b16 %v403, %v399
  %v448 = vpack.c.b16 %v404, %v400
  %v449 = vpack.c.b16 %v405, %v401
  %v450 = vpack.c.b16 %v410, %v406
  %v451 = vpack.c.b16 %v411, %v407
  %v452 = vpack.c.b16 %v412, %v408
  %v453 = vpack.c.b16 %v413, %v409
  %v454 = vpack.c.b16 %v418, %v414
  %v455 = vpack.c.b16 %v419, %v415
  %v456 = vpack.c.b16 %v420, %v416
  %v457 = vpack.c.b16 %v421, %v417
  %v458 = vpack.c.b16 %v426, %v422
  %v459 = vpack.c.b16 %v427, %v423
  %v460 = vpack.c.b16 %v428, %v424
  %v461 = vpack.c.b16 %v429, %v425
  %494 = vmatprep.subr.bf16.mxu0 %v459
  %495 = vmatpush1.bf16.msra.mxu0 %v458
  %496 = vmatprep.subr.bf16.mxu0 %v455
  %497 = vmatpush1.bf16.msra.mxu0 %v454
  %498 = vmatprep.subr.bf16.mxu0 %v451
  %499 = vmatpush1.bf16.msra.mxu0 %v450
  %500 = vmatprep.subr.bf16.mxu0 %v447
  %501 = vmatpush1.bf16.msra.mxu0 %v446
  %502 = vmatprep.subr.bf16.mxu0 %v443
  %503 = vmatpush1.bf16.msra.mxu0 %v442
  %504 = vmatprep.subr.bf16.mxu0 %v439
  %505 = vmatpush1.bf16.msra.mxu0 %v438
  %506 = vmatprep.subr.bf16.mxu0 %v435
  %507 = vmatpush1.bf16.msra.mxu0 %v434
  %508 = vmatprep.subr.bf16.mxu0 %v431
  %509 = vmatpush1.bf16.msra.mxu0 %v430
  %510 = vmatprep.subr.bf16.mxu0 0
  %511 = vmatpush2.bf16.msra.mxu0 0
  %512 = vmatprep.subr.bf16.mxu0 0
  %513 = vmatpush2.bf16.msra.mxu0 0
  %514 = vmatprep.subr.bf16.mxu0 0
  %515 = vmatpush2.bf16.msra.mxu0 0
  %516 = vmatprep.subr.bf16.mxu0 0
  %517 = vmatpush2.bf16.msra.mxu0 0
  %518 = vmatprep.subr.bf16.mxu0 0
  %519 = vmatpush2.bf16.msra.mxu0 0
  %520 = vmatprep.subr.bf16.mxu0 0
  %521 = vmatpush2.bf16.msra.mxu0 0
  %522 = vmatprep.subr.bf16.mxu0 0
  %523 = vmatpush2.bf16.msra.mxu0 0
  %524 = vmatprep.subr.bf16.mxu0 0
  %525 = vmatpush2.bf16.msra.mxu0 0
  %526 = vmatprep.mubr.bf16.mxu0 0
  %527 = vmatmul.mubr.bf16.gmra.mxu0 0
  %v528 = vpop.f32.mrf.mxu0
  %v529 = vadd.f32 0.0, %v528
  %v530 = vpop.f32.mrf.mxu0
  %v531 = vadd.f32 0.0, %v530
  %v532 = vpop.f32.mrf.mxu0
  %v533 = vpop.f32.mrf.mxu0
  %534 = vdwg.mxu0
  %535 = vmatprep.subr.bf16.mxu0 %v461
  %536 = vmatpush1.bf16.msra.mxu0 %v460
  %537 = vmatprep.subr.bf16.mxu0 %v457
  %538 = vmatpush1.bf16.msra.mxu0 %v456
  %539 = vmatprep.subr.bf16.mxu0 %v453
  %540 = vmatpush1.bf16.msra.mxu0 %v452
  %541 = vmatprep.subr.bf16.mxu0 %v449
  %542 = vmatpush1.bf16.msra.mxu0 %v448
  %543 = vmatprep.subr.bf16.mxu0 %v445
  %544 = vmatpush1.bf16.msra.mxu0 %v444
  %545 = vmatprep.subr.bf16.mxu0 %v441
  %546 = vmatpush1.bf16.msra.mxu0 %v440
  %547 = vmatprep.subr.bf16.mxu0 %v437
  %548 = vmatpush1.bf16.msra.mxu0 %v436
  %549 = vmatprep.subr.bf16.mxu0 %v433
  %550 = vmatpush1.bf16.msra.mxu0 %v432
  %551 = vmatprep.subr.bf16.mxu0 0
  %552 = vmatpush2.bf16.msra.mxu0 0
  %553 = vmatprep.subr.bf16.mxu0 0
  %554 = vmatpush2.bf16.msra.mxu0 0
  %555 = vmatprep.subr.bf16.mxu0 0
  %556 = vmatpush2.bf16.msra.mxu0 0
  %557 = vmatprep.subr.bf16.mxu0 0
  %558 = vmatpush2.bf16.msra.mxu0 0
  %559 = vmatprep.subr.bf16.mxu0 0
  %560 = vmatpush2.bf16.msra.mxu0 0
  %561 = vmatprep.subr.bf16.mxu0 0
  %562 = vmatpush2.bf16.msra.mxu0 0
  %563 = vmatprep.subr.bf16.mxu0 0
  %564 = vmatpush2.bf16.msra.mxu0 0
  %565 = vmatprep.subr.bf16.mxu0 0
  %566 = vmatpush2.bf16.msra.mxu0 0
  %567 = vmatprep.mubr.bf16.mxu0 0
  %568 = vmatmul.mubr.bf16.gmra.mxu0 0
  %v569 = vpop.f32.mrf.mxu0
  %v570 = vadd.f32 0.0, %v569
  %v571 = vpop.f32.mrf.mxu0
  %v572 = vadd.f32 0.0, %v571
  %v573 = vpop.f32.mrf.mxu0
  %v574 = vpop.f32.mrf.mxu0
  %575 = vdwg.mxu0
  %v576 = vadd.f32 %v298, %v529
  %v577 = vadd.f32 %v299, %v531
  %v578 = vadd.f32 %v300, %v570
  %v579 = vadd.f32 %v301, %v572
  %v580 = vxor.u32 %v576, 2147483648
  %v581 = vmul.f32 %v580, 1.442695
  %v582 = vpow.pop %v581
  %v583 = vadd.f32 %v582, 1.0
  %v584 = vrcp.pop %v583
  %v585 = vmul.f32 1.0, %v584
  %v586 = vxor.u32 %v577, 2147483648
  %v587 = vmul.f32 %v586, 1.442695
  %v588 = vpow.pop %v587
  %v589 = vadd.f32 %v588, 1.0
  %v590 = vrcp.pop %v589
  %v591 = vmul.f32 1.0, %v590
  %v592 = vtanh.pop %v578
  %v593 = vxor.u32 %v579, 2147483648
  %v594 = vmul.f32 %v593, 1.442695
  %v595 = vpow.pop %v594
  %v596 = vadd.f32 %v595, 1.0
  %v597 = vrcp.pop %v596
  %v598 = vmul.f32 1.0, %v597
  %v599 = vmul.f32 %v591, 0.0
  %v600 = vmul.f32 %v585, %v592
  %v601 = vadd.f32 %v599, %v600
  %v602 = vtanh.pop %v601
  %v603 = vmul.f32 %v598, %v602
  %v604 = vpack.c.bf16 %v603, %v603
  %v605 = vpack.c.bf16 0.0, 0.0
  %v606 = vld [vmem:[%s4] sm:$0xff]
  %v607 = vld [vmem:[%s4 + $0x8] sm:$0xff]
  %v608 = vld [vmem:[%s4 + $0x10] sm:$0xff]
  %v609 = vld [vmem:[%s4 + $0x18] sm:$0xff]
  %v610 = vld [vmem:[%s4 + $0x20] sm:$0xff]
  %v611 = vld [vmem:[%s4 + $0x28] sm:$0xff]
  %v612 = vld [vmem:[%s4 + $0x30] sm:$0xff]
  %v613 = vld [vmem:[%s4 + $0x38] sm:$0xff]
  %v614 = vld [vmem:[%s4 + $0x40] sm:$0xff]
  %v615 = vld [vmem:[%s4 + $0x48] sm:$0xff]
  %v616 = vld [vmem:[%s4 + $0x50] sm:$0xff]
  %v617 = vld [vmem:[%s4 + $0x58] sm:$0xff]
  %v618 = vld [vmem:[%s4 + $0x60] sm:$0xff]
  %v619 = vld [vmem:[%s4 + $0x68] sm:$0xff]
  %v620 = vld [vmem:[%s4 + $0x70] sm:$0xff]
  %v621 = vld [vmem:[%s4 + $0x78] sm:$0xff]
  %v622 = vld [vmem:[%s4 + $0x80] sm:$0xff]
  %v623 = vld [vmem:[%s4 + $0x88] sm:$0xff]
  %v624 = vld [vmem:[%s4 + $0x90] sm:$0xff]
  %v625 = vld [vmem:[%s4 + $0x98] sm:$0xff]
  %v626 = vld [vmem:[%s4 + $0xa0] sm:$0xff]
  %v627 = vld [vmem:[%s4 + $0xa8] sm:$0xff]
  %v628 = vld [vmem:[%s4 + $0xb0] sm:$0xff]
  %v629 = vld [vmem:[%s4 + $0xb8] sm:$0xff]
  %v630 = vld [vmem:[%s4 + $0xc0] sm:$0xff]
  %v631 = vld [vmem:[%s4 + $0xc8] sm:$0xff]
  %v632 = vld [vmem:[%s4 + $0xd0] sm:$0xff]
  %v633 = vld [vmem:[%s4 + $0xd8] sm:$0xff]
  %v634 = vld [vmem:[%s4 + $0xe0] sm:$0xff]
  %v635 = vld [vmem:[%s4 + $0xe8] sm:$0xff]
  %v636 = vld [vmem:[%s4 + $0xf0] sm:$0xff]
  %v637 = vld [vmem:[%s4 + $0xf8] sm:$0xff]
  %v638 = vld [vmem:[%s4 + $0x100] sm:$0xff]
  %v639 = vld [vmem:[%s4 + $0x108] sm:$0xff]
  %v640 = vld [vmem:[%s4 + $0x110] sm:$0xff]
  %v641 = vld [vmem:[%s4 + $0x118] sm:$0xff]
  %v642 = vld [vmem:[%s4 + $0x120] sm:$0xff]
  %v643 = vld [vmem:[%s4 + $0x128] sm:$0xff]
  %v644 = vld [vmem:[%s4 + $0x130] sm:$0xff]
  %v645 = vld [vmem:[%s4 + $0x138] sm:$0xff]
  %v646 = vld [vmem:[%s4 + $0x140] sm:$0xff]
  %v647 = vld [vmem:[%s4 + $0x148] sm:$0xff]
  %v648 = vld [vmem:[%s4 + $0x150] sm:$0xff]
  %v649 = vld [vmem:[%s4 + $0x158] sm:$0xff]
  %v650 = vld [vmem:[%s4 + $0x160] sm:$0xff]
  %v651 = vld [vmem:[%s4 + $0x168] sm:$0xff]
  %v652 = vld [vmem:[%s4 + $0x170] sm:$0xff]
  %v653 = vld [vmem:[%s4 + $0x178] sm:$0xff]
  %v654 = vld [vmem:[%s4 + $0x180] sm:$0xff]
  %v655 = vld [vmem:[%s4 + $0x188] sm:$0xff]
  %v656 = vld [vmem:[%s4 + $0x190] sm:$0xff]
  %v657 = vld [vmem:[%s4 + $0x198] sm:$0xff]
  %v658 = vld [vmem:[%s4 + $0x1a0] sm:$0xff]
  %v659 = vld [vmem:[%s4 + $0x1a8] sm:$0xff]
  %v660 = vld [vmem:[%s4 + $0x1b0] sm:$0xff]
  %v661 = vld [vmem:[%s4 + $0x1b8] sm:$0xff]
  %v662 = vld [vmem:[%s4 + $0x1c0] sm:$0xff]
  %v663 = vld [vmem:[%s4 + $0x1c8] sm:$0xff]
  %v664 = vld [vmem:[%s4 + $0x1d0] sm:$0xff]
  %v665 = vld [vmem:[%s4 + $0x1d8] sm:$0xff]
  %v666 = vld [vmem:[%s4 + $0x1e0] sm:$0xff]
  %v667 = vld [vmem:[%s4 + $0x1e8] sm:$0xff]
  %v668 = vld [vmem:[%s4 + $0x1f0] sm:$0xff]
  %v669 = vld [vmem:[%s4 + $0x1f8] sm:$0xff]
  %v670 = vld [vmem:[%s5] sm:$0xf]
  %v672 = vlaneseq
  %v673 = vshrl.u32 %v672, 7
  %v674 = vsub.s32 0, %v673
  %v675 = vrot.slane %v670, %v674
  %v676 = vlaneseq
  %v677 = vshrl.u32 %v676, 7
  %v678 = vsub.s32 1, %v677
  %v679 = vrot.slane %v670, %v678
  %v680 = vlaneseq
  %v681 = vshrl.u32 %v680, 7
  %v682 = vsub.s32 2, %v681
  %v683 = vrot.slane %v670, %v682
  %v684 = vlaneseq
  %v685 = vshrl.u32 %v684, 7
  %v686 = vsub.s32 3, %v685
  %v687 = vrot.slane %v670, %v686
  %v756 = vunpack.c.l.b16 %v606
  %v757 = vunpack.c.h.b16 %v606
  %v758 = vunpack.c.l.b16 %v607
  %v759 = vunpack.c.h.b16 %v607
  %v760 = vunpack.c.l.b16 %v608
  %v761 = vunpack.c.h.b16 %v608
  %v762 = vunpack.c.l.b16 %v609
  %v763 = vunpack.c.h.b16 %v609
  %v764 = vunpack.c.l.b16 %v610
  %v765 = vunpack.c.h.b16 %v610
  %v766 = vunpack.c.l.b16 %v611
  %v767 = vunpack.c.h.b16 %v611
  %v768 = vunpack.c.l.b16 %v612
  %v769 = vunpack.c.h.b16 %v612
  %v770 = vunpack.c.l.b16 %v613
  %v771 = vunpack.c.h.b16 %v613
  %v772 = vunpack.c.l.b16 %v614
  %v773 = vunpack.c.h.b16 %v614
  %v774 = vunpack.c.l.b16 %v615
  %v775 = vunpack.c.h.b16 %v615
  %v776 = vunpack.c.l.b16 %v616
  %v777 = vunpack.c.h.b16 %v616
  %v778 = vunpack.c.l.b16 %v617
  %v779 = vunpack.c.h.b16 %v617
  %v780 = vunpack.c.l.b16 %v618
  %v781 = vunpack.c.h.b16 %v618
  %v782 = vunpack.c.l.b16 %v619
  %v783 = vunpack.c.h.b16 %v619
  %v784 = vunpack.c.l.b16 %v620
  %v785 = vunpack.c.h.b16 %v620
  %v786 = vunpack.c.l.b16 %v621
  %v787 = vunpack.c.h.b16 %v621
  %v788 = vunpack.c.l.b16 %v622
  %v789 = vunpack.c.h.b16 %v622
  %v790 = vunpack.c.l.b16 %v623
  %v791 = vunpack.c.h.b16 %v623
  %v792 = vunpack.c.l.b16 %v624
  %v793 = vunpack.c.h.b16 %v624
  %v794 = vunpack.c.l.b16 %v625
  %v795 = vunpack.c.h.b16 %v625
  %v796 = vunpack.c.l.b16 %v626
  %v797 = vunpack.c.h.b16 %v626
  %v798 = vunpack.c.l.b16 %v627
  %v799 = vunpack.c.h.b16 %v627
  %v800 = vunpack.c.l.b16 %v628
  %v801 = vunpack.c.h.b16 %v628
  %v802 = vunpack.c.l.b16 %v629
  %v803 = vunpack.c.h.b16 %v629
  %v804 = vunpack.c.l.b16 %v630
  %v805 = vunpack.c.h.b16 %v630
  %v806 = vunpack.c.l.b16 %v631
  %v807 = vunpack.c.h.b16 %v631
  %v808 = vunpack.c.l.b16 %v632
  %v809 = vunpack.c.h.b16 %v632
  %v810 = vunpack.c.l.b16 %v633
  %v811 = vunpack.c.h.b16 %v633
  %v812 = vunpack.c.l.b16 %v634
  %v813 = vunpack.c.h.b16 %v634
  %v814 = vunpack.c.l.b16 %v635
  %v815 = vunpack.c.h.b16 %v635
  %v816 = vunpack.c.l.b16 %v636
  %v817 = vunpack.c.h.b16 %v636
  %v818 = vunpack.c.l.b16 %v637
  %v819 = vunpack.c.h.b16 %v637
  %v820 = vunpack.c.l.b16 %v638
  %v821 = vunpack.c.h.b16 %v638
  %v822 = vunpack.c.l.b16 %v639
  %v823 = vunpack.c.h.b16 %v639
  %v824 = vunpack.c.l.b16 %v640
  %v825 = vunpack.c.h.b16 %v640
  %v826 = vunpack.c.l.b16 %v641
  %v827 = vunpack.c.h.b16 %v641
  %v828 = vunpack.c.l.b16 %v642
  %v829 = vunpack.c.h.b16 %v642
  %v830 = vunpack.c.l.b16 %v643
  %v831 = vunpack.c.h.b16 %v643
  %v832 = vunpack.c.l.b16 %v644
  %v833 = vunpack.c.h.b16 %v644
  %v834 = vunpack.c.l.b16 %v645
  %v835 = vunpack.c.h.b16 %v645
  %v836 = vunpack.c.l.b16 %v646
  %v837 = vunpack.c.h.b16 %v646
  %v838 = vunpack.c.l.b16 %v647
  %v839 = vunpack.c.h.b16 %v647
  %v840 = vunpack.c.l.b16 %v648
  %v841 = vunpack.c.h.b16 %v648
  %v842 = vunpack.c.l.b16 %v649
  %v843 = vunpack.c.h.b16 %v649
  %v844 = vunpack.c.l.b16 %v650
  %v845 = vunpack.c.h.b16 %v650
  %v846 = vunpack.c.l.b16 %v651
  %v847 = vunpack.c.h.b16 %v651
  %v848 = vunpack.c.l.b16 %v652
  %v849 = vunpack.c.h.b16 %v652
  %v850 = vunpack.c.l.b16 %v653
  %v851 = vunpack.c.h.b16 %v653
  %v852 = vunpack.c.l.b16 %v654
  %v853 = vunpack.c.h.b16 %v654
  %v854 = vunpack.c.l.b16 %v655
  %v855 = vunpack.c.h.b16 %v655
  %v856 = vunpack.c.l.b16 %v656
  %v857 = vunpack.c.h.b16 %v656
  %v858 = vunpack.c.l.b16 %v657
  %v859 = vunpack.c.h.b16 %v657
  %v860 = vunpack.c.l.b16 %v658
  %v861 = vunpack.c.h.b16 %v658
  %v862 = vunpack.c.l.b16 %v659
  %v863 = vunpack.c.h.b16 %v659
  %v864 = vunpack.c.l.b16 %v660
  %v865 = vunpack.c.h.b16 %v660
  %v866 = vunpack.c.l.b16 %v661
  %v867 = vunpack.c.h.b16 %v661
  %v868 = vunpack.c.l.b16 %v662
  %v869 = vunpack.c.h.b16 %v662
  %v870 = vunpack.c.l.b16 %v663
  %v871 = vunpack.c.h.b16 %v663
  %v872 = vunpack.c.l.b16 %v664
  %v873 = vunpack.c.h.b16 %v664
  %v874 = vunpack.c.l.b16 %v665
  %v875 = vunpack.c.h.b16 %v665
  %v876 = vunpack.c.l.b16 %v666
  %v877 = vunpack.c.h.b16 %v666
  %v878 = vunpack.c.l.b16 %v667
  %v879 = vunpack.c.h.b16 %v667
  %v880 = vunpack.c.l.b16 %v668
  %v881 = vunpack.c.h.b16 %v668
  %v882 = vunpack.c.l.b16 %v669
  %v883 = vunpack.c.h.b16 %v669
  %v884 = vpack.c.b16 %v760, %v756
  %v885 = vpack.c.b16 %v761, %v757
  %v886 = vpack.c.b16 %v762, %v758
  %v887 = vpack.c.b16 %v763, %v759
  %v888 = vpack.c.b16 %v768, %v764
  %v889 = vpack.c.b16 %v769, %v765
  %v890 = vpack.c.b16 %v770, %v766
  %v891 = vpack.c.b16 %v771, %v767
  %v892 = vpack.c.b16 %v776, %v772
  %v893 = vpack.c.b16 %v777, %v773
  %v894 = vpack.c.b16 %v778, %v774
  %v895 = vpack.c.b16 %v779, %v775
  %v896 = vpack.c.b16 %v784, %v780
  %v897 = vpack.c.b16 %v785, %v781
  %v898 = vpack.c.b16 %v786, %v782
  %v899 = vpack.c.b16 %v787, %v783
  %v900 = vpack.c.b16 %v792, %v788
  %v901 = vpack.c.b16 %v793, %v789
  %v902 = vpack.c.b16 %v794, %v790
  %v903 = vpack.c.b16 %v795, %v791
  %v904 = vpack.c.b16 %v800, %v796
  %v905 = vpack.c.b16 %v801, %v797
  %v906 = vpack.c.b16 %v802, %v798
  %v907 = vpack.c.b16 %v803, %v799
  %v908 = vpack.c.b16 %v808, %v804
  %v909 = vpack.c.b16 %v809, %v805
  %v910 = vpack.c.b16 %v810, %v806
  %v911 = vpack.c.b16 %v811, %v807
  %v912 = vpack.c.b16 %v816, %v812
  %v913 = vpack.c.b16 %v817, %v813
  %v914 = vpack.c.b16 %v818, %v814
  %v915 = vpack.c.b16 %v819, %v815
  %v916 = vpack.c.b16 %v824, %v820
  %v917 = vpack.c.b16 %v825, %v821
  %v918 = vpack.c.b16 %v826, %v822
  %v919 = vpack.c.b16 %v827, %v823
  %v920 = vpack.c.b16 %v832, %v828
  %v921 = vpack.c.b16 %v833, %v829
  %v922 = vpack.c.b16 %v834, %v830
  %v923 = vpack.c.b16 %v835, %v831
  %v924 = vpack.c.b16 %v840, %v836
  %v925 = vpack.c.b16 %v841, %v837
  %v926 = vpack.c.b16 %v842, %v838
  %v927 = vpack.c.b16 %v843, %v839
  %v928 = vpack.c.b16 %v848, %v844
  %v929 = vpack.c.b16 %v849, %v845
  %v930 = vpack.c.b16 %v850, %v846
  %v931 = vpack.c.b16 %v851, %v847
  %v932 = vpack.c.b16 %v856, %v852
  %v933 = vpack.c.b16 %v857, %v853
  %v934 = vpack.c.b16 %v858, %v854
  %v935 = vpack.c.b16 %v859, %v855
  %v936 = vpack.c.b16 %v864, %v860
  %v937 = vpack.c.b16 %v865, %v861
  %v938 = vpack.c.b16 %v866, %v862
  %v939 = vpack.c.b16 %v867, %v863
  %v940 = vpack.c.b16 %v872, %v868
  %v941 = vpack.c.b16 %v873, %v869
  %v942 = vpack.c.b16 %v874, %v870
  %v943 = vpack.c.b16 %v875, %v871
  %v944 = vpack.c.b16 %v880, %v876
  %v945 = vpack.c.b16 %v881, %v877
  %v946 = vpack.c.b16 %v882, %v878
  %v947 = vpack.c.b16 %v883, %v879
  %1012 = vmatprep.subr.bf16.mxu0 %v913
  %1013 = vmatpush1.bf16.msra.mxu0 %v912
  %1014 = vmatprep.subr.bf16.mxu0 %v909
  %1015 = vmatpush1.bf16.msra.mxu0 %v908
  %1016 = vmatprep.subr.bf16.mxu0 %v905
  %1017 = vmatpush1.bf16.msra.mxu0 %v904
  %1018 = vmatprep.subr.bf16.mxu0 %v901
  %1019 = vmatpush1.bf16.msra.mxu0 %v900
  %1020 = vmatprep.subr.bf16.mxu0 %v897
  %1021 = vmatpush1.bf16.msra.mxu0 %v896
  %1022 = vmatprep.subr.bf16.mxu0 %v893
  %1023 = vmatpush1.bf16.msra.mxu0 %v892
  %1024 = vmatprep.subr.bf16.mxu0 %v889
  %1025 = vmatpush1.bf16.msra.mxu0 %v888
  %1026 = vmatprep.subr.bf16.mxu0 %v885
  %1027 = vmatpush1.bf16.msra.mxu0 %v884
  %1028 = vmatprep.subr.bf16.mxu0 %v945
  %1029 = vmatpush2.bf16.msra.mxu0 %v944
  %1030 = vmatprep.subr.bf16.mxu0 %v941
  %1031 = vmatpush2.bf16.msra.mxu0 %v940
  %1032 = vmatprep.subr.bf16.mxu0 %v937
  %1033 = vmatpush2.bf16.msra.mxu0 %v936
  %1034 = vmatprep.subr.bf16.mxu0 %v933
  %1035 = vmatpush2.bf16.msra.mxu0 %v932
  %1036 = vmatprep.subr.bf16.mxu0 %v929
  %1037 = vmatpush2.bf16.msra.mxu0 %v928
  %1038 = vmatprep.subr.bf16.mxu0 %v925
  %1039 = vmatpush2.bf16.msra.mxu0 %v924
  %1040 = vmatprep.subr.bf16.mxu0 %v921
  %1041 = vmatpush2.bf16.msra.mxu0 %v920
  %1042 = vmatprep.subr.bf16.mxu0 %v917
  %1043 = vmatpush2.bf16.msra.mxu0 %v916
  %1044 = vmatprep.mubr.bf16.mxu0 %v605
  %1045 = vmatmul.mubr.bf16.gmra.mxu0 %v604
  %v1046 = vpop.f32.mrf.mxu0
  %v1047 = vadd.f32 %v675, %v1046
  %v1048 = vpop.f32.mrf.mxu0
  %v1049 = vadd.f32 %v679, %v1048
  %v1050 = vpop.f32.mrf.mxu0
  %v1051 = vpop.f32.mrf.mxu0
  %1052 = vdwg.mxu0
  %1053 = vmatprep.subr.bf16.mxu0 %v915
  %1054 = vmatpush1.bf16.msra.mxu0 %v914
  %1055 = vmatprep.subr.bf16.mxu0 %v911
  %1056 = vmatpush1.bf16.msra.mxu0 %v910
  %1057 = vmatprep.subr.bf16.mxu0 %v907
  %1058 = vmatpush1.bf16.msra.mxu0 %v906
  %1059 = vmatprep.subr.bf16.mxu0 %v903
  %1060 = vmatpush1.bf16.msra.mxu0 %v902
  %1061 = vmatprep.subr.bf16.mxu0 %v899
  %1062 = vmatpush1.bf16.msra.mxu0 %v898
  %1063 = vmatprep.subr.bf16.mxu0 %v895
  %1064 = vmatpush1.bf16.msra.mxu0 %v894
  %1065 = vmatprep.subr.bf16.mxu0 %v891
  %1066 = vmatpush1.bf16.msra.mxu0 %v890
  %1067 = vmatprep.subr.bf16.mxu0 %v887
  %1068 = vmatpush1.bf16.msra.mxu0 %v886
  %1069 = vmatprep.subr.bf16.mxu0 %v947
  %1070 = vmatpush2.bf16.msra.mxu0 %v946
  %1071 = vmatprep.subr.bf16.mxu0 %v943
  %1072 = vmatpush2.bf16.msra.mxu0 %v942
  %1073 = vmatprep.subr.bf16.mxu0 %v939
  %1074 = vmatpush2.bf16.msra.mxu0 %v938
  %1075 = vmatprep.subr.bf16.mxu0 %v935
  %1076 = vmatpush2.bf16.msra.mxu0 %v934
  %1077 = vmatprep.subr.bf16.mxu0 %v931
  %1078 = vmatpush2.bf16.msra.mxu0 %v930
  %1079 = vmatprep.subr.bf16.mxu0 %v927
  %1080 = vmatpush2.bf16.msra.mxu0 %v926
  %1081 = vmatprep.subr.bf16.mxu0 %v923
  %1082 = vmatpush2.bf16.msra.mxu0 %v922
  %1083 = vmatprep.subr.bf16.mxu0 %v919
  %1084 = vmatpush2.bf16.msra.mxu0 %v918
  %1085 = vmatprep.mubr.bf16.mxu0 %v605
  %1086 = vmatmul.mubr.bf16.gmra.mxu0 %v604
  %v1087 = vpop.f32.mrf.mxu0
  %v1088 = vadd.f32 %v683, %v1087
  %v1089 = vpop.f32.mrf.mxu0
  %v1090 = vadd.f32 %v687, %v1089
  %v1091 = vpop.f32.mrf.mxu0
  %v1092 = vpop.f32.mrf.mxu0
  %1093 = vdwg.mxu0
  %v1094 = vxor.u32 %v1047, 2147483648
  %v1095 = vmul.f32 %v1094, 1.442695
  %v1096 = vpow.pop %v1095
  %v1097 = vadd.f32 %v1096, 1.0
  %v1098 = vrcp.pop %v1097
  %v1099 = vmul.f32 1.0, %v1098
  %v1100 = vxor.u32 %v1049, 2147483648
  %v1101 = vmul.f32 %v1100, 1.442695
  %v1102 = vpow.pop %v1101
  %v1103 = vadd.f32 %v1102, 1.0
  %v1104 = vrcp.pop %v1103
  %v1105 = vmul.f32 1.0, %v1104
  %v1106 = vtanh.pop %v1088
  %v1107 = vxor.u32 %v1090, 2147483648
  %v1108 = vmul.f32 %v1107, 1.442695
  %v1109 = vpow.pop %v1108
  %v1110 = vadd.f32 %v1109, 1.0
  %v1111 = vrcp.pop %v1110
  %v1112 = vmul.f32 1.0, %v1111
  %v1113 = vmul.f32 %v1105, 0.0
  %v1114 = vmul.f32 %v1099, %v1106
  %v1115 = vadd.f32 %v1113, %v1114
  %v1116 = vtanh.pop %v1115
  %v1117 = vmul.f32 %v1112, %v1116
  %s1118 = smul.u32 1, 4
  %s1119 = smul.addr %s1118, 8
  %s1120 = scalar_lea.vmem [#allocation2], %s1119
  %v1121 = vld [vmem:[%s1120] sm:$0xff]
  %v1122 = vld [vmem:[%s1120 + $0x8] sm:$0xff]
  %v1123 = vld [vmem:[%s1120 + $0x10] sm:$0xff]
  %v1124 = vld [vmem:[%s1120 + $0x18] sm:$0xff]
  %1125 = vmatprep.subr.bf16.mxu0 %v459
  %1126 = vmatpush1.bf16.msra.mxu0 %v458
  %1127 = vmatprep.subr.bf16.mxu0 %v455
  %1128 = vmatpush1.bf16.msra.mxu0 %v454
  %1129 = vmatprep.subr.bf16.mxu0 %v451
  %1130 = vmatpush1.bf16.msra.mxu0 %v450
  %1131 = vmatprep.subr.bf16.mxu0 %v447
  %1132 = vmatpush1.bf16.msra.mxu0 %v446
  %1133 = vmatprep.subr.bf16.mxu0 %v443
  %1134 = vmatpush1.bf16.msra.mxu0 %v442
  %1135 = vmatprep.subr.bf16.mxu0 %v439
  %1136 = vmatpush1.bf16.msra.mxu0 %v438
  %1137 = vmatprep.subr.bf16.mxu0 %v435
  %1138 = vmatpush1.bf16.msra.mxu0 %v434
  %1139 = vmatprep.subr.bf16.mxu0 %v431
  %1140 = vmatpush1.bf16.msra.mxu0 %v430
  %1141 = vmatprep.subr.bf16.mxu0 0
  %1142 = vmatpush2.bf16.msra.mxu0 0
  %1143 = vmatprep.subr.bf16.mxu0 0
  %1144 = vmatpush2.bf16.msra.mxu0 0
  %1145 = vmatprep.subr.bf16.mxu0 0
  %1146 = vmatpush2.bf16.msra.mxu0 0
  %1147 = vmatprep.subr.bf16.mxu0 0
  %1148 = vmatpush2.bf16.msra.mxu0 0
  %1149 = vmatprep.subr.bf16.mxu0 0
  %1150 = vmatpush2.bf16.msra.mxu0 0
  %1151 = vmatprep.subr.bf16.mxu0 0
  %1152 = vmatpush2.bf16.msra.mxu0 0
  %1153 = vmatprep.subr.bf16.mxu0 0
  %1154 = vmatpush2.bf16.msra.mxu0 0
  %1155 = vmatprep.subr.bf16.mxu0 0
  %1156 = vmatpush2.bf16.msra.mxu0 0
  %1157 = vmatprep.mubr.bf16.mxu0 0
  %1158 = vmatmul.mubr.bf16.gmra.mxu0 %v604
  %v1159 = vpop.f32.mrf.mxu0
  %v1160 = vadd.f32 0.0, %v1159
  %v1161 = vpop.f32.mrf.mxu0
  %v1162 = vadd.f32 0.0, %v1161
  %v1163 = vpop.f32.mrf.mxu0
  %v1164 = vpop.f32.mrf.mxu0
  %1165 = vdwg.mxu0
  %1166 = vmatprep.subr.bf16.mxu0 %v461
  %1167 = vmatpush1.bf16.msra.mxu0 %v460
  %1168 = vmatprep.subr.bf16.mxu0 %v457
  %1169 = vmatpush1.bf16.msra.mxu0 %v456
  %1170 = vmatprep.subr.bf16.mxu0 %v453
  %1171 = vmatpush1.bf16.msra.mxu0 %v452
  %1172 = vmatprep.subr.bf16.mxu0 %v449
  %1173 = vmatpush1.bf16.msra.mxu0 %v448
  %1174 = vmatprep.subr.bf16.mxu0 %v445
  %1175 = vmatpush1.bf16.msra.mxu0 %v444
  %1176 = vmatprep.subr.bf16.mxu0 %v441
  %1177 = vmatpush1.bf16.msra.mxu0 %v440
  %1178 = vmatprep.subr.bf16.mxu0 %v437
  %1179 = vmatpush1.bf16.msra.mxu0 %v436
  %1180 = vmatprep.subr.bf16.mxu0 %v433
  %1181 = vmatpush1.bf16.msra.mxu0 %v432
  %1182 = vmatprep.subr.bf16.mxu0 0
  %1183 = vmatpush2.bf16.msra.mxu0 0
  %1184 = vmatprep.subr.bf16.mxu0 0
  %1185 = vmatpush2.bf16.msra.mxu0 0
  %1186 = vmatprep.subr.bf16.mxu0 0
  %1187 = vmatpush2.bf16.msra.mxu0 0
  %1188 = vmatprep.subr.bf16.mxu0 0
  %1189 = vmatpush2.bf16.msra.mxu0 0
  %1190 = vmatprep.subr.bf16.mxu0 0
  %1191 = vmatpush2.bf16.msra.mxu0 0
  %1192 = vmatprep.subr.bf16.mxu0 0
  %1193 = vmatpush2.bf16.msra.mxu0 0
  %1194 = vmatprep.subr.bf16.mxu0 0
  %1195 = vmatpush2.bf16.msra.mxu0 0
  %1196 = vmatprep.subr.bf16.mxu0 0
  %1197 = vmatpush2.bf16.msra.mxu0 0
  %1198 = vmatprep.mubr.bf16.mxu0 0
  %1199 = vmatmul.mubr.bf16.gmra.mxu0 %v604
  %v1200 = vpop.f32.mrf.mxu0
  %v1201 = vadd.f32 0.0, %v1200
  %v1202 = vpop.f32.mrf.mxu0
  %v1203 = vadd.f32 0.0, %v1202
  %v1204 = vpop.f32.mrf.mxu0
  %v1205 = vpop.f32.mrf.mxu0
  %1206 = vdwg.mxu0
  %v1207 = vadd.f32 %v1121, %v1160
  %v1208 = vadd.f32 %v1122, %v1162
  %v1209 = vadd.f32 %v1123, %v1201
  %v1210 = vadd.f32 %v1124, %v1203
  %v1211 = vxor.u32 %v1207, 2147483648
  %v1212 = vmul.f32 %v1211, 1.442695
  %v1213 = vpow.pop %v1212
  %v1214 = vadd.f32 %v1213, 1.0
  %v1215 = vrcp.pop %v1214
  %v1216 = vmul.f32 1.0, %v1215
  %v1217 = vxor.u32 %v1208, 2147483648
  %v1218 = vmul.f32 %v1217, 1.442695
  %v1219 = vpow.pop %v1218
  %v1220 = vadd.f32 %v1219, 1.0
  %v1221 = vrcp.pop %v1220
  %v1222 = vmul.f32 1.0, %v1221
  %v1223 = vtanh.pop %v1209
  %v1224 = vxor.u32 %v1210, 2147483648
  %v1225 = vmul.f32 %v1224, 1.442695
  %v1226 = vpow.pop %v1225
  %v1227 = vadd.f32 %v1226, 1.0
  %v1228 = vrcp.pop %v1227
  %v1229 = vmul.f32 1.0, %v1228
  %v1230 = vmul.f32 %v1222, %v601
  %v1231 = vmul.f32 %v1216, %v1223
  %v1232 = vadd.f32 %v1230, %v1231
  %v1233 = vtanh.pop %v1232
  %v1234 = vmul.f32 %v1229, %v1233
  %v1235 = vpack.c.bf16 %v1234, %v1234
  %v1236 = vpack.c.bf16 %v1117, %v1117
  %1237 = vmatprep.subr.bf16.mxu0 %v913
  %1238 = vmatpush1.bf16.msra.mxu0 %v912
  %1239 = vmatprep.subr.bf16.mxu0 %v909
  %1240 = vmatpush1.bf16.msra.mxu0 %v908
  %1241 = vmatprep.subr.bf16.mxu0 %v905
  %1242 = vmatpush1.bf16.msra.mxu0 %v904
  %1243 = vmatprep.subr.bf16.mxu0 %v901
  %1244 = vmatpush1.bf16.msra.mxu0 %v900
  %1245 = vmatprep.subr.bf16.mxu0 %v897
  %1246 = vmatpush1.bf16.msra.mxu0 %v896
  %1247 = vmatprep.subr.bf16.mxu0 %v893
  %1248 = vmatpush1.bf16.msra.mxu0 %v892
  %1249 = vmatprep.subr.bf16.mxu0 %v889
  %1250 = vmatpush1.bf16.msra.mxu0 %v888
  %1251 = vmatprep.subr.bf16.mxu0 %v885
  %1252 = vmatpush1.bf16.msra.mxu0 %v884
  %1253 = vmatprep.subr.bf16.mxu0 %v945
  %1254 = vmatpush2.bf16.msra.mxu0 %v944
  %1255 = vmatprep.subr.bf16.mxu0 %v941
  %1256 = vmatpush2.bf16.msra.mxu0 %v940
  %1257 = vmatprep.subr.bf16.mxu0 %v937
  %1258 = vmatpush2.bf16.msra.mxu0 %v936
  %1259 = vmatprep.subr.bf16.mxu0 %v933
  %1260 = vmatpush2.bf16.msra.mxu0 %v932
  %1261 = vmatprep.subr.bf16.mxu0 %v929
  %1262 = vmatpush2.bf16.msra.mxu0 %v928
  %1263 = vmatprep.subr.bf16.mxu0 %v925
  %1264 = vmatpush2.bf16.msra.mxu0 %v924
  %1265 = vmatprep.subr.bf16.mxu0 %v921
  %1266 = vmatpush2.bf16.msra.mxu0 %v920
  %1267 = vmatprep.subr.bf16.mxu0 %v917
  %1268 = vmatpush2.bf16.msra.mxu0 %v916
  %1269 = vmatprep.mubr.bf16.mxu0 %v1236
  %1270 = vmatmul.mubr.bf16.gmra.mxu0 %v1235
  %v1271 = vpop.f32.mrf.mxu0
  %v1272 = vadd.f32 %v675, %v1271
  %v1273 = vpop.f32.mrf.mxu0
  %v1274 = vadd.f32 %v679, %v1273
  %v1275 = vpop.f32.mrf.mxu0
  %v1276 = vpop.f32.mrf.mxu0
  %1277 = vdwg.mxu0
  %1278 = vmatprep.subr.bf16.mxu0 %v915
  %1279 = vmatpush1.bf16.msra.mxu0 %v914
  %1280 = vmatprep.subr.bf16.mxu0 %v911
  %1281 = vmatpush1.bf16.msra.mxu0 %v910
  %1282 = vmatprep.subr.bf16.mxu0 %v907
  %1283 = vmatpush1.bf16.msra.mxu0 %v906
  %1284 = vmatprep.subr.bf16.mxu0 %v903
  %1285 = vmatpush1.bf16.msra.mxu0 %v902
  %1286 = vmatprep.subr.bf16.mxu0 %v899
  %1287 = vmatpush1.bf16.msra.mxu0 %v898
  %1288 = vmatprep.subr.bf16.mxu0 %v895
  %1289 = vmatpush1.bf16.msra.mxu0 %v894
  %1290 = vmatprep.subr.bf16.mxu0 %v891
  %1291 = vmatpush1.bf16.msra.mxu0 %v890
  %1292 = vmatprep.subr.bf16.mxu0 %v887
  %1293 = vmatpush1.bf16.msra.mxu0 %v886
  %1294 = vmatprep.subr.bf16.mxu0 %v947
  %1295 = vmatpush2.bf16.msra.mxu0 %v946
  %1296 = vmatprep.subr.bf16.mxu0 %v943
  %1297 = vmatpush2.bf16.msra.mxu0 %v942
  %1298 = vmatprep.subr.bf16.mxu0 %v939
  %1299 = vmatpush2.bf16.msra.mxu0 %v938
  %1300 = vmatprep.subr.bf16.mxu0 %v935
  %1301 = vmatpush2.bf16.msra.mxu0 %v934
  %1302 = vmatprep.subr.bf16.mxu0 %v931
  %1303 = vmatpush2.bf16.msra.mxu0 %v930
  %1304 = vmatprep.subr.bf16.mxu0 %v927
  %1305 = vmatpush2.bf16.msra.mxu0 %v926
  %1306 = vmatprep.subr.bf16.mxu0 %v923
  %1307 = vmatpush2.bf16.msra.mxu0 %v922
  %1308 = vmatprep.subr.bf16.mxu0 %v919
  %1309 = vmatpush2.bf16.msra.mxu0 %v918
  %1310 = vmatprep.mubr.bf16.mxu0 %v1236
  %1311 = vmatmul.mubr.bf16.gmra.mxu0 %v1235
  %v1312 = vpop.f32.mrf.mxu0
  %v1313 = vadd.f32 %v683, %v1312
  %v1314 = vpop.f32.mrf.mxu0
  %v1315 = vadd.f32 %v687, %v1314
  %v1316 = vpop.f32.mrf.mxu0
  %v1317 = vpop.f32.mrf.mxu0
  %1318 = vdwg.mxu0
  %v1319 = vxor.u32 %v1272, 2147483648
  %v1320 = vmul.f32 %v1319, 1.442695
  %v1321 = vpow.pop %v1320
  %v1322 = vadd.f32 %v1321, 1.0
  %v1323 = vrcp.pop %v1322
  %v1324 = vmul.f32 1.0, %v1323
  %v1325 = vxor.u32 %v1274, 2147483648
  %v1326 = vmul.f32 %v1325, 1.442695
  %v1327 = vpow.pop %v1326
  %v1328 = vadd.f32 %v1327, 1.0
  %v1329 = vrcp.pop %v1328
  %v1330 = vmul.f32 1.0, %v1329
  %v1331 = vtanh.pop %v1313
  %v1332 = vxor.u32 %v1315, 2147483648
  %v1333 = vmul.f32 %v1332, 1.442695
  %v1334 = vpow.pop %v1333
  %v1335 = vadd.f32 %v1334, 1.0
  %v1336 = vrcp.pop %v1335
  %v1337 = vmul.f32 1.0, %v1336
  %v1338 = vmul.f32 %v1330, %v1115
  %v1339 = vmul.f32 %v1324, %v1331
  %v1340 = vadd.f32 %v1338, %v1339
  %v1341 = vtanh.pop %v1340
  %v1342 = vmul.f32 %v1337, %v1341
  %s1343 = smul.u32 2, 4
  %s1344 = smul.addr %s1343, 8
  %s1345 = scalar_lea.vmem [#allocation2], %s1344
  %v1346 = vld [vmem:[%s1345] sm:$0xff]
  %v1347 = vld [vmem:[%s1345 + $0x8] sm:$0xff]
  %v1348 = vld [vmem:[%s1345 + $0x10] sm:$0xff]
  %v1349 = vld [vmem:[%s1345 + $0x18] sm:$0xff]
  %1350 = vmatprep.subr.bf16.mxu0 %v459
  %1351 = vmatpush1.bf16.msra.mxu0 %v458
  %1352 = vmatprep.subr.bf16.mxu0 %v455
  %1353 = vmatpush1.bf16.msra.mxu0 %v454
  %1354 = vmatprep.subr.bf16.mxu0 %v451
  %1355 = vmatpush1.bf16.msra.mxu0 %v450
  %1356 = vmatprep.subr.bf16.mxu0 %v447
  %1357 = vmatpush1.bf16.msra.mxu0 %v446
  %1358 = vmatprep.subr.bf16.mxu0 %v443
  %1359 = vmatpush1.bf16.msra.mxu0 %v442
  %1360 = vmatprep.subr.bf16.mxu0 %v439
  %1361 = vmatpush1.bf16.msra.mxu0 %v438
  %1362 = vmatprep.subr.bf16.mxu0 %v435
  %1363 = vmatpush1.bf16.msra.mxu0 %v434
  %1364 = vmatprep.subr.bf16.mxu0 %v431
  %1365 = vmatpush1.bf16.msra.mxu0 %v430
  %1366 = vmatprep.subr.bf16.mxu0 0
  %1367 = vmatpush2.bf16.msra.mxu0 0
  %1368 = vmatprep.subr.bf16.mxu0 0
  %1369 = vmatpush2.bf16.msra.mxu0 0
  %1370 = vmatprep.subr.bf16.mxu0 0
  %1371 = vmatpush2.bf16.msra.mxu0 0
  %1372 = vmatprep.subr.bf16.mxu0 0
  %1373 = vmatpush2.bf16.msra.mxu0 0
  %1374 = vmatprep.subr.bf16.mxu0 0
  %1375 = vmatpush2.bf16.msra.mxu0 0
  %1376 = vmatprep.subr.bf16.mxu0 0
  %1377 = vmatpush2.bf16.msra.mxu0 0
  %1378 = vmatprep.subr.bf16.mxu0 0
  %1379 = vmatpush2.bf16.msra.mxu0 0
  %1380 = vmatprep.subr.bf16.mxu0 0
  %1381 = vmatpush2.bf16.msra.mxu0 0
  %1382 = vmatprep.mubr.bf16.mxu0 0
  %1383 = vmatmul.mubr.bf16.gmra.mxu0 %v1235
  %v1384 = vpop.f32.mrf.mxu0
  %v1385 = vadd.f32 0.0, %v1384
  %v1386 = vpop.f32.mrf.mxu0
  %v1387 = vadd.f32 0.0, %v1386
  %v1388 = vpop.f32.mrf.mxu0
  %v1389 = vpop.f32.mrf.mxu0
  %1390 = vdwg.mxu0
  %1391 = vmatprep.subr.bf16.mxu0 %v461
  %1392 = vmatpush1.bf16.msra.mxu0 %v460
  %1393 = vmatprep.subr.bf16.mxu0 %v457
  %1394 = vmatpush1.bf16.msra.mxu0 %v456
  %1395 = vmatprep.subr.bf16.mxu0 %v453
  %1396 = vmatpush1.bf16.msra.mxu0 %v452
  %1397 = vmatprep.subr.bf16.mxu0 %v449
  %1398 = vmatpush1.bf16.msra.mxu0 %v448
  %1399 = vmatprep.subr.bf16.mxu0 %v445
  %1400 = vmatpush1.bf16.msra.mxu0 %v444
  %1401 = vmatprep.subr.bf16.mxu0 %v441
  %1402 = vmatpush1.bf16.msra.mxu0 %v440
  %1403 = vmatprep.subr.bf16.mxu0 %v437
  %1404 = vmatpush1.bf16.msra.mxu0 %v436
  %1405 = vmatprep.subr.bf16.mxu0 %v433
  %1406 = vmatpush1.bf16.msra.mxu0 %v432
  %1407 = vmatprep.subr.bf16.mxu0 0
  %1408 = vmatpush2.bf16.msra.mxu0 0
  %1409 = vmatprep.subr.bf16.mxu0 0
  %1410 = vmatpush2.bf16.msra.mxu0 0
  %1411 = vmatprep.subr.bf16.mxu0 0
  %1412 = vmatpush2.bf16.msra.mxu0 0
  %1413 = vmatprep.subr.bf16.mxu0 0
  %1414 = vmatpush2.bf16.msra.mxu0 0
  %1415 = vmatprep.subr.bf16.mxu0 0
  %1416 = vmatpush2.bf16.msra.mxu0 0
  %1417 = vmatprep.subr.bf16.mxu0 0
  %1418 = vmatpush2.bf16.msra.mxu0 0
  %1419 = vmatprep.subr.bf16.mxu0 0
  %1420 = vmatpush2.bf16.msra.mxu0 0
  %1421 = vmatprep.subr.bf16.mxu0 0
  %1422 = vmatpush2.bf16.msra.mxu0 0
  %1423 = vmatprep.mubr.bf16.mxu0 0
  %1424 = vmatmul.mubr.bf16.gmra.mxu0 %v1235
  %v1425 = vpop.f32.mrf.mxu0
  %v1426 = vadd.f32 0.0, %v1425
  %v1427 = vpop.f32.mrf.mxu0
  %v1428 = vadd.f32 0.0, %v1427
  %v1429 = vpop.f32.mrf.mxu0
  %v1430 = vpop.f32.mrf.mxu0
  %1431 = vdwg.mxu0
  %v1432 = vadd.f32 %v1346, %v1385
  %v1433 = vadd.f32 %v1347, %v1387
  %v1434 = vadd.f32 %v1348, %v1426
  %v1435 = vadd.f32 %v1349, %v1428
  %v1436 = vxor.u32 %v1432, 2147483648
  %v1437 = vmul.f32 %v1436, 1.442695
  %v1438 = vpow.pop %v1437
  %v1439 = vadd.f32 %v1438, 1.0
  %v1440 = vrcp.pop %v1439
  %v1441 = vmul.f32 1.0, %v1440
  %v1442 = vxor.u32 %v1433, 2147483648
  %v1443 = vmul.f32 %v1442, 1.442695
  %v1444 = vpow.pop %v1443
  %v1445 = vadd.f32 %v1444, 1.0
  %v1446 = vrcp.pop %v1445
  %v1447 = vmul.f32 1.0, %v1446
  %v1448 = vtanh.pop %v1434
  %v1449 = vxor.u32 %v1435, 2147483648
  %v1450 = vmul.f32 %v1449, 1.442695
  %v1451 = vpow.pop %v1450
  %v1452 = vadd.f32 %v1451, 1.0
  %v1453 = vrcp.pop %v1452
  %v1454 = vmul.f32 1.0, %v1453
  %v1455 = vmul.f32 %v1447, %v1232
  %v1456 = vmul.f32 %v1441, %v1448
  %v1457 = vadd.f32 %v1455, %v1456
  %v1458 = vtanh.pop %v1457
  %v1459 = vmul.f32 %v1454, %v1458
  %v1460 = vpack.c.bf16 %v1459, %v1459
  %v1461 = vpack.c.bf16 %v1342, %v1342
  %1462 = vmatprep.subr.bf16.mxu0 %v913
  %1463 = vmatpush1.bf16.msra.mxu0 %v912
  %1464 = vmatprep.subr.bf16.mxu0 %v909
  %1465 = vmatpush1.bf16.msra.mxu0 %v908
  %1466 = vmatprep.subr.bf16.mxu0 %v905
  %1467 = vmatpush1.bf16.msra.mxu0 %v904
  %1468 = vmatprep.subr.bf16.mxu0 %v901
  %1469 = vmatpush1.bf16.msra.mxu0 %v900
  %1470 = vmatprep.subr.bf16.mxu0 %v897
  %1471 = vmatpush1.bf16.msra.mxu0 %v896
  %1472 = vmatprep.subr.bf16.mxu0 %v893
  %1473 = vmatpush1.bf16.msra.mxu0 %v892
  %1474 = vmatprep.subr.bf16.mxu0 %v889
  %1475 = vmatpush1.bf16.msra.mxu0 %v888
  %1476 = vmatprep.subr.bf16.mxu0 %v885
  %1477 = vmatpush1.bf16.msra.mxu0 %v884
  %1478 = vmatprep.subr.bf16.mxu0 %v945
  %1479 = vmatpush2.bf16.msra.mxu0 %v944
  %1480 = vmatprep.subr.bf16.mxu0 %v941
  %1481 = vmatpush2.bf16.msra.mxu0 %v940
  %1482 = vmatprep.subr.bf16.mxu0 %v937
  %1483 = vmatpush2.bf16.msra.mxu0 %v936
  %1484 = vmatprep.subr.bf16.mxu0 %v933
  %1485 = vmatpush2.bf16.msra.mxu0 %v932
  %1486 = vmatprep.subr.bf16.mxu0 %v929
  %1487 = vmatpush2.bf16.msra.mxu0 %v928
  %1488 = vmatprep.subr.bf16.mxu0 %v925
  %1489 = vmatpush2.bf16.msra.mxu0 %v924
  %1490 = vmatprep.subr.bf16.mxu0 %v921
  %1491 = vmatpush2.bf16.msra.mxu0 %v920
  %1492 = vmatprep.subr.bf16.mxu0 %v917
  %1493 = vmatpush2.bf16.msra.mxu0 %v916
  %1494 = vmatprep.mubr.bf16.mxu0 %v1461
  %1495 = vmatmul.mubr.bf16.gmra.mxu0 %v1460
  %v1496 = vpop.f32.mrf.mxu0
  %v1497 = vadd.f32 %v675, %v1496
  %v1498 = vpop.f32.mrf.mxu0
  %v1499 = vadd.f32 %v679, %v1498
  %v1500 = vpop.f32.mrf.mxu0
  %v1501 = vpop.f32.mrf.mxu0
  %1502 = vdwg.mxu0
  %1503 = vmatprep.subr.bf16.mxu0 %v915
  %1504 = vmatpush1.bf16.msra.mxu0 %v914
  %1505 = vmatprep.subr.bf16.mxu0 %v911
  %1506 = vmatpush1.bf16.msra.mxu0 %v910
  %1507 = vmatprep.subr.bf16.mxu0 %v907
  %1508 = vmatpush1.bf16.msra.mxu0 %v906
  %1509 = vmatprep.subr.bf16.mxu0 %v903
  %1510 = vmatpush1.bf16.msra.mxu0 %v902
  %1511 = vmatprep.subr.bf16.mxu0 %v899
  %1512 = vmatpush1.bf16.msra.mxu0 %v898
  %1513 = vmatprep.subr.bf16.mxu0 %v895
  %1514 = vmatpush1.bf16.msra.mxu0 %v894
  %1515 = vmatprep.subr.bf16.mxu0 %v891
  %1516 = vmatpush1.bf16.msra.mxu0 %v890
  %1517 = vmatprep.subr.bf16.mxu0 %v887
  %1518 = vmatpush1.bf16.msra.mxu0 %v886
  %1519 = vmatprep.subr.bf16.mxu0 %v947
  %1520 = vmatpush2.bf16.msra.mxu0 %v946
  %1521 = vmatprep.subr.bf16.mxu0 %v943
  %1522 = vmatpush2.bf16.msra.mxu0 %v942
  %1523 = vmatprep.subr.bf16.mxu0 %v939
  %1524 = vmatpush2.bf16.msra.mxu0 %v938
  %1525 = vmatprep.subr.bf16.mxu0 %v935
  %1526 = vmatpush2.bf16.msra.mxu0 %v934
  %1527 = vmatprep.subr.bf16.mxu0 %v931
  %1528 = vmatpush2.bf16.msra.mxu0 %v930
  %1529 = vmatprep.subr.bf16.mxu0 %v927
  %1530 = vmatpush2.bf16.msra.mxu0 %v926
  %1531 = vmatprep.subr.bf16.mxu0 %v923
  %1532 = vmatpush2.bf16.msra.mxu0 %v922
  %1533 = vmatprep.subr.bf16.mxu0 %v919
  %1534 = vmatpush2.bf16.msra.mxu0 %v918
  %1535 = vmatprep.mubr.bf16.mxu0 %v1461
  %1536 = vmatmul.mubr.bf16.gmra.mxu0 %v1460
  %v1537 = vpop.f32.mrf.mxu0
  %v1538 = vadd.f32 %v683, %v1537
  %v1539 = vpop.f32.mrf.mxu0
  %v1540 = vadd.f32 %v687, %v1539
  %v1541 = vpop.f32.mrf.mxu0
  %v1542 = vpop.f32.mrf.mxu0
  %1543 = vdwg.mxu0
  %v1544 = vxor.u32 %v1497, 2147483648
  %v1545 = vmul.f32 %v1544, 1.442695
  %v1546 = vpow.pop %v1545
  %v1547 = vadd.f32 %v1546, 1.0
  %v1548 = vrcp.pop %v1547
  %v1549 = vmul.f32 1.0, %v1548
  %v1550 = vxor.u32 %v1499, 2147483648
  %v1551 = vmul.f32 %v1550, 1.442695
  %v1552 = vpow.pop %v1551
  %v1553 = vadd.f32 %v1552, 1.0
  %v1554 = vrcp.pop %v1553
  %v1555 = vmul.f32 1.0, %v1554
  %v1556 = vtanh.pop %v1538
  %v1557 = vxor.u32 %v1540, 2147483648
  %v1558 = vmul.f32 %v1557, 1.442695
  %v1559 = vpow.pop %v1558
  %v1560 = vadd.f32 %v1559, 1.0
  %v1561 = vrcp.pop %v1560
  %v1562 = vmul.f32 1.0, %v1561
  %v1563 = vmul.f32 %v1555, %v1340
  %v1564 = vmul.f32 %v1549, %v1556
  %v1565 = vadd.f32 %v1563, %v1564
  %v1566 = vtanh.pop %v1565
  %v1567 = vmul.f32 %v1562, %v1566
  %s1568 = smul.u32 3, 4
  %s1569 = smul.addr %s1568, 8
  %s1570 = scalar_lea.vmem [#allocation2], %s1569
  %v1571 = vld [vmem:[%s1570] sm:$0xff]
  %v1572 = vld [vmem:[%s1570 + $0x8] sm:$0xff]
  %v1573 = vld [vmem:[%s1570 + $0x10] sm:$0xff]
  %v1574 = vld [vmem:[%s1570 + $0x18] sm:$0xff]
  %1575 = vmatprep.subr.bf16.mxu0 %v459
  %1576 = vmatpush1.bf16.msra.mxu0 %v458
  %1577 = vmatprep.subr.bf16.mxu0 %v455
  %1578 = vmatpush1.bf16.msra.mxu0 %v454
  %1579 = vmatprep.subr.bf16.mxu0 %v451
  %1580 = vmatpush1.bf16.msra.mxu0 %v450
  %1581 = vmatprep.subr.bf16.mxu0 %v447
  %1582 = vmatpush1.bf16.msra.mxu0 %v446
  %1583 = vmatprep.subr.bf16.mxu0 %v443
  %1584 = vmatpush1.bf16.msra.mxu0 %v442
  %1585 = vmatprep.subr.bf16.mxu0 %v439
  %1586 = vmatpush1.bf16.msra.mxu0 %v438
  %1587 = vmatprep.subr.bf16.mxu0 %v435
  %1588 = vmatpush1.bf16.msra.mxu0 %v434
  %1589 = vmatprep.subr.bf16.mxu0 %v431
  %1590 = vmatpush1.bf16.msra.mxu0 %v430
  %1591 = vmatprep.subr.bf16.mxu0 0
  %1592 = vmatpush2.bf16.msra.mxu0 0
  %1593 = vmatprep.subr.bf16.mxu0 0
  %1594 = vmatpush2.bf16.msra.mxu0 0
  %1595 = vmatprep.subr.bf16.mxu0 0
  %1596 = vmatpush2.bf16.msra.mxu0 0
  %1597 = vmatprep.subr.bf16.mxu0 0
  %1598 = vmatpush2.bf16.msra.mxu0 0
  %1599 = vmatprep.subr.bf16.mxu0 0
  %1600 = vmatpush2.bf16.msra.mxu0 0
  %1601 = vmatprep.subr.bf16.mxu0 0
  %1602 = vmatpush2.bf16.msra.mxu0 0
  %1603 = vmatprep.subr.bf16.mxu0 0
  %1604 = vmatpush2.bf16.msra.mxu0 0
  %1605 = vmatprep.subr.bf16.mxu0 0
  %1606 = vmatpush2.bf16.msra.mxu0 0
  %1607 = vmatprep.mubr.bf16.mxu0 0
  %1608 = vmatmul.mubr.bf16.gmra.mxu0 %v1460
  %v1609 = vpop.f32.mrf.mxu0
  %v1610 = vadd.f32 0.0, %v1609
  %v1611 = vpop.f32.mrf.mxu0
  %v1612 = vadd.f32 0.0, %v1611
  %v1613 = vpop.f32.mrf.mxu0
  %v1614 = vpop.f32.mrf.mxu0
  %1615 = vdwg.mxu0
  %1616 = vmatprep.subr.bf16.mxu0 %v461
  %1617 = vmatpush1.bf16.msra.mxu0 %v460
  %1618 = vmatprep.subr.bf16.mxu0 %v457
  %1619 = vmatpush1.bf16.msra.mxu0 %v456
  %1620 = vmatprep.subr.bf16.mxu0 %v453
  %1621 = vmatpush1.bf16.msra.mxu0 %v452
  %1622 = vmatprep.subr.bf16.mxu0 %v449
  %1623 = vmatpush1.bf16.msra.mxu0 %v448
  %1624 = vmatprep.subr.bf16.mxu0 %v445
  %1625 = vmatpush1.bf16.msra.mxu0 %v444
  %1626 = vmatprep.subr.bf16.mxu0 %v441
  %1627 = vmatpush1.bf16.msra.mxu0 %v440
  %1628 = vmatprep.subr.bf16.mxu0 %v437
  %1629 = vmatpush1.bf16.msra.mxu0 %v436
  %1630 = vmatprep.subr.bf16.mxu0 %v433
  %1631 = vmatpush1.bf16.msra.mxu0 %v432
  %1632 = vmatprep.subr.bf16.mxu0 0
  %1633 = vmatpush2.bf16.msra.mxu0 0
  %1634 = vmatprep.subr.bf16.mxu0 0
  %1635 = vmatpush2.bf16.msra.mxu0 0
  %1636 = vmatprep.subr.bf16.mxu0 0
  %1637 = vmatpush2.bf16.msra.mxu0 0
  %1638 = vmatprep.subr.bf16.mxu0 0
  %1639 = vmatpush2.bf16.msra.mxu0 0
  %1640 = vmatprep.subr.bf16.mxu0 0
  %1641 = vmatpush2.bf16.msra.mxu0 0
  %1642 = vmatprep.subr.bf16.mxu0 0
  %1643 = vmatpush2.bf16.msra.mxu0 0
  %1644 = vmatprep.subr.bf16.mxu0 0
  %1645 = vmatpush2.bf16.msra.mxu0 0
  %1646 = vmatprep.subr.bf16.mxu0 0
  %1647 = vmatpush2.bf16.msra.mxu0 0
  %1648 = vmatprep.mubr.bf16.mxu0 0
  %1649 = vmatmul.mubr.bf16.gmra.mxu0 %v1460
  %v1650 = vpop.f32.mrf.mxu0
  %v1651 = vadd.f32 0.0, %v1650
  %v1652 = vpop.f32.mrf.mxu0
  %v1653 = vadd.f32 0.0, %v1652
  %v1654 = vpop.f32.mrf.mxu0
  %v1655 = vpop.f32.mrf.mxu0
  %1656 = vdwg.mxu0
  %v1657 = vadd.f32 %v1571, %v1610
  %v1658 = vadd.f32 %v1572, %v1612
  %v1659 = vadd.f32 %v1573, %v1651
  %v1660 = vadd.f32 %v1574, %v1653
  %v1661 = vxor.u32 %v1657, 2147483648
  %v1662 = vmul.f32 %v1661, 1.442695
  %v1663 = vpow.pop %v1662
  %v1664 = vadd.f32 %v1663, 1.0
  %v1665 = vrcp.pop %v1664
  %v1666 = vmul.f32 1.0, %v1665
  %v1667 = vxor.u32 %v1658, 2147483648
  %v1668 = vmul.f32 %v1667, 1.442695
  %v1669 = vpow.pop %v1668
  %v1670 = vadd.f32 %v1669, 1.0
  %v1671 = vrcp.pop %v1670
  %v1672 = vmul.f32 1.0, %v1671
  %v1673 = vtanh.pop %v1659
  %v1674 = vxor.u32 %v1660, 2147483648
  %v1675 = vmul.f32 %v1674, 1.442695
  %v1676 = vpow.pop %v1675
  %v1677 = vadd.f32 %v1676, 1.0
  %v1678 = vrcp.pop %v1677
  %v1679 = vmul.f32 1.0, %v1678
  %v1680 = vmul.f32 %v1672, %v1457
  %v1681 = vmul.f32 %v1666, %v1673
  %v1682 = vadd.f32 %v1680, %v1681
  %v1683 = vtanh.pop %v1682
  %v1684 = vmul.f32 %v1679, %v1683
  %v1685 = vpack.c.bf16 %v1684, %v1684
  %v1686 = vpack.c.bf16 %v1567, %v1567
  %1687 = vmatprep.subr.bf16.mxu0 %v913
  %1688 = vmatpush1.bf16.msra.mxu0 %v912
  %1689 = vmatprep.subr.bf16.mxu0 %v909
  %1690 = vmatpush1.bf16.msra.mxu0 %v908
  %1691 = vmatprep.subr.bf16.mxu0 %v905
  %1692 = vmatpush1.bf16.msra.mxu0 %v904
  %1693 = vmatprep.subr.bf16.mxu0 %v901
  %1694 = vmatpush1.bf16.msra.mxu0 %v900
  %1695 = vmatprep.subr.bf16.mxu0 %v897
  %1696 = vmatpush1.bf16.msra.mxu0 %v896
  %1697 = vmatprep.subr.bf16.mxu0 %v893
  %1698 = vmatpush1.bf16.msra.mxu0 %v892
  %1699 = vmatprep.subr.bf16.mxu0 %v889
  %1700 = vmatpush1.bf16.msra.mxu0 %v888
  %1701 = vmatprep.subr.bf16.mxu0 %v885
  %1702 = vmatpush1.bf16.msra.mxu0 %v884
  %1703 = vmatprep.subr.bf16.mxu0 %v945
  %1704 = vmatpush2.bf16.msra.mxu0 %v944
  %1705 = vmatprep.subr.bf16.mxu0 %v941
  %1706 = vmatpush2.bf16.msra.mxu0 %v940
  %1707 = vmatprep.subr.bf16.mxu0 %v937
  %1708 = vmatpush2.bf16.msra.mxu0 %v936
  %1709 = vmatprep.subr.bf16.mxu0 %v933
  %1710 = vmatpush2.bf16.msra.mxu0 %v932
  %1711 = vmatprep.subr.bf16.mxu0 %v929
  %1712 = vmatpush2.bf16.msra.mxu0 %v928
  %1713 = vmatprep.subr.bf16.mxu0 %v925
  %1714 = vmatpush2.bf16.msra.mxu0 %v924
  %1715 = vmatprep.subr.bf16.mxu0 %v921
  %1716 = vmatpush2.bf16.msra.mxu0 %v920
  %1717 = vmatprep.subr.bf16.mxu0 %v917
  %1718 = vmatpush2.bf16.msra.mxu0 %v916
  %1719 = vmatprep.mubr.bf16.mxu0 %v1686
  %1720 = vmatmul.mubr.bf16.gmra.mxu0 %v1685
  %v1721 = vpop.f32.mrf.mxu0
  %v1722 = vadd.f32 %v675, %v1721
  %v1723 = vpop.f32.mrf.mxu0
  %v1724 = vadd.f32 %v679, %v1723
  %v1725 = vpop.f32.mrf.mxu0
  %v1726 = vpop.f32.mrf.mxu0
  %1727 = vdwg.mxu0
  %1728 = vmatprep.subr.bf16.mxu0 %v915
  %1729 = vmatpush1.bf16.msra.mxu0 %v914
  %1730 = vmatprep.subr.bf16.mxu0 %v911
  %1731 = vmatpush1.bf16.msra.mxu0 %v910
  %1732 = vmatprep.subr.bf16.mxu0 %v907
  %1733 = vmatpush1.bf16.msra.mxu0 %v906
  %1734 = vmatprep.subr.bf16.mxu0 %v903
  %1735 = vmatpush1.bf16.msra.mxu0 %v902
  %1736 = vmatprep.subr.bf16.mxu0 %v899
  %1737 = vmatpush1.bf16.msra.mxu0 %v898
  %1738 = vmatprep.subr.bf16.mxu0 %v895
  %1739 = vmatpush1.bf16.msra.mxu0 %v894
  %1740 = vmatprep.subr.bf16.mxu0 %v891
  %1741 = vmatpush1.bf16.msra.mxu0 %v890
  %1742 = vmatprep.subr.bf16.mxu0 %v887
  %1743 = vmatpush1.bf16.msra.mxu0 %v886
  %1744 = vmatprep.subr.bf16.mxu0 %v947
  %1745 = vmatpush2.bf16.msra.mxu0 %v946
  %1746 = vmatprep.subr.bf16.mxu0 %v943
  %1747 = vmatpush2.bf16.msra.mxu0 %v942
  %1748 = vmatprep.subr.bf16.mxu0 %v939
  %1749 = vmatpush2.bf16.msra.mxu0 %v938
  %1750 = vmatprep.subr.bf16.mxu0 %v935
  %1751 = vmatpush2.bf16.msra.mxu0 %v934
  %1752 = vmatprep.subr.bf16.mxu0 %v931
  %1753 = vmatpush2.bf16.msra.mxu0 %v930
  %1754 = vmatprep.subr.bf16.mxu0 %v927
  %1755 = vmatpush2.bf16.msra.mxu0 %v926
  %1756 = vmatprep.subr.bf16.mxu0 %v923
  %1757 = vmatpush2.bf16.msra.mxu0 %v922
  %1758 = vmatprep.subr.bf16.mxu0 %v919
  %1759 = vmatpush2.bf16.msra.mxu0 %v918
  %1760 = vmatprep.mubr.bf16.mxu0 %v1686
  %1761 = vmatmul.mubr.bf16.gmra.mxu0 %v1685
  %v1762 = vpop.f32.mrf.mxu0
  %v1763 = vadd.f32 %v683, %v1762
  %v1764 = vpop.f32.mrf.mxu0
  %v1765 = vadd.f32 %v687, %v1764
  %v1766 = vpop.f32.mrf.mxu0
  %v1767 = vpop.f32.mrf.mxu0
  %1768 = vdwg.mxu0
  %v1769 = vxor.u32 %v1722, 2147483648
  %v1770 = vmul.f32 %v1769, 1.442695
  %v1771 = vpow.pop %v1770
  %v1772 = vadd.f32 %v1771, 1.0
  %v1773 = vrcp.pop %v1772
  %v1774 = vmul.f32 1.0, %v1773
  %v1775 = vxor.u32 %v1724, 2147483648
  %v1776 = vmul.f32 %v1775, 1.442695
  %v1777 = vpow.pop %v1776
  %v1778 = vadd.f32 %v1777, 1.0
  %v1779 = vrcp.pop %v1778
  %v1780 = vmul.f32 1.0, %v1779
  %v1781 = vtanh.pop %v1763
  %v1782 = vxor.u32 %v1765, 2147483648
  %v1783 = vmul.f32 %v1782, 1.442695
  %v1784 = vpow.pop %v1783
  %v1785 = vadd.f32 %v1784, 1.0
  %v1786 = vrcp.pop %v1785
  %v1787 = vmul.f32 1.0, %v1786
  %v1788 = vmul.f32 %v1780, %v1565
  %v1789 = vmul.f32 %v1774, %v1781
  %v1790 = vadd.f32 %v1788, %v1789
  %v1791 = vtanh.pop %v1790
  %v1792 = vmul.f32 %v1787, %v1791
  %s1793 = smul.u32 4, 4
  %s1794 = smul.addr %s1793, 8
  %s1795 = scalar_lea.vmem [#allocation2], %s1794
  %v1796 = vld [vmem:[%s1795] sm:$0xff]
  %v1797 = vld [vmem:[%s1795 + $0x8] sm:$0xff]
  %v1798 = vld [vmem:[%s1795 + $0x10] sm:$0xff]
  %v1799 = vld [vmem:[%s1795 + $0x18] sm:$0xff]
  %1800 = vmatprep.subr.bf16.mxu0 %v459
  %1801 = vmatpush1.bf16.msra.mxu0 %v458
  %1802 = vmatprep.subr.bf16.mxu0 %v455
  %1803 = vmatpush1.bf16.msra.mxu0 %v454
  %1804 = vmatprep.subr.bf16.mxu0 %v451
  %1805 = vmatpush1.bf16.msra.mxu0 %v450
  %1806 = vmatprep.subr.bf16.mxu0 %v447
  %1807 = vmatpush1.bf16.msra.mxu0 %v446
  %1808 = vmatprep.subr.bf16.mxu0 %v443
  %1809 = vmatpush1.bf16.msra.mxu0 %v442
  %1810 = vmatprep.subr.bf16.mxu0 %v439
  %1811 = vmatpush1.bf16.msra.mxu0 %v438
  %1812 = vmatprep.subr.bf16.mxu0 %v435
  %1813 = vmatpush1.bf16.msra.mxu0 %v434
  %1814 = vmatprep.subr.bf16.mxu0 %v431
  %1815 = vmatpush1.bf16.msra.mxu0 %v430
  %1816 = vmatprep.subr.bf16.mxu0 0
  %1817 = vmatpush2.bf16.msra.mxu0 0
  %1818 = vmatprep.subr.bf16.mxu0 0
  %1819 = vmatpush2.bf16.msra.mxu0 0
  %1820 = vmatprep.subr.bf16.mxu0 0
  %1821 = vmatpush2.bf16.msra.mxu0 0
  %1822 = vmatprep.subr.bf16.mxu0 0
  %1823 = vmatpush2.bf16.msra.mxu0 0
  %1824 = vmatprep.subr.bf16.mxu0 0
  %1825 = vmatpush2.bf16.msra.mxu0 0
  %1826 = vmatprep.subr.bf16.mxu0 0
  %1827 = vmatpush2.bf16.msra.mxu0 0
  %1828 = vmatprep.subr.bf16.mxu0 0
  %1829 = vmatpush2.bf16.msra.mxu0 0
  %1830 = vmatprep.subr.bf16.mxu0 0
  %1831 = vmatpush2.bf16.msra.mxu0 0
  %1832 = vmatprep.mubr.bf16.mxu0 0
  %1833 = vmatmul.mubr.bf16.gmra.mxu0 %v1685
  %v1834 = vpop.f32.mrf.mxu0
  %v1835 = vadd.f32 0.0, %v1834
  %v1836 = vpop.f32.mrf.mxu0
  %v1837 = vadd.f32 0.0, %v1836
  %v1838 = vpop.f32.mrf.mxu0
  %v1839 = vpop.f32.mrf.mxu0
  %1840 = vdwg.mxu0
  %1841 = vmatprep.subr.bf16.mxu0 %v461
  %1842 = vmatpush1.bf16.msra.mxu0 %v460
  %1843 = vmatprep.subr.bf16.mxu0 %v457
  %1844 = vmatpush1.bf16.msra.mxu0 %v456
  %1845 = vmatprep.subr.bf16.mxu0 %v453
  %1846 = vmatpush1.bf16.msra.mxu0 %v452
  %1847 = vmatprep.subr.bf16.mxu0 %v449
  %1848 = vmatpush1.bf16.msra.mxu0 %v448
  %1849 = vmatprep.subr.bf16.mxu0 %v445
  %1850 = vmatpush1.bf16.msra.mxu0 %v444
  %1851 = vmatprep.subr.bf16.mxu0 %v441
  %1852 = vmatpush1.bf16.msra.mxu0 %v440
  %1853 = vmatprep.subr.bf16.mxu0 %v437
  %1854 = vmatpush1.bf16.msra.mxu0 %v436
  %1855 = vmatprep.subr.bf16.mxu0 %v433
  %1856 = vmatpush1.bf16.msra.mxu0 %v432
  %1857 = vmatprep.subr.bf16.mxu0 0
  %1858 = vmatpush2.bf16.msra.mxu0 0
  %1859 = vmatprep.subr.bf16.mxu0 0
  %1860 = vmatpush2.bf16.msra.mxu0 0
  %1861 = vmatprep.subr.bf16.mxu0 0
  %1862 = vmatpush2.bf16.msra.mxu0 0
  %1863 = vmatprep.subr.bf16.mxu0 0
  %1864 = vmatpush2.bf16.msra.mxu0 0
  %1865 = vmatprep.subr.bf16.mxu0 0
  %1866 = vmatpush2.bf16.msra.mxu0 0
  %1867 = vmatprep.subr.bf16.mxu0 0
  %1868 = vmatpush2.bf16.msra.mxu0 0
  %1869 = vmatprep.subr.bf16.mxu0 0
  %1870 = vmatpush2.bf16.msra.mxu0 0
  %1871 = vmatprep.subr.bf16.mxu0 0
  %1872 = vmatpush2.bf16.msra.mxu0 0
  %1873 = vmatprep.mubr.bf16.mxu0 0
  %1874 = vmatmul.mubr.bf16.gmra.mxu0 %v1685
  %v1875 = vpop.f32.mrf.mxu0
  %v1876 = vadd.f32 0.0, %v1875
  %v1877 = vpop.f32.mrf.mxu0
  %v1878 = vadd.f32 0.0, %v1877
  %v1879 = vpop.f32.mrf.mxu0
  %v1880 = vpop.f32.mrf.mxu0
  %1881 = vdwg.mxu0
  %v1882 = vadd.f32 %v1796, %v1835
  %v1883 = vadd.f32 %v1797, %v1837
  %v1884 = vadd.f32 %v1798, %v1876
  %v1885 = vadd.f32 %v1799, %v1878
  %v1886 = vxor.u32 %v1882, 2147483648
  %v1887 = vmul.f32 %v1886, 1.442695
  %v1888 = vpow.pop %v1887
  %v1889 = vadd.f32 %v1888, 1.0
  %v1890 = vrcp.pop %v1889
  %v1891 = vmul.f32 1.0, %v1890
  %v1892 = vxor.u32 %v1883, 2147483648
  %v1893 = vmul.f32 %v1892, 1.442695
  %v1894 = vpow.pop %v1893
  %v1895 = vadd.f32 %v1894, 1.0
  %v1896 = vrcp.pop %v1895
  %v1897 = vmul.f32 1.0, %v1896
  %v1898 = vtanh.pop %v1884
  %v1899 = vxor.u32 %v1885, 2147483648
  %v1900 = vmul.f32 %v1899, 1.442695
  %v1901 = vpow.pop %v1900
  %v1902 = vadd.f32 %v1901, 1.0
  %v1903 = vrcp.pop %v1902
  %v1904 = vmul.f32 1.0, %v1903
  %v1905 = vmul.f32 %v1897, %v1682
  %v1906 = vmul.f32 %v1891, %v1898
  %v1907 = vadd.f32 %v1905, %v1906
  %v1908 = vtanh.pop %v1907
  %v1909 = vmul.f32 %v1904, %v1908
  %v1910 = vpack.c.bf16 %v1909, %v1909
  %v1911 = vpack.c.bf16 %v1792, %v1792
  %1912 = vmatprep.subr.bf16.mxu0 %v913
  %1913 = vmatpush1.bf16.msra.mxu0 %v912
  %1914 = vmatprep.subr.bf16.mxu0 %v909
  %1915 = vmatpush1.bf16.msra.mxu0 %v908
  %1916 = vmatprep.subr.bf16.mxu0 %v905
  %1917 = vmatpush1.bf16.msra.mxu0 %v904
  %1918 = vmatprep.subr.bf16.mxu0 %v901
  %1919 = vmatpush1.bf16.msra.mxu0 %v900
  %1920 = vmatprep.subr.bf16.mxu0 %v897
  %1921 = vmatpush1.bf16.msra.mxu0 %v896
  %1922 = vmatprep.subr.bf16.mxu0 %v893
  %1923 = vmatpush1.bf16.msra.mxu0 %v892
  %1924 = vmatprep.subr.bf16.mxu0 %v889
  %1925 = vmatpush1.bf16.msra.mxu0 %v888
  %1926 = vmatprep.subr.bf16.mxu0 %v885
  %1927 = vmatpush1.bf16.msra.mxu0 %v884
  %1928 = vmatprep.subr.bf16.mxu0 %v945
  %1929 = vmatpush2.bf16.msra.mxu0 %v944
  %1930 = vmatprep.subr.bf16.mxu0 %v941
  %1931 = vmatpush2.bf16.msra.mxu0 %v940
  %1932 = vmatprep.subr.bf16.mxu0 %v937
  %1933 = vmatpush2.bf16.msra.mxu0 %v936
  %1934 = vmatprep.subr.bf16.mxu0 %v933
  %1935 = vmatpush2.bf16.msra.mxu0 %v932
  %1936 = vmatprep.subr.bf16.mxu0 %v929
  %1937 = vmatpush2.bf16.msra.mxu0 %v928
  %1938 = vmatprep.subr.bf16.mxu0 %v925
  %1939 = vmatpush2.bf16.msra.mxu0 %v924
  %1940 = vmatprep.subr.bf16.mxu0 %v921
  %1941 = vmatpush2.bf16.msra.mxu0 %v920
  %1942 = vmatprep.subr.bf16.mxu0 %v917
  %1943 = vmatpush2.bf16.msra.mxu0 %v916
  %1944 = vmatprep.mubr.bf16.mxu0 %v1911
  %1945 = vmatmul.mubr.bf16.gmra.mxu0 %v1910
  %v1946 = vpop.f32.mrf.mxu0
  %v1947 = vadd.f32 %v675, %v1946
  %v1948 = vpop.f32.mrf.mxu0
  %v1949 = vadd.f32 %v679, %v1948
  %v1950 = vpop.f32.mrf.mxu0
  %v1951 = vpop.f32.mrf.mxu0
  %1952 = vdwg.mxu0
  %1953 = vmatprep.subr.bf16.mxu0 %v915
  %1954 = vmatpush1.bf16.msra.mxu0 %v914
  %1955 = vmatprep.subr.bf16.mxu0 %v911
  %1956 = vmatpush1.bf16.msra.mxu0 %v910
  %1957 = vmatprep.subr.bf16.mxu0 %v907
  %1958 = vmatpush1.bf16.msra.mxu0 %v906
  %1959 = vmatprep.subr.bf16.mxu0 %v903
  %1960 = vmatpush1.bf16.msra.mxu0 %v902
  %1961 = vmatprep.subr.bf16.mxu0 %v899
  %1962 = vmatpush1.bf16.msra.mxu0 %v898
  %1963 = vmatprep.subr.bf16.mxu0 %v895
  %1964 = vmatpush1.bf16.msra.mxu0 %v894
  %1965 = vmatprep.subr.bf16.mxu0 %v891
  %1966 = vmatpush1.bf16.msra.mxu0 %v890
  %1967 = vmatprep.subr.bf16.mxu0 %v887
  %1968 = vmatpush1.bf16.msra.mxu0 %v886
  %1969 = vmatprep.subr.bf16.mxu0 %v947
  %1970 = vmatpush2.bf16.msra.mxu0 %v946
  %1971 = vmatprep.subr.bf16.mxu0 %v943
  %1972 = vmatpush2.bf16.msra.mxu0 %v942
  %1973 = vmatprep.subr.bf16.mxu0 %v939
  %1974 = vmatpush2.bf16.msra.mxu0 %v938
  %1975 = vmatprep.subr.bf16.mxu0 %v935
  %1976 = vmatpush2.bf16.msra.mxu0 %v934
  %1977 = vmatprep.subr.bf16.mxu0 %v931
  %1978 = vmatpush2.bf16.msra.mxu0 %v930
  %1979 = vmatprep.subr.bf16.mxu0 %v927
  %1980 = vmatpush2.bf16.msra.mxu0 %v926
  %1981 = vmatprep.subr.bf16.mxu0 %v923
  %1982 = vmatpush2.bf16.msra.mxu0 %v922
  %1983 = vmatprep.subr.bf16.mxu0 %v919
  %1984 = vmatpush2.bf16.msra.mxu0 %v918
  %1985 = vmatprep.mubr.bf16.mxu0 %v1911
  %1986 = vmatmul.mubr.bf16.gmra.mxu0 %v1910
  %v1987 = vpop.f32.mrf.mxu0
  %v1988 = vadd.f32 %v683, %v1987
  %v1989 = vpop.f32.mrf.mxu0
  %v1990 = vadd.f32 %v687, %v1989
  %v1991 = vpop.f32.mrf.mxu0
  %v1992 = vpop.f32.mrf.mxu0
  %1993 = vdwg.mxu0
  %v1994 = vxor.u32 %v1947, 2147483648
  %v1995 = vmul.f32 %v1994, 1.442695
  %v1996 = vpow.pop %v1995
  %v1997 = vadd.f32 %v1996, 1.0
  %v1998 = vrcp.pop %v1997
  %v1999 = vmul.f32 1.0, %v1998
  %v2000 = vxor.u32 %v1949, 2147483648
  %v2001 = vmul.f32 %v2000, 1.442695
  %v2002 = vpow.pop %v2001
  %v2003 = vadd.f32 %v2002, 1.0
  %v2004 = vrcp.pop %v2003
  %v2005 = vmul.f32 1.0, %v2004
  %v2006 = vtanh.pop %v1988
  %v2007 = vxor.u32 %v1990, 2147483648
  %v2008 = vmul.f32 %v2007, 1.442695
  %v2009 = vpow.pop %v2008
  %v2010 = vadd.f32 %v2009, 1.0
  %v2011 = vrcp.pop %v2010
  %v2012 = vmul.f32 1.0, %v2011
  %v2013 = vmul.f32 %v2005, %v1790
  %v2014 = vmul.f32 %v1999, %v2006
  %v2015 = vadd.f32 %v2013, %v2014
  %v2016 = vtanh.pop %v2015
  %v2017 = vmul.f32 %v2012, %v2016
  %s2018 = smul.u32 5, 4
  %s2019 = smul.addr %s2018, 8
  %s2020 = scalar_lea.vmem [#allocation2], %s2019
  %v2021 = vld [vmem:[%s2020] sm:$0xff]
  %v2022 = vld [vmem:[%s2020 + $0x8] sm:$0xff]
  %v2023 = vld [vmem:[%s2020 + $0x10] sm:$0xff]
  %v2024 = vld [vmem:[%s2020 + $0x18] sm:$0xff]
  %2025 = vmatprep.subr.bf16.mxu0 %v459
  %2026 = vmatpush1.bf16.msra.mxu0 %v458
  %2027 = vmatprep.subr.bf16.mxu0 %v455
  %2028 = vmatpush1.bf16.msra.mxu0 %v454
  %2029 = vmatprep.subr.bf16.mxu0 %v451
  %2030 = vmatpush1.bf16.msra.mxu0 %v450
  %2031 = vmatprep.subr.bf16.mxu0 %v447
  %2032 = vmatpush1.bf16.msra.mxu0 %v446
  %2033 = vmatprep.subr.bf16.mxu0 %v443
  %2034 = vmatpush1.bf16.msra.mxu0 %v442
  %2035 = vmatprep.subr.bf16.mxu0 %v439
  %2036 = vmatpush1.bf16.msra.mxu0 %v438
  %2037 = vmatprep.subr.bf16.mxu0 %v435
  %2038 = vmatpush1.bf16.msra.mxu0 %v434
  %2039 = vmatprep.subr.bf16.mxu0 %v431
  %2040 = vmatpush1.bf16.msra.mxu0 %v430
  %2041 = vmatprep.subr.bf16.mxu0 0
  %2042 = vmatpush2.bf16.msra.mxu0 0
  %2043 = vmatprep.subr.bf16.mxu0 0
  %2044 = vmatpush2.bf16.msra.mxu0 0
  %2045 = vmatprep.subr.bf16.mxu0 0
  %2046 = vmatpush2.bf16.msra.mxu0 0
  %2047 = vmatprep.subr.bf16.mxu0 0
  %2048 = vmatpush2.bf16.msra.mxu0 0
  %2049 = vmatprep.subr.bf16.mxu0 0
  %2050 = vmatpush2.bf16.msra.mxu0 0
  %2051 = vmatprep.subr.bf16.mxu0 0
  %2052 = vmatpush2.bf16.msra.mxu0 0
  %2053 = vmatprep.subr.bf16.mxu0 0
  %2054 = vmatpush2.bf16.msra.mxu0 0
  %2055 = vmatprep.subr.bf16.mxu0 0
  %2056 = vmatpush2.bf16.msra.mxu0 0
  %2057 = vmatprep.mubr.bf16.mxu0 0
  %2058 = vmatmul.mubr.bf16.gmra.mxu0 %v1910
  %v2059 = vpop.f32.mrf.mxu0
  %v2060 = vadd.f32 0.0, %v2059
  %v2061 = vpop.f32.mrf.mxu0
  %v2062 = vadd.f32 0.0, %v2061
  %v2063 = vpop.f32.mrf.mxu0
  %v2064 = vpop.f32.mrf.mxu0
  %2065 = vdwg.mxu0
  %2066 = vmatprep.subr.bf16.mxu0 %v461
  %2067 = vmatpush1.bf16.msra.mxu0 %v460
  %2068 = vmatprep.subr.bf16.mxu0 %v457
  %2069 = vmatpush1.bf16.msra.mxu0 %v456
  %2070 = vmatprep.subr.bf16.mxu0 %v453
  %2071 = vmatpush1.bf16.msra.mxu0 %v452
  %2072 = vmatprep.subr.bf16.mxu0 %v449
  %2073 = vmatpush1.bf16.msra.mxu0 %v448
  %2074 = vmatprep.subr.bf16.mxu0 %v445
  %2075 = vmatpush1.bf16.msra.mxu0 %v444
  %2076 = vmatprep.subr.bf16.mxu0 %v441
  %2077 = vmatpush1.bf16.msra.mxu0 %v440
  %2078 = vmatprep.subr.bf16.mxu0 %v437
  %2079 = vmatpush1.bf16.msra.mxu0 %v436
  %2080 = vmatprep.subr.bf16.mxu0 %v433
  %2081 = vmatpush1.bf16.msra.mxu0 %v432
  %2082 = vmatprep.subr.bf16.mxu0 0
  %2083 = vmatpush2.bf16.msra.mxu0 0
  %2084 = vmatprep.subr.bf16.mxu0 0
  %2085 = vmatpush2.bf16.msra.mxu0 0
  %2086 = vmatprep.subr.bf16.mxu0 0
  %2087 = vmatpush2.bf16.msra.mxu0 0
  %2088 = vmatprep.subr.bf16.mxu0 0
  %2089 = vmatpush2.bf16.msra.mxu0 0
  %2090 = vmatprep.subr.bf16.mxu0 0
  %2091 = vmatpush2.bf16.msra.mxu0 0
  %2092 = vmatprep.subr.bf16.mxu0 0
  %2093 = vmatpush2.bf16.msra.mxu0 0
  %2094 = vmatprep.subr.bf16.mxu0 0
  %2095 = vmatpush2.bf16.msra.mxu0 0
  %2096 = vmatprep.subr.bf16.mxu0 0
  %2097 = vmatpush2.bf16.msra.mxu0 0
  %2098 = vmatprep.mubr.bf16.mxu0 0
  %2099 = vmatmul.mubr.bf16.gmra.mxu0 %v1910
  %v2100 = vpop.f32.mrf.mxu0
  %v2101 = vadd.f32 0.0, %v2100
  %v2102 = vpop.f32.mrf.mxu0
  %v2103 = vadd.f32 0.0, %v2102
  %v2104 = vpop.f32.mrf.mxu0
  %v2105 = vpop.f32.mrf.mxu0
  %2106 = vdwg.mxu0
  %v2107 = vadd.f32 %v2021, %v2060
  %v2108 = vadd.f32 %v2022, %v2062
  %v2109 = vadd.f32 %v2023, %v2101
  %v2110 = vadd.f32 %v2024, %v2103
  %v2111 = vxor.u32 %v2107, 2147483648
  %v2112 = vmul.f32 %v2111, 1.442695
  %v2113 = vpow.pop %v2112
  %v2114 = vadd.f32 %v2113, 1.0
  %v2115 = vrcp.pop %v2114
  %v2116 = vmul.f32 1.0, %v2115
  %v2117 = vxor.u32 %v2108, 2147483648
  %v2118 = vmul.f32 %v2117, 1.442695
  %v2119 = vpow.pop %v2118
  %v2120 = vadd.f32 %v2119, 1.0
  %v2121 = vrcp.pop %v2120
  %v2122 = vmul.f32 1.0, %v2121
  %v2123 = vtanh.pop %v2109
  %v2124 = vxor.u32 %v2110, 2147483648
  %v2125 = vmul.f32 %v2124, 1.442695
  %v2126 = vpow.pop %v2125
  %v2127 = vadd.f32 %v2126, 1.0
  %v2128 = vrcp.pop %v2127
  %v2129 = vmul.f32 1.0, %v2128
  %v2130 = vmul.f32 %v2122, %v1907
  %v2131 = vmul.f32 %v2116, %v2123
  %v2132 = vadd.f32 %v2130, %v2131
  %v2133 = vtanh.pop %v2132
  %v2134 = vmul.f32 %v2129, %v2133
  %v2135 = vpack.c.bf16 %v2134, %v2134
  %v2136 = vpack.c.bf16 %v2017, %v2017
  %2137 = vmatprep.subr.bf16.mxu0 %v913
  %2138 = vmatpush1.bf16.msra.mxu0 %v912
  %2139 = vmatprep.subr.bf16.mxu0 %v909
  %2140 = vmatpush1.bf16.msra.mxu0 %v908
  %2141 = vmatprep.subr.bf16.mxu0 %v905
  %2142 = vmatpush1.bf16.msra.mxu0 %v904
  %2143 = vmatprep.subr.bf16.mxu0 %v901
  %2144 = vmatpush1.bf16.msra.mxu0 %v900
  %2145 = vmatprep.subr.bf16.mxu0 %v897
  %2146 = vmatpush1.bf16.msra.mxu0 %v896
  %2147 = vmatprep.subr.bf16.mxu0 %v893
  %2148 = vmatpush1.bf16.msra.mxu0 %v892
  %2149 = vmatprep.subr.bf16.mxu0 %v889
  %2150 = vmatpush1.bf16.msra.mxu0 %v888
  %2151 = vmatprep.subr.bf16.mxu0 %v885
  %2152 = vmatpush1.bf16.msra.mxu0 %v884
  %2153 = vmatprep.subr.bf16.mxu0 %v945
  %2154 = vmatpush2.bf16.msra.mxu0 %v944
  %2155 = vmatprep.subr.bf16.mxu0 %v941
  %2156 = vmatpush2.bf16.msra.mxu0 %v940
  %2157 = vmatprep.subr.bf16.mxu0 %v937
  %2158 = vmatpush2.bf16.msra.mxu0 %v936
  %2159 = vmatprep.subr.bf16.mxu0 %v933
  %2160 = vmatpush2.bf16.msra.mxu0 %v932
  %2161 = vmatprep.subr.bf16.mxu0 %v929
  %2162 = vmatpush2.bf16.msra.mxu0 %v928
  %2163 = vmatprep.subr.bf16.mxu0 %v925
  %2164 = vmatpush2.bf16.msra.mxu0 %v924
  %2165 = vmatprep.subr.bf16.mxu0 %v921
  %2166 = vmatpush2.bf16.msra.mxu0 %v920
  %2167 = vmatprep.subr.bf16.mxu0 %v917
  %2168 = vmatpush2.bf16.msra.mxu0 %v916
  %2169 = vmatprep.mubr.bf16.mxu0 %v2136
  %2170 = vmatmul.mubr.bf16.gmra.mxu0 %v2135
  %v2171 = vpop.f32.mrf.mxu0
  %v2172 = vadd.f32 %v675, %v2171
  %v2173 = vpop.f32.mrf.mxu0
  %v2174 = vadd.f32 %v679, %v2173
  %v2175 = vpop.f32.mrf.mxu0
  %v2176 = vpop.f32.mrf.mxu0
  %2177 = vdwg.mxu0
  %2178 = vmatprep.subr.bf16.mxu0 %v915
  %2179 = vmatpush1.bf16.msra.mxu0 %v914
  %2180 = vmatprep.subr.bf16.mxu0 %v911
  %2181 = vmatpush1.bf16.msra.mxu0 %v910
  %2182 = vmatprep.subr.bf16.mxu0 %v907
  %2183 = vmatpush1.bf16.msra.mxu0 %v906
  %2184 = vmatprep.subr.bf16.mxu0 %v903
  %2185 = vmatpush1.bf16.msra.mxu0 %v902
  %2186 = vmatprep.subr.bf16.mxu0 %v899
  %2187 = vmatpush1.bf16.msra.mxu0 %v898
  %2188 = vmatprep.subr.bf16.mxu0 %v895
  %2189 = vmatpush1.bf16.msra.mxu0 %v894
  %2190 = vmatprep.subr.bf16.mxu0 %v891
  %2191 = vmatpush1.bf16.msra.mxu0 %v890
  %2192 = vmatprep.subr.bf16.mxu0 %v887
  %2193 = vmatpush1.bf16.msra.mxu0 %v886
  %2194 = vmatprep.subr.bf16.mxu0 %v947
  %2195 = vmatpush2.bf16.msra.mxu0 %v946
  %2196 = vmatprep.subr.bf16.mxu0 %v943
  %2197 = vmatpush2.bf16.msra.mxu0 %v942
  %2198 = vmatprep.subr.bf16.mxu0 %v939
  %2199 = vmatpush2.bf16.msra.mxu0 %v938
  %2200 = vmatprep.subr.bf16.mxu0 %v935
  %2201 = vmatpush2.bf16.msra.mxu0 %v934
  %2202 = vmatprep.subr.bf16.mxu0 %v931
  %2203 = vmatpush2.bf16.msra.mxu0 %v930
  %2204 = vmatprep.subr.bf16.mxu0 %v927
  %2205 = vmatpush2.bf16.msra.mxu0 %v926
  %2206 = vmatprep.subr.bf16.mxu0 %v923
  %2207 = vmatpush2.bf16.msra.mxu0 %v922
  %2208 = vmatprep.subr.bf16.mxu0 %v919
  %2209 = vmatpush2.bf16.msra.mxu0 %v918
  %2210 = vmatprep.mubr.bf16.mxu0 %v2136
  %2211 = vmatmul.mubr.bf16.gmra.mxu0 %v2135
  %v2212 = vpop.f32.mrf.mxu0
  %v2213 = vadd.f32 %v683, %v2212
  %v2214 = vpop.f32.mrf.mxu0
  %v2215 = vadd.f32 %v687, %v2214
  %v2216 = vpop.f32.mrf.mxu0
  %v2217 = vpop.f32.mrf.mxu0
  %2218 = vdwg.mxu0
  %v2219 = vxor.u32 %v2172, 2147483648
  %v2220 = vmul.f32 %v2219, 1.442695
  %v2221 = vpow.pop %v2220
  %v2222 = vadd.f32 %v2221, 1.0
  %v2223 = vrcp.pop %v2222
  %v2224 = vmul.f32 1.0, %v2223
  %v2225 = vxor.u32 %v2174, 2147483648
  %v2226 = vmul.f32 %v2225, 1.442695
  %v2227 = vpow.pop %v2226
  %v2228 = vadd.f32 %v2227, 1.0
  %v2229 = vrcp.pop %v2228
  %v2230 = vmul.f32 1.0, %v2229
  %v2231 = vtanh.pop %v2213
  %v2232 = vxor.u32 %v2215, 2147483648
  %v2233 = vmul.f32 %v2232, 1.442695
  %v2234 = vpow.pop %v2233
  %v2235 = vadd.f32 %v2234, 1.0
  %v2236 = vrcp.pop %v2235
  %v2237 = vmul.f32 1.0, %v2236
  %v2238 = vmul.f32 %v2230, %v2015
  %v2239 = vmul.f32 %v2224, %v2231
  %v2240 = vadd.f32 %v2238, %v2239
  %v2241 = vtanh.pop %v2240
  %v2242 = vmul.f32 %v2237, %v2241
  %s2243 = smul.u32 6, 4
  %s2244 = smul.addr %s2243, 8
  %s2245 = scalar_lea.vmem [#allocation2], %s2244
  %v2246 = vld [vmem:[%s2245] sm:$0xff]
  %v2247 = vld [vmem:[%s2245 + $0x8] sm:$0xff]
  %v2248 = vld [vmem:[%s2245 + $0x10] sm:$0xff]
  %v2249 = vld [vmem:[%s2245 + $0x18] sm:$0xff]
  %2250 = vmatprep.subr.bf16.mxu0 %v459
  %2251 = vmatpush1.bf16.msra.mxu0 %v458
  %2252 = vmatprep.subr.bf16.mxu0 %v455
  %2253 = vmatpush1.bf16.msra.mxu0 %v454
  %2254 = vmatprep.subr.bf16.mxu0 %v451
  %2255 = vmatpush1.bf16.msra.mxu0 %v450
  %2256 = vmatprep.subr.bf16.mxu0 %v447
  %2257 = vmatpush1.bf16.msra.mxu0 %v446
  %2258 = vmatprep.subr.bf16.mxu0 %v443
  %2259 = vmatpush1.bf16.msra.mxu0 %v442
  %2260 = vmatprep.subr.bf16.mxu0 %v439
  %2261 = vmatpush1.bf16.msra.mxu0 %v438
  %2262 = vmatprep.subr.bf16.mxu0 %v435
  %2263 = vmatpush1.bf16.msra.mxu0 %v434
  %2264 = vmatprep.subr.bf16.mxu0 %v431
  %2265 = vmatpush1.bf16.msra.mxu0 %v430
  %2266 = vmatprep.subr.bf16.mxu0 0
  %2267 = vmatpush2.bf16.msra.mxu0 0
  %2268 = vmatprep.subr.bf16.mxu0 0
  %2269 = vmatpush2.bf16.msra.mxu0 0
  %2270 = vmatprep.subr.bf16.mxu0 0
  %2271 = vmatpush2.bf16.msra.mxu0 0
  %2272 = vmatprep.subr.bf16.mxu0 0
  %2273 = vmatpush2.bf16.msra.mxu0 0
  %2274 = vmatprep.subr.bf16.mxu0 0
  %2275 = vmatpush2.bf16.msra.mxu0 0
  %2276 = vmatprep.subr.bf16.mxu0 0
  %2277 = vmatpush2.bf16.msra.mxu0 0
  %2278 = vmatprep.subr.bf16.mxu0 0
  %2279 = vmatpush2.bf16.msra.mxu0 0
  %2280 = vmatprep.subr.bf16.mxu0 0
  %2281 = vmatpush2.bf16.msra.mxu0 0
  %2282 = vmatprep.mubr.bf16.mxu0 0
  %2283 = vmatmul.mubr.bf16.gmra.mxu0 %v2135
  %v2284 = vpop.f32.mrf.mxu0
  %v2285 = vadd.f32 0.0, %v2284
  %v2286 = vpop.f32.mrf.mxu0
  %v2287 = vadd.f32 0.0, %v2286
  %v2288 = vpop.f32.mrf.mxu0
  %v2289 = vpop.f32.mrf.mxu0
  %2290 = vdwg.mxu0
  %2291 = vmatprep.subr.bf16.mxu0 %v461
  %2292 = vmatpush1.bf16.msra.mxu0 %v460
  %2293 = vmatprep.subr.bf16.mxu0 %v457
  %2294 = vmatpush1.bf16.msra.mxu0 %v456
  %2295 = vmatprep.subr.bf16.mxu0 %v453
  %2296 = vmatpush1.bf16.msra.mxu0 %v452
  %2297 = vmatprep.subr.bf16.mxu0 %v449
  %2298 = vmatpush1.bf16.msra.mxu0 %v448
  %2299 = vmatprep.subr.bf16.mxu0 %v445
  %2300 = vmatpush1.bf16.msra.mxu0 %v444
  %2301 = vmatprep.subr.bf16.mxu0 %v441
  %2302 = vmatpush1.bf16.msra.mxu0 %v440
  %2303 = vmatprep.subr.bf16.mxu0 %v437
  %2304 = vmatpush1.bf16.msra.mxu0 %v436
  %2305 = vmatprep.subr.bf16.mxu0 %v433
  %2306 = vmatpush1.bf16.msra.mxu0 %v432
  %2307 = vmatprep.subr.bf16.mxu0 0
  %2308 = vmatpush2.bf16.msra.mxu0 0
  %2309 = vmatprep.subr.bf16.mxu0 0
  %2310 = vmatpush2.bf16.msra.mxu0 0
  %2311 = vmatprep.subr.bf16.mxu0 0
  %2312 = vmatpush2.bf16.msra.mxu0 0
  %2313 = vmatprep.subr.bf16.mxu0 0
  %2314 = vmatpush2.bf16.msra.mxu0 0
  %2315 = vmatprep.subr.bf16.mxu0 0
  %2316 = vmatpush2.bf16.msra.mxu0 0
  %2317 = vmatprep.subr.bf16.mxu0 0
  %2318 = vmatpush2.bf16.msra.mxu0 0
  %2319 = vmatprep.subr.bf16.mxu0 0
  %2320 = vmatpush2.bf16.msra.mxu0 0
  %2321 = vmatprep.subr.bf16.mxu0 0
  %2322 = vmatpush2.bf16.msra.mxu0 0
  %2323 = vmatprep.mubr.bf16.mxu0 0
  %2324 = vmatmul.mubr.bf16.gmra.mxu0 %v2135
  %v2325 = vpop.f32.mrf.mxu0
  %v2326 = vadd.f32 0.0, %v2325
  %v2327 = vpop.f32.mrf.mxu0
  %v2328 = vadd.f32 0.0, %v2327
  %v2329 = vpop.f32.mrf.mxu0
  %v2330 = vpop.f32.mrf.mxu0
  %2331 = vdwg.mxu0
  %v2332 = vadd.f32 %v2246, %v2285
  %v2333 = vadd.f32 %v2247, %v2287
  %v2334 = vadd.f32 %v2248, %v2326
  %v2335 = vadd.f32 %v2249, %v2328
  %v2336 = vxor.u32 %v2332, 2147483648
  %v2337 = vmul.f32 %v2336, 1.442695
  %v2338 = vpow.pop %v2337
  %v2339 = vadd.f32 %v2338, 1.0
  %v2340 = vrcp.pop %v2339
  %v2341 = vmul.f32 1.0, %v2340
  %v2342 = vxor.u32 %v2333, 2147483648
  %v2343 = vmul.f32 %v2342, 1.442695
  %v2344 = vpow.pop %v2343
  %v2345 = vadd.f32 %v2344, 1.0
  %v2346 = vrcp.pop %v2345
  %v2347 = vmul.f32 1.0, %v2346
  %v2348 = vtanh.pop %v2334
  %v2349 = vxor.u32 %v2335, 2147483648
  %v2350 = vmul.f32 %v2349, 1.442695
  %v2351 = vpow.pop %v2350
  %v2352 = vadd.f32 %v2351, 1.0
  %v2353 = vrcp.pop %v2352
  %v2354 = vmul.f32 1.0, %v2353
  %v2355 = vmul.f32 %v2347, %v2132
  %v2356 = vmul.f32 %v2341, %v2348
  %v2357 = vadd.f32 %v2355, %v2356
  %v2358 = vtanh.pop %v2357
  %v2359 = vmul.f32 %v2354, %v2358
  %v2360 = vpack.c.bf16 %v2359, %v2359
  %v2361 = vpack.c.bf16 %v2242, %v2242
  %2362 = vmatprep.subr.bf16.mxu0 %v913
  %2363 = vmatpush1.bf16.msra.mxu0 %v912
  %2364 = vmatprep.subr.bf16.mxu0 %v909
  %2365 = vmatpush1.bf16.msra.mxu0 %v908
  %2366 = vmatprep.subr.bf16.mxu0 %v905
  %2367 = vmatpush1.bf16.msra.mxu0 %v904
  %2368 = vmatprep.subr.bf16.mxu0 %v901
  %2369 = vmatpush1.bf16.msra.mxu0 %v900
  %2370 = vmatprep.subr.bf16.mxu0 %v897
  %2371 = vmatpush1.bf16.msra.mxu0 %v896
  %2372 = vmatprep.subr.bf16.mxu0 %v893
  %2373 = vmatpush1.bf16.msra.mxu0 %v892
  %2374 = vmatprep.subr.bf16.mxu0 %v889
  %2375 = vmatpush1.bf16.msra.mxu0 %v888
  %2376 = vmatprep.subr.bf16.mxu0 %v885
  %2377 = vmatpush1.bf16.msra.mxu0 %v884
  %2378 = vmatprep.subr.bf16.mxu0 %v945
  %2379 = vmatpush2.bf16.msra.mxu0 %v944
  %2380 = vmatprep.subr.bf16.mxu0 %v941
  %2381 = vmatpush2.bf16.msra.mxu0 %v940
  %2382 = vmatprep.subr.bf16.mxu0 %v937
  %2383 = vmatpush2.bf16.msra.mxu0 %v936
  %2384 = vmatprep.subr.bf16.mxu0 %v933
  %2385 = vmatpush2.bf16.msra.mxu0 %v932
  %2386 = vmatprep.subr.bf16.mxu0 %v929
  %2387 = vmatpush2.bf16.msra.mxu0 %v928
  %2388 = vmatprep.subr.bf16.mxu0 %v925
  %2389 = vmatpush2.bf16.msra.mxu0 %v924
  %2390 = vmatprep.subr.bf16.mxu0 %v921
  %2391 = vmatpush2.bf16.msra.mxu0 %v920
  %2392 = vmatprep.subr.bf16.mxu0 %v917
  %2393 = vmatpush2.bf16.msra.mxu0 %v916
  %2394 = vmatprep.mubr.bf16.mxu0 %v2361
  %2395 = vmatmul.mubr.bf16.gmra.mxu0 %v2360
  %v2396 = vpop.f32.mrf.mxu0
  %v2397 = vadd.f32 %v675, %v2396
  %v2398 = vpop.f32.mrf.mxu0
  %v2399 = vadd.f32 %v679, %v2398
  %v2400 = vpop.f32.mrf.mxu0
  %v2401 = vpop.f32.mrf.mxu0
  %2402 = vdwg.mxu0
  %2403 = vmatprep.subr.bf16.mxu0 %v915
  %2404 = vmatpush1.bf16.msra.mxu0 %v914
  %2405 = vmatprep.subr.bf16.mxu0 %v911
  %2406 = vmatpush1.bf16.msra.mxu0 %v910
  %2407 = vmatprep.subr.bf16.mxu0 %v907
  %2408 = vmatpush1.bf16.msra.mxu0 %v906
  %2409 = vmatprep.subr.bf16.mxu0 %v903
  %2410 = vmatpush1.bf16.msra.mxu0 %v902
  %2411 = vmatprep.subr.bf16.mxu0 %v899
  %2412 = vmatpush1.bf16.msra.mxu0 %v898
  %2413 = vmatprep.subr.bf16.mxu0 %v895
  %2414 = vmatpush1.bf16.msra.mxu0 %v894
  %2415 = vmatprep.subr.bf16.mxu0 %v891
  %2416 = vmatpush1.bf16.msra.mxu0 %v890
  %2417 = vmatprep.subr.bf16.mxu0 %v887
  %2418 = vmatpush1.bf16.msra.mxu0 %v886
  %2419 = vmatprep.subr.bf16.mxu0 %v947
  %2420 = vmatpush2.bf16.msra.mxu0 %v946
  %2421 = vmatprep.subr.bf16.mxu0 %v943
  %2422 = vmatpush2.bf16.msra.mxu0 %v942
  %2423 = vmatprep.subr.bf16.mxu0 %v939
  %2424 = vmatpush2.bf16.msra.mxu0 %v938
  %2425 = vmatprep.subr.bf16.mxu0 %v935
  %2426 = vmatpush2.bf16.msra.mxu0 %v934
  %2427 = vmatprep.subr.bf16.mxu0 %v931
  %2428 = vmatpush2.bf16.msra.mxu0 %v930
  %2429 = vmatprep.subr.bf16.mxu0 %v927
  %2430 = vmatpush2.bf16.msra.mxu0 %v926
  %2431 = vmatprep.subr.bf16.mxu0 %v923
  %2432 = vmatpush2.bf16.msra.mxu0 %v922
  %2433 = vmatprep.subr.bf16.mxu0 %v919
  %2434 = vmatpush2.bf16.msra.mxu0 %v918
  %2435 = vmatprep.mubr.bf16.mxu0 %v2361
  %2436 = vmatmul.mubr.bf16.gmra.mxu0 %v2360
  %v2437 = vpop.f32.mrf.mxu0
  %v2438 = vadd.f32 %v683, %v2437
  %v2439 = vpop.f32.mrf.mxu0
  %v2440 = vadd.f32 %v687, %v2439
  %v2441 = vpop.f32.mrf.mxu0
  %v2442 = vpop.f32.mrf.mxu0
  %2443 = vdwg.mxu0
  %v2444 = vxor.u32 %v2397, 2147483648
  %v2445 = vmul.f32 %v2444, 1.442695
  %v2446 = vpow.pop %v2445
  %v2447 = vadd.f32 %v2446, 1.0
  %v2448 = vrcp.pop %v2447
  %v2449 = vmul.f32 1.0, %v2448
  %v2450 = vxor.u32 %v2399, 2147483648
  %v2451 = vmul.f32 %v2450, 1.442695
  %v2452 = vpow.pop %v2451
  %v2453 = vadd.f32 %v2452, 1.0
  %v2454 = vrcp.pop %v2453
  %v2455 = vmul.f32 1.0, %v2454
  %v2456 = vtanh.pop %v2438
  %v2457 = vxor.u32 %v2440, 2147483648
  %v2458 = vmul.f32 %v2457, 1.442695
  %v2459 = vpow.pop %v2458
  %v2460 = vadd.f32 %v2459, 1.0
  %v2461 = vrcp.pop %v2460
  %v2462 = vmul.f32 1.0, %v2461
  %v2463 = vmul.f32 %v2455, %v2240
  %v2464 = vmul.f32 %v2449, %v2456
  %v2465 = vadd.f32 %v2463, %v2464
  %v2466 = vtanh.pop %v2465
  %v2467 = vmul.f32 %v2462, %v2466
  %s2468 = smul.u32 7, 4
  %s2469 = smul.addr %s2468, 8
  %s2470 = scalar_lea.vmem [#allocation2], %s2469
  %v2471 = vld [vmem:[%s2470] sm:$0xff]
  %v2472 = vld [vmem:[%s2470 + $0x8] sm:$0xff]
  %v2473 = vld [vmem:[%s2470 + $0x10] sm:$0xff]
  %v2474 = vld [vmem:[%s2470 + $0x18] sm:$0xff]
  %2475 = vmatprep.subr.bf16.mxu0 %v459
  %2476 = vmatpush1.bf16.msra.mxu0 %v458
  %2477 = vmatprep.subr.bf16.mxu0 %v455
  %2478 = vmatpush1.bf16.msra.mxu0 %v454
  %2479 = vmatprep.subr.bf16.mxu0 %v451
  %2480 = vmatpush1.bf16.msra.mxu0 %v450
  %2481 = vmatprep.subr.bf16.mxu0 %v447
  %2482 = vmatpush1.bf16.msra.mxu0 %v446
  %2483 = vmatprep.subr.bf16.mxu0 %v443
  %2484 = vmatpush1.bf16.msra.mxu0 %v442
  %2485 = vmatprep.subr.bf16.mxu0 %v439
  %2486 = vmatpush1.bf16.msra.mxu0 %v438
  %2487 = vmatprep.subr.bf16.mxu0 %v435
  %2488 = vmatpush1.bf16.msra.mxu0 %v434
  %2489 = vmatprep.subr.bf16.mxu0 %v431
  %2490 = vmatpush1.bf16.msra.mxu0 %v430
  %2491 = vmatprep.subr.bf16.mxu0 0
  %2492 = vmatpush2.bf16.msra.mxu0 0
  %2493 = vmatprep.subr.bf16.mxu0 0
  %2494 = vmatpush2.bf16.msra.mxu0 0
  %2495 = vmatprep.subr.bf16.mxu0 0
  %2496 = vmatpush2.bf16.msra.mxu0 0
  %2497 = vmatprep.subr.bf16.mxu0 0
  %2498 = vmatpush2.bf16.msra.mxu0 0
  %2499 = vmatprep.subr.bf16.mxu0 0
  %2500 = vmatpush2.bf16.msra.mxu0 0
  %2501 = vmatprep.subr.bf16.mxu0 0
  %2502 = vmatpush2.bf16.msra.mxu0 0
  %2503 = vmatprep.subr.bf16.mxu0 0
  %2504 = vmatpush2.bf16.msra.mxu0 0
  %2505 = vmatprep.subr.bf16.mxu0 0
  %2506 = vmatpush2.bf16.msra.mxu0 0
  %2507 = vmatprep.mubr.bf16.mxu0 0
  %2508 = vmatmul.mubr.bf16.gmra.mxu0 %v2360
  %v2509 = vpop.f32.mrf.mxu0
  %v2510 = vadd.f32 0.0, %v2509
  %v2511 = vpop.f32.mrf.mxu0
  %v2512 = vadd.f32 0.0, %v2511
  %v2513 = vpop.f32.mrf.mxu0
  %v2514 = vpop.f32.mrf.mxu0
  %2515 = vdwg.mxu0
  %2516 = vmatprep.subr.bf16.mxu0 %v461
  %2517 = vmatpush1.bf16.msra.mxu0 %v460
  %2518 = vmatprep.subr.bf16.mxu0 %v457
  %2519 = vmatpush1.bf16.msra.mxu0 %v456
  %2520 = vmatprep.subr.bf16.mxu0 %v453
  %2521 = vmatpush1.bf16.msra.mxu0 %v452
  %2522 = vmatprep.subr.bf16.mxu0 %v449
  %2523 = vmatpush1.bf16.msra.mxu0 %v448
  %2524 = vmatprep.subr.bf16.mxu0 %v445
  %2525 = vmatpush1.bf16.msra.mxu0 %v444
  %2526 = vmatprep.subr.bf16.mxu0 %v441
  %2527 = vmatpush1.bf16.msra.mxu0 %v440
  %2528 = vmatprep.subr.bf16.mxu0 %v437
  %2529 = vmatpush1.bf16.msra.mxu0 %v436
  %2530 = vmatprep.subr.bf16.mxu0 %v433
  %2531 = vmatpush1.bf16.msra.mxu0 %v432
  %2532 = vmatprep.subr.bf16.mxu0 0
  %2533 = vmatpush2.bf16.msra.mxu0 0
  %2534 = vmatprep.subr.bf16.mxu0 0
  %2535 = vmatpush2.bf16.msra.mxu0 0
  %2536 = vmatprep.subr.bf16.mxu0 0
  %2537 = vmatpush2.bf16.msra.mxu0 0
  %2538 = vmatprep.subr.bf16.mxu0 0
  %2539 = vmatpush2.bf16.msra.mxu0 0
  %2540 = vmatprep.subr.bf16.mxu0 0
  %2541 = vmatpush2.bf16.msra.mxu0 0
  %2542 = vmatprep.subr.bf16.mxu0 0
  %2543 = vmatpush2.bf16.msra.mxu0 0
  %2544 = vmatprep.subr.bf16.mxu0 0
  %2545 = vmatpush2.bf16.msra.mxu0 0
  %2546 = vmatprep.subr.bf16.mxu0 0
  %2547 = vmatpush2.bf16.msra.mxu0 0
  %2548 = vmatprep.mubr.bf16.mxu0 0
  %2549 = vmatmul.mubr.bf16.gmra.mxu0 %v2360
  %v2550 = vpop.f32.mrf.mxu0
  %v2551 = vadd.f32 0.0, %v2550
  %v2552 = vpop.f32.mrf.mxu0
  %v2553 = vadd.f32 0.0, %v2552
  %v2554 = vpop.f32.mrf.mxu0
  %v2555 = vpop.f32.mrf.mxu0
  %2556 = vdwg.mxu0
  %v2557 = vadd.f32 %v2471, %v2510
  %v2558 = vadd.f32 %v2472, %v2512
  %v2559 = vadd.f32 %v2473, %v2551
  %v2560 = vadd.f32 %v2474, %v2553
  %v2561 = vxor.u32 %v2557, 2147483648
  %v2562 = vmul.f32 %v2561, 1.442695
  %v2563 = vpow.pop %v2562
  %v2564 = vadd.f32 %v2563, 1.0
  %v2565 = vrcp.pop %v2564
  %v2566 = vmul.f32 1.0, %v2565
  %v2567 = vxor.u32 %v2558, 2147483648
  %v2568 = vmul.f32 %v2567, 1.442695
  %v2569 = vpow.pop %v2568
  %v2570 = vadd.f32 %v2569, 1.0
  %v2571 = vrcp.pop %v2570
  %v2572 = vmul.f32 1.0, %v2571
  %v2573 = vtanh.pop %v2559
  %v2574 = vxor.u32 %v2560, 2147483648
  %v2575 = vmul.f32 %v2574, 1.442695
  %v2576 = vpow.pop %v2575
  %v2577 = vadd.f32 %v2576, 1.0
  %v2578 = vrcp.pop %v2577
  %v2579 = vmul.f32 1.0, %v2578
  %v2580 = vmul.f32 %v2572, %v2357
  %v2581 = vmul.f32 %v2566, %v2573
  %v2582 = vadd.f32 %v2580, %v2581
  %v2583 = vtanh.pop %v2582
  %v2584 = vmul.f32 %v2579, %v2583
  %v2585 = vpack.c.bf16 %v2584, %v2584
  %v2586 = vpack.c.bf16 %v2467, %v2467
  %2587 = vmatprep.subr.bf16.mxu0 %v913
  %2588 = vmatpush1.bf16.msra.mxu0 %v912
  %2589 = vmatprep.subr.bf16.mxu0 %v909
  %2590 = vmatpush1.bf16.msra.mxu0 %v908
  %2591 = vmatprep.subr.bf16.mxu0 %v905
  %2592 = vmatpush1.bf16.msra.mxu0 %v904
  %2593 = vmatprep.subr.bf16.mxu0 %v901
  %2594 = vmatpush1.bf16.msra.mxu0 %v900
  %2595 = vmatprep.subr.bf16.mxu0 %v897
  %2596 = vmatpush1.bf16.msra.mxu0 %v896
  %2597 = vmatprep.subr.bf16.mxu0 %v893
  %2598 = vmatpush1.bf16.msra.mxu0 %v892
  %2599 = vmatprep.subr.bf16.mxu0 %v889
  %2600 = vmatpush1.bf16.msra.mxu0 %v888
  %2601 = vmatprep.subr.bf16.mxu0 %v885
  %2602 = vmatpush1.bf16.msra.mxu0 %v884
  %2603 = vmatprep.subr.bf16.mxu0 %v945
  %2604 = vmatpush2.bf16.msra.mxu0 %v944
  %2605 = vmatprep.subr.bf16.mxu0 %v941
  %2606 = vmatpush2.bf16.msra.mxu0 %v940
  %2607 = vmatprep.subr.bf16.mxu0 %v937
  %2608 = vmatpush2.bf16.msra.mxu0 %v936
  %2609 = vmatprep.subr.bf16.mxu0 %v933
  %2610 = vmatpush2.bf16.msra.mxu0 %v932
  %2611 = vmatprep.subr.bf16.mxu0 %v929
  %2612 = vmatpush2.bf16.msra.mxu0 %v928
  %2613 = vmatprep.subr.bf16.mxu0 %v925
  %2614 = vmatpush2.bf16.msra.mxu0 %v924
  %2615 = vmatprep.subr.bf16.mxu0 %v921
  %2616 = vmatpush2.bf16.msra.mxu0 %v920
  %2617 = vmatprep.subr.bf16.mxu0 %v917
  %2618 = vmatpush2.bf16.msra.mxu0 %v916
  %2619 = vmatprep.mubr.bf16.mxu0 %v2586
  %2620 = vmatmul.mubr.bf16.gmra.mxu0 %v2585
  %v2621 = vpop.f32.mrf.mxu0
  %v2622 = vadd.f32 %v675, %v2621
  %v2623 = vpop.f32.mrf.mxu0
  %v2624 = vadd.f32 %v679, %v2623
  %v2625 = vpop.f32.mrf.mxu0
  %v2626 = vpop.f32.mrf.mxu0
  %2627 = vdwg.mxu0
  %2628 = vmatprep.subr.bf16.mxu0 %v915
  %2629 = vmatpush1.bf16.msra.mxu0 %v914
  %2630 = vmatprep.subr.bf16.mxu0 %v911
  %2631 = vmatpush1.bf16.msra.mxu0 %v910
  %2632 = vmatprep.subr.bf16.mxu0 %v907
  %2633 = vmatpush1.bf16.msra.mxu0 %v906
  %2634 = vmatprep.subr.bf16.mxu0 %v903
  %2635 = vmatpush1.bf16.msra.mxu0 %v902
  %2636 = vmatprep.subr.bf16.mxu0 %v899
  %2637 = vmatpush1.bf16.msra.mxu0 %v898
  %2638 = vmatprep.subr.bf16.mxu0 %v895
  %2639 = vmatpush1.bf16.msra.mxu0 %v894
  %2640 = vmatprep.subr.bf16.mxu0 %v891
  %2641 = vmatpush1.bf16.msra.mxu0 %v890
  %2642 = vmatprep.subr.bf16.mxu0 %v887
  %2643 = vmatpush1.bf16.msra.mxu0 %v886
  %2644 = vmatprep.subr.bf16.mxu0 %v947
  %2645 = vmatpush2.bf16.msra.mxu0 %v946
  %2646 = vmatprep.subr.bf16.mxu0 %v943
  %2647 = vmatpush2.bf16.msra.mxu0 %v942
  %2648 = vmatprep.subr.bf16.mxu0 %v939
  %2649 = vmatpush2.bf16.msra.mxu0 %v938
  %2650 = vmatprep.subr.bf16.mxu0 %v935
  %2651 = vmatpush2.bf16.msra.mxu0 %v934
  %2652 = vmatprep.subr.bf16.mxu0 %v931
  %2653 = vmatpush2.bf16.msra.mxu0 %v930
  %2654 = vmatprep.subr.bf16.mxu0 %v927
  %2655 = vmatpush2.bf16.msra.mxu0 %v926
  %2656 = vmatprep.subr.bf16.mxu0 %v923
  %2657 = vmatpush2.bf16.msra.mxu0 %v922
  %2658 = vmatprep.subr.bf16.mxu0 %v919
  %2659 = vmatpush2.bf16.msra.mxu0 %v918
  %2660 = vmatprep.mubr.bf16.mxu0 %v2586
  %2661 = vmatmul.mubr.bf16.gmra.mxu0 %v2585
  %v2662 = vpop.f32.mrf.mxu0
  %v2663 = vadd.f32 %v683, %v2662
  %v2664 = vpop.f32.mrf.mxu0
  %v2665 = vadd.f32 %v687, %v2664
  %v2666 = vpop.f32.mrf.mxu0
  %v2667 = vpop.f32.mrf.mxu0
  %2668 = vdwg.mxu0
  %v2669 = vxor.u32 %v2622, 2147483648
  %v2670 = vmul.f32 %v2669, 1.442695
  %v2671 = vpow.pop %v2670
  %v2672 = vadd.f32 %v2671, 1.0
  %v2673 = vrcp.pop %v2672
  %v2674 = vmul.f32 1.0, %v2673
  %v2675 = vxor.u32 %v2624, 2147483648
  %v2676 = vmul.f32 %v2675, 1.442695
  %v2677 = vpow.pop %v2676
  %v2678 = vadd.f32 %v2677, 1.0
  %v2679 = vrcp.pop %v2678
  %v2680 = vmul.f32 1.0, %v2679
  %v2681 = vtanh.pop %v2663
  %v2682 = vxor.u32 %v2665, 2147483648
  %v2683 = vmul.f32 %v2682, 1.442695
  %v2684 = vpow.pop %v2683
  %v2685 = vadd.f32 %v2684, 1.0
  %v2686 = vrcp.pop %v2685
  %v2687 = vmul.f32 1.0, %v2686
  %v2688 = vmul.f32 %v2680, %v2465
  %v2689 = vmul.f32 %v2674, %v2681
  %v2690 = vadd.f32 %v2688, %v2689
  %v2691 = vtanh.pop %v2690
  %v2692 = vmul.f32 %v2687, %v2691
  %v2693 = vpack.c.bf16 %v2692, %v2692
  %v2694 = vld [vmem:[%s6] sm:$0xf]
  %v2695 = vld [vmem:[%s6 + $0x4] sm:$0xf]
  %v2696 = vld [vmem:[%s6 + $0x8] sm:$0xf]
  %v2697 = vld [vmem:[%s6 + $0xc] sm:$0xf]
  %v2698 = vld [vmem:[%s6 + $0x10] sm:$0xf]
  %v2699 = vld [vmem:[%s6 + $0x14] sm:$0xf]
  %v2700 = vld [vmem:[%s6 + $0x18] sm:$0xf]
  %v2701 = vld [vmem:[%s6 + $0x1c] sm:$0xf]
  %v2702 = vld [vmem:[%s6 + $0x20] sm:$0xf]
  %v2703 = vld [vmem:[%s6 + $0x24] sm:$0xf]
  %v2704 = vld [vmem:[%s6 + $0x28] sm:$0xf]
  %v2705 = vld [vmem:[%s6 + $0x2c] sm:$0xf]
  %v2706 = vld [vmem:[%s6 + $0x30] sm:$0xf]
  %v2707 = vld [vmem:[%s6 + $0x34] sm:$0xf]
  %v2708 = vld [vmem:[%s6 + $0x38] sm:$0xf]
  %v2709 = vld [vmem:[%s6 + $0x3c] sm:$0xf]
  %v2710 = vld [vmem:[%s7] sm:$0x1]
  %v2712 = vlaneseq
  %v2713 = vshrl.u32 %v2712, 7
  %v2714 = vsub.s32 0, %v2713
  %v2715 = vrot.slane %v2710, %v2714
  %v2733 = vunpack.c.l.b16 %v2694
  %v2734 = vunpack.c.l.b16 %v2695
  %v2735 = vunpack.c.l.b16 %v2696
  %v2736 = vunpack.c.l.b16 %v2697
  %v2737 = vunpack.c.l.b16 %v2698
  %v2738 = vunpack.c.l.b16 %v2699
  %v2739 = vunpack.c.l.b16 %v2700
  %v2740 = vunpack.c.l.b16 %v2701
  %v2741 = vunpack.c.l.b16 %v2702
  %v2742 = vunpack.c.l.b16 %v2703
  %v2743 = vunpack.c.l.b16 %v2704
  %v2744 = vunpack.c.l.b16 %v2705
  %v2745 = vunpack.c.l.b16 %v2706
  %v2746 = vunpack.c.l.b16 %v2707
  %v2747 = vunpack.c.l.b16 %v2708
  %v2748 = vunpack.c.l.b16 %v2709
  %v2749 = vpack.c.b16 %v2734, %v2733
  %v2750 = vpack.c.b16 %v2736, %v2735
  %v2751 = vpack.c.b16 %v2738, %v2737
  %v2752 = vpack.c.b16 %v2740, %v2739
  %v2753 = vpack.c.b16 %v2742, %v2741
  %v2754 = vpack.c.b16 %v2744, %v2743
  %v2755 = vpack.c.b16 %v2746, %v2745
  %v2756 = vpack.c.b16 %v2748, %v2747
  %2765 = vmatprep.subr.bf16.mxu0 0
  %2766 = vmatpush1.bf16.msra.mxu0 %v2756
  %2767 = vmatprep.subr.bf16.mxu0 0
  %2768 = vmatpush1.bf16.msra.mxu0 %v2755
  %2769 = vmatprep.subr.bf16.mxu0 0
  %2770 = vmatpush1.bf16.msra.mxu0 %v2754
  %2771 = vmatprep.subr.bf16.mxu0 0
  %2772 = vmatpush1.bf16.msra.mxu0 %v2753
  %2773 = vmatprep.subr.bf16.mxu0 0
  %2774 = vmatpush1.bf16.msra.mxu0 %v2752
  %2775 = vmatprep.subr.bf16.mxu0 0
  %2776 = vmatpush1.bf16.msra.mxu0 %v2751
  %2777 = vmatprep.subr.bf16.mxu0 0
  %2778 = vmatpush1.bf16.msra.mxu0 %v2750
  %2779 = vmatprep.subr.bf16.mxu0 0
  %2780 = vmatpush1.bf16.msra.mxu0 %v2749
  %2781 = vmatprep.subr.bf16.mxu0 0
  %2782 = vmatpush2.bf16.msra.mxu0 0
  %2783 = vmatprep.subr.bf16.mxu0 0
  %2784 = vmatpush2.bf16.msra.mxu0 0
  %2785 = vmatprep.subr.bf16.mxu0 0
  %2786 = vmatpush2.bf16.msra.mxu0 0
  %2787 = vmatprep.subr.bf16.mxu0 0
  %2788 = vmatpush2.bf16.msra.mxu0 0
  %2789 = vmatprep.subr.bf16.mxu0 0
  %2790 = vmatpush2.bf16.msra.mxu0 0
  %2791 = vmatprep.subr.bf16.mxu0 0
  %2792 = vmatpush2.bf16.msra.mxu0 0
  %2793 = vmatprep.subr.bf16.mxu0 0
  %2794 = vmatpush2.bf16.msra.mxu0 0
  %2795 = vmatprep.subr.bf16.mxu0 0
  %2796 = vmatpush2.bf16.msra.mxu0 0
  %2797 = vmatprep.mubr.bf16.mxu0 0
  %2798 = vmatmul.mubr.bf16.gmra.mxu0 %v2693
  %v2799 = vpop.f32.mrf.mxu0
  %v2800 = vadd.f32 %v2715, %v2799
  %v2801 = vpop.f32.mrf.mxu0
  %v2802 = vpop.f32.mrf.mxu0
  %v2803 = vpop.f32.mrf.mxu0
  %2804 = vdwg.mxu0
  %2805 = vst [vmem:[%s8] sm:$0xff] %v2800
  // Predicated region
  $region34: #{lstm_forward.1} parent=0 // pred_check
    _
  $region35: #{lstm_forward.1} parent=0 // pred_check_branch
    %2807 = sbr.rel (0) target = $region37
  $region36: #{lstm_forward.1} parent=0 // pred_region
    _
  $region37: #{lstm_forward.1} parent=0 // pred_fallthru
    _
  // Predicated region
  $region38: #{lstm_forward.1} parent=0 // pred_check
    _
  $region39: #{lstm_forward.1} parent=0 // pred_check_branch
    %2809 = sbr.rel (0) target = $region41
  $region40: #{lstm_forward.1} parent=0 // pred_region
    _
  $region41: #{lstm_forward.1} parent=0 // pred_fallthru
    _

</llo_original>
